<compile_context>
chip_gen: v7x
topology: tpu7x:2x2x1
jax: 0.10.0
libtpu: 0.0.40
codegen_flags: <defaults>
</compile_context>

<pallas_src>
import functools

import jax
import jax.numpy as jnp
from jax import lax
from jax.experimental import pallas as pl
from jax.experimental.pallas import tpu as pltpu

NEG_SLOPE = 0.01  # PyTorch nn.LeakyReLU default


def _leaky(x):
    # max(x, 0.01*x) == LeakyReLU(x) because slope < 1; 2 VALU ops vs cmp+sel+mul.
    return jnp.maximum(x, NEG_SLOPE * x)


def _dilated_conv(h, w_ref, b_ref, ci, d, *, k, Cp, W, valid):
    """'same'-padded dilated conv over a (W, Cp) window.

    k per-tap MXU matmuls; tap offsets realised by pltpu.roll on the f32
    partials (XLU) instead of building a halo+slab copy (which streamed ~4x the
    activation through the vst slot per conv).  Circular-wrap rows land only in
    the window halo (|offset| <= halo) so they never influence the tile's
    central rows and are either re-masked by `valid` or discarded at output.
    """
    hb = h.astype(jnp.bfloat16)            # bf16 operands, f32 accumulation
    wc = w_ref[ci]                          # (k*Cp, Cp) bf16, resident in VMEM
    c = (k - 1) // 2
    y = None
    for tap in range(k):
        z = jnp.dot(hb, wc[tap * Cp:(tap + 1) * Cp, :],
                    preferred_element_type=jnp.float32)
        off = (tap - c) * d                 # out[t] += h[t + off] @ w_tap
        if off != 0:
            z = pltpu.roll(z, (-off) % W, 0)
        y = z if y is None else y + z
    y = y + b_ref[ci]
    # Zero rows outside the true sequence [0, L): reproduces PyTorch's zero
    # padding at sequence ends and stops bias junk on L-padding / halo rows from
    # leaking into real rows through later convs.
    # NOTE invariant: padded rows/lanes stay zero only because every op here
    # maps 0 -> 0 after this mask; inserting a norm/bias-only layer breaks it.
    return jnp.where(valid, y, 0.0)


def resblock_kernel(xl_ref, xm_ref, xr_ref, w_ref, b_ref, o_ref, *,
                    k, dilations, L, TL, H, Cp):
    # xl/xr: (1, H, Cp) halo blocks (clamped at edges, masked by gidx),
    # xm: (1, TL, Cp) tile, w: (2*nb, k*Cp, Cp) bf16, b: (2*nb, 1, Cp) f32.
    W = TL + 2 * H
    j = pl.program_id(1)
    gidx = lax.broadcasted_iota(jnp.int32, (W, 1), 0) + (j * TL - H)
    valid = jnp.logical_and(gidx >= 0, gidx < L)

    # Assemble the halo'ed window; residual is carried in f32 across all blocks.
    x = jnp.concatenate([xl_ref[0], xm_ref[0], xr_ref[0]], axis=0)
    x = jnp.where(valid, x.astype(jnp.float32), 0.0)

    for bi, d in enumerate(dilations):
        h = _leaky(x)
        h = _dilated_conv(h, w_ref, b_ref, 2 * bi, d, k=k, Cp=Cp, W=W, valid=valid)
        h = _leaky(h)
        h = _dilated_conv(h, w_ref, b_ref, 2 * bi + 1, 1, k=k, Cp=Cp, W=W, valid=valid)
        x = x + h

    o_ref[0] = x[H:H + TL, :].astype(o_ref.dtype)   # drop the halo rows


def prepare_resblock_params(weights, biases, *, kernel_size=3, dilations=(1, 3, 5)):
    """Hoisted out of the per-call path: pad->fuse->bf16 the conv parameters ONCE.

    weights: (nb, 2, k, Cin, Cout) f32 (tap, in, out layout), biases: (nb, 2, 1, C).
    Returns (wf, bf, Cp): wf (2*nb, k*Cp, Cp) bf16, bf (2*nb, 1, Cp) f32.
    """
    nb, two, k, C, Co = weights.shape
    assert two == 2 and Co == C and k == kernel_size and nb == len(dilations)
    assert kernel_size % 2 == 1, "same-padding tap math assumes odd kernel_size"
    Cp = ((C + 127) // 128) * 128
    wp = jnp.pad(weights, ((0, 0), (0, 0), (0, 0), (0, Cp - C), (0, Cp - C)))
    wf = wp.reshape(nb * 2, k * Cp, Cp).astype(jnp.bfloat16)
    bp = jnp.pad(biases, ((0, 0), (0, 0), (0, 0), (0, Cp - C)))
    bf = bp.reshape(nb * 2, 1, Cp)          # f32; zero on padded lanes
    return wf, bf, Cp


def _pick_tiling():
    """Per-generation defaults. v7x: 64 MiB VMEM/TC -> smaller tile + 48 MiB cap.
    v5e/v6e: 128 MiB physical -> bigger L tile (amortizes the 12-row recomputed
    halo and the ~0.35 us/step grid overhead) + 96 MiB limit."""
    tile_l, vmem = 4096, 48 * 1024 * 1024
    try:
        cap = getattr(pltpu.get_tpu_info(), "vmem_capacity_bytes", None)
        if isinstance(cap, int) and cap >= 96 * 1024 * 1024:
            tile_l, vmem = 8192, 96 * 1024 * 1024
    except Exception:
        pass
    return tile_l, vmem


def residual_block_1d(x_blc, wf, bf, Cp, *, kernel_size=3, dilations=(1, 3, 5),
                      tile_l=None, vmem_limit_bytes=None):
    """x_blc: (B, L, C) channels-last. wf/bf/Cp from prepare_resblock_params.

    L-tiled with recomputed halos -> tiles are independent, both grid axes are
    'parallel'.  TODO(synk): in the full Generator keep the padded (Lp, Cp)
    channels-last layout (ideally bf16 in HBM) across conv_pre / upsample / MRF
    stages and pad/slice once at the network boundary, and fold B into the
    matmul M dim for tiny B*L shapes.
    """
    B, L, C = x_blc.shape
    k = kernel_size
    if tile_l is None or vmem_limit_bytes is None:
        auto_tl, auto_vmem = _pick_tiling()
        tile_l = tile_l or auto_tl
        vmem_limit_bytes = vmem_limit_bytes or auto_vmem

    # halo = receptive field of the whole chain = (k-1)//2 * (sum(d) + len(d))
    halo = (k - 1) // 2 * (sum(dilations) + len(dilations))      # 12 for (3,(1,3,5))
    H = max(8, ((halo + 7) // 8) * 8)                            # halo block rows
    TL = ((min(tile_l, L) + H - 1) // H) * H                     # tile length, H | TL
    n_tiles = -(-L // TL)
    Lp = n_tiles * TL
    lstep, nblk = TL // H, Lp // H

    xp = jnp.pad(x_blc, ((0, 0), (0, Lp - L), (0, Cp - C)))

    kern = functools.partial(resblock_kernel, k=k, dilations=tuple(dilations),
                             L=L, TL=TL, H=H, Cp=Cp)

    def xm_map(b, j): return (b, j, 0)
    def xl_map(b, j): return (b, jnp.maximum(j * lstep - 1, 0), 0)       # clamped; masked in-kernel
    def xr_map(b, j): return (b, jnp.minimum((j + 1) * lstep, nblk - 1), 0)

    # TODO(synk): at large Cp give wf/bf pipeline_mode=pl.Buffered(1) (constant
    # index_map) to drop the redundant second weight buffer; negligible at Cp=128.
    out = pl.pallas_call(
        kern,
        out_shape=jax.ShapeDtypeStruct((B, Lp, Cp), x_blc.dtype),
        grid_spec=pltpu.PrefetchScalarGridSpec(
            num_scalar_prefetch=0,
            grid=(B, n_tiles),
            in_specs=[
                pl.BlockSpec((1, H, Cp), xl_map),     # left halo
                pl.BlockSpec((1, TL, Cp), xm_map),    # main tile
                pl.BlockSpec((1, H, Cp), xr_map),     # right halo
                pl.BlockSpec(wf.shape, lambda b, j: (0, 0, 0)),   # resident weights
                pl.BlockSpec(bf.shape, lambda b, j: (0, 0, 0)),   # resident biases
            ],
            out_specs=pl.BlockSpec((1, TL, Cp), xm_map),
        ),
        compiler_params=pltpu.CompilerParams(
            dimension_semantics=("parallel", "parallel"),
            vmem_limit_bytes=vmem_limit_bytes,
        ),
    )(xp, xp, xp, wf, bf)
    return out[:, :L, :C]


def ref_forward(x_blc, weights, biases, kernel_size, dilations):
    """Pure-JAX f32 reference (lax.conv_general_dilated), channels-last."""
    def conv(h, w, b, d):
        pad = (kernel_size - 1) * d // 2
        y = lax.conv_general_dilated(
            h, w, window_strides=(1,), padding=[(pad, pad)], rhs_dilation=(d,),
            dimension_numbers=("NWC", "WIO", "NWC"), precision=lax.Precision.HIGHEST)
        return y + b.reshape(1, 1, -1)

    out = x_blc
    for bi, d in enumerate(dilations):
        h = jnp.where(out >= 0, out, NEG_SLOPE * out)
        h = conv(h, weights[bi, 0], biases[bi, 0, 0], d)
        h = jnp.where(h >= 0, h, NEG_SLOPE * h)
        h = conv(h, weights[bi, 1], biases[bi, 1, 0], 1)
        out = h + out
    return out


def _run_case(key, B, C, L, kernel_size, dilations, tile_l=None):
    kx, kw, kb = jax.random.split(key, 3)
    bound = 1.0 / (C * kernel_size) ** 0.5   # PyTorch Conv1d-style init
    weights = jax.random.uniform(kw, (len(dilations), 2, kernel_size, C, C),
                                 minval=-bound, maxval=bound, dtype=jnp.float32)
    biases = jax.random.uniform(kb, (len(dilations), 2, 1, C),
                                minval=-bound, maxval=bound, dtype=jnp.float32)
    x_ncl = jax.random.normal(kx, (B, C, L), dtype=jnp.float32)   # PyTorch (N,C,L)
    x_blc = jnp.transpose(x_ncl, (0, 2, 1))                       # channels-last

    wf, bf, Cp = prepare_resblock_params(weights, biases,
                                         kernel_size=kernel_size, dilations=dilations)
    out_blc = residual_block_1d(x_blc, wf, bf, Cp, kernel_size=kernel_size,
                                dilations=dilations, tile_l=tile_l)
    out_blc = jax.block_until_ready(out_blc)

    ref_blc = ref_forward(x_blc, weights, biases, kernel_size, dilations)
    assert out_blc.shape == (B, L, C)
    max_err = float(jnp.max(jnp.abs(out_blc - ref_blc)))
    # bf16 matmul operands with f32 accumulation vs f32 reference -> bf16 tolerance.
    assert jnp.allclose(out_blc, ref_blc, atol=3e-2, rtol=3e-2), max_err
    return max_err


if __name__ == "__main__":
    key = jax.random.PRNGKey(0)
    k1, k2 = jax.random.split(key)

    # Small shape consistent with the module: hidden_size=32, batch=2, length=64.
    _run_case(k1, B=2, C=32, L=64, kernel_size=3, dilations=(1, 3, 5))

    # Multi-tile path (exercises the L-tiling + recomputed-halo seams):
    # L=200 with 80-row tiles -> 3 tiles, 16-row halo blocks, masked L padding.
    _run_case(k2, B=1, C=32, L=200, kernel_size=3, dilations=(1, 3, 5), tile_l=80)

    print("KERNEL_OK")
</pallas_src>

<mosaic_0001>
module attributes {stable_mosaic.version = 11 : i64} {
  func.func @resblock_kernel(%arg0: i32, %arg1: i32, %arg2: memref<1x16x128xf32, #tpu.memory_space<vmem>>, %arg3: memref<1x64x128xf32, #tpu.memory_space<vmem>>, %arg4: memref<1x16x128xf32, #tpu.memory_space<vmem>>, %arg5: memref<6x384x128xbf16, #tpu.memory_space<vmem>>, %arg6: memref<6x1x128xf32, #tpu.memory_space<vmem>>, %arg7: memref<1x64x128xf32, #tpu.memory_space<vmem>>) attributes {dimension_semantics = [#tpu.dimension_semantics<parallel>, #tpu.dimension_semantics<parallel>], iteration_bounds = array<i64: 2, 1>, scalar_prefetch = 0 : i64, scratch_operands = 0 : i64, tpu.core_type = #tpu.core_type<tc>, window_params = [{transform_indices = @transform_0, window_bounds = array<i64: 1, 16, 128>}, {transform_indices = @transform_1, window_bounds = array<i64: 1, 64, 128>}, {transform_indices = @transform_2, window_bounds = array<i64: 1, 16, 128>}, {pipeline_mode = #tpu.pipeline_mode<synchronous>, transform_indices = @transform_3, window_bounds = array<i64: 6, 384, 128>}, {pipeline_mode = #tpu.pipeline_mode<synchronous>, transform_indices = @transform_4, window_bounds = array<i64: 6, 1, 128>}, {transform_indices = @transform_5, window_bounds = array<i64: 1, 64, 128>}]} {
    %0 = tpu.iota {dimensions = array<i32: 0>} : vector<96x1xi32>
    %c64_i32 = arith.constant 64 : i32
    %1 = arith.muli %arg1, %c64_i32 : i32
    %c16_i32 = arith.constant 16 : i32
    %2 = arith.subi %1, %c16_i32 : i32
    %3 = vector.broadcast %2 : i32 to vector<96x1xi32>
    %4 = arith.addi %0, %3 : vector<96x1xi32>
    %c0_i32 = arith.constant 0 : i32
    %5 = vector.broadcast %c0_i32 : i32 to vector<96x1xi32>
    %6 = arith.cmpi sge, %4, %5 : vector<96x1xi32>
    %c64_i32_0 = arith.constant 64 : i32
    %7 = vector.broadcast %c64_i32_0 : i32 to vector<96x1xi32>
    %8 = arith.cmpi slt, %4, %7 : vector<96x1xi32>
    %9 = arith.andi %6, %8 : vector<96x1xi1>
    %c0 = arith.constant 0 : index
    %c0_1 = arith.constant 0 : index
    %c0_2 = arith.constant 0 : index
    %10 = vector.load %arg2[%c0, %c0_1, %c0_2] : memref<1x16x128xf32, #tpu.memory_space<vmem>>, vector<1x16x128xf32>
    %11 = vector.shape_cast %10 : vector<1x16x128xf32> to vector<16x128xf32>
    %c0_3 = arith.constant 0 : index
    %c0_4 = arith.constant 0 : index
    %c0_5 = arith.constant 0 : index
    %12 = vector.load %arg3[%c0_3, %c0_4, %c0_5] : memref<1x64x128xf32, #tpu.memory_space<vmem>>, vector<1x64x128xf32>
    %13 = vector.shape_cast %12 : vector<1x64x128xf32> to vector<64x128xf32>
    %c0_6 = arith.constant 0 : index
    %c0_7 = arith.constant 0 : index
    %c0_8 = arith.constant 0 : index
    %14 = vector.load %arg4[%c0_6, %c0_7, %c0_8] : memref<1x16x128xf32, #tpu.memory_space<vmem>>, vector<1x16x128xf32>
    %15 = vector.shape_cast %14 : vector<1x16x128xf32> to vector<16x128xf32>
    %16 = tpu.concatenate %11, %13, %15 in 0 : vector<16x128xf32>, vector<64x128xf32>, vector<16x128xf32> -> vector<96x128xf32>
    %cst = arith.constant 0.000000e+00 : f32
    %17 = vector.shape_cast %9 : vector<96x1xi1> to vector<96x1xi1>
    %18 = vector.broadcast %17 : vector<96x1xi1> to vector<96x128xi1>
    %19 = vector.broadcast %cst : f32 to vector<96x128xf32>
    %20 = arith.select %18, %16, %19 : vector<96x128xi1>, vector<96x128xf32>
    %cst_9 = arith.constant 0.00999999977 : f32
    %21 = vector.broadcast %cst_9 : f32 to vector<96x128xf32>
    %22 = arith.mulf %21, %20 : vector<96x128xf32>
    %23 = arith.maximumf %20, %22 : vector<96x128xf32>
    %24 = arith.truncf %23 : vector<96x128xf32> to vector<96x128xbf16>
    %c0_10 = arith.constant 0 : index
    %c0_11 = arith.constant 0 : index
    %c0_12 = arith.constant 0 : index
    %25 = vector.load %arg5[%c0_10, %c0_11, %c0_12] : memref<6x384x128xbf16, #tpu.memory_space<vmem>>, vector<1x384x128xbf16>
    %26 = vector.shape_cast %25 : vector<1x384x128xbf16> to vector<384x128xbf16>
    %27 = vector.extract_strided_slice %26 {offsets = [0, 0], sizes = [128, 128], strides = [1, 1]} : vector<384x128xbf16> to vector<128x128xbf16>
    %cst_13 = arith.constant dense<0.000000e+00> : vector<96x128xf32>
    %28 = tpu.matmul %24, %27, %cst_13 {dimension_numbers = #tpu.dot_dimension_numbers<[1], [0], [0], [1], [0, 0, 1, 1], [], []>} : vector<96x128xbf16>, vector<128x128xbf16>, vector<96x128xf32> -> vector<96x128xf32>
    %c1_i32 = arith.constant 1 : i32
    %29 = tpu.dynamic_rotate %28 by %c1_i32 dim 0 : vector<96x128xf32>, i32 -> vector<96x128xf32>
    %30 = vector.extract_strided_slice %26 {offsets = [128, 0], sizes = [128, 128], strides = [1, 1]} : vector<384x128xbf16> to vector<128x128xbf16>
    %cst_14 = arith.constant dense<0.000000e+00> : vector<96x128xf32>
    %31 = tpu.matmul %24, %30, %cst_14 {dimension_numbers = #tpu.dot_dimension_numbers<[1], [0], [0], [1], [0, 0, 1, 1], [], []>} : vector<96x128xbf16>, vector<128x128xbf16>, vector<96x128xf32> -> vector<96x128xf32>
    %32 = arith.addf %29, %31 : vector<96x128xf32>
    %33 = vector.extract_strided_slice %26 {offsets = [256, 0], sizes = [128, 128], strides = [1, 1]} : vector<384x128xbf16> to vector<128x128xbf16>
    %cst_15 = arith.constant dense<0.000000e+00> : vector<96x128xf32>
    %34 = tpu.matmul %24, %33, %cst_15 {dimension_numbers = #tpu.dot_dimension_numbers<[1], [0], [0], [1], [0, 0, 1, 1], [], []>} : vector<96x128xbf16>, vector<128x128xbf16>, vector<96x128xf32> -> vector<96x128xf32>
    %c95_i32 = arith.constant 95 : i32
    %35 = tpu.dynamic_rotate %34 by %c95_i32 dim 0 : vector<96x128xf32>, i32 -> vector<96x128xf32>
    %36 = arith.addf %32, %35 : vector<96x128xf32>
    %c0_16 = arith.constant 0 : index
    %c0_17 = arith.constant 0 : index
    %c0_18 = arith.constant 0 : index
    %37 = vector.load %arg6[%c0_16, %c0_17, %c0_18] : memref<6x1x128xf32, #tpu.memory_space<vmem>>, vector<1x1x128xf32>
    %38 = vector.shape_cast %37 : vector<1x1x128xf32> to vector<1x128xf32>
    %39 = vector.broadcast %38 : vector<1x128xf32> to vector<96x128xf32>
    %40 = arith.addf %36, %39 : vector<96x128xf32>
    %cst_19 = arith.constant 0.000000e+00 : f32
    %41 = vector.shape_cast %9 : vector<96x1xi1> to vector<96x1xi1>
    %42 = vector.broadcast %41 : vector<96x1xi1> to vector<96x128xi1>
    %43 = vector.broadcast %cst_19 : f32 to vector<96x128xf32>
    %44 = arith.select %42, %40, %43 : vector<96x128xi1>, vector<96x128xf32>
    %cst_20 = arith.constant 0.00999999977 : f32
    %45 = vector.broadcast %cst_20 : f32 to vector<96x128xf32>
    %46 = arith.mulf %45, %44 : vector<96x128xf32>
    %47 = arith.maximumf %44, %46 : vector<96x128xf32>
    %48 = arith.truncf %47 : vector<96x128xf32> to vector<96x128xbf16>
    %c1 = arith.constant 1 : index
    %c0_21 = arith.constant 0 : index
    %c0_22 = arith.constant 0 : index
    %49 = vector.load %arg5[%c1, %c0_21, %c0_22] : memref<6x384x128xbf16, #tpu.memory_space<vmem>>, vector<1x384x128xbf16>
    %50 = vector.shape_cast %49 : vector<1x384x128xbf16> to vector<384x128xbf16>
    %51 = vector.extract_strided_slice %50 {offsets = [0, 0], sizes = [128, 128], strides = [1, 1]} : vector<384x128xbf16> to vector<128x128xbf16>
    %cst_23 = arith.constant dense<0.000000e+00> : vector<96x128xf32>
    %52 = tpu.matmul %48, %51, %cst_23 {dimension_numbers = #tpu.dot_dimension_numbers<[1], [0], [0], [1], [0, 0, 1, 1], [], []>} : vector<96x128xbf16>, vector<128x128xbf16>, vector<96x128xf32> -> vector<96x128xf32>
    %c1_i32_24 = arith.constant 1 : i32
    %53 = tpu.dynamic_rotate %52 by %c1_i32_24 dim 0 : vector<96x128xf32>, i32 -> vector<96x128xf32>
    %54 = vector.extract_strided_slice %50 {offsets = [128, 0], sizes = [128, 128], strides = [1, 1]} : vector<384x128xbf16> to vector<128x128xbf16>
    %cst_25 = arith.constant dense<0.000000e+00> : vector<96x128xf32>
    %55 = tpu.matmul %48, %54, %cst_25 {dimension_numbers = #tpu.dot_dimension_numbers<[1], [0], [0], [1], [0, 0, 1, 1], [], []>} : vector<96x128xbf16>, vector<128x128xbf16>, vector<96x128xf32> -> vector<96x128xf32>
    %56 = arith.addf %53, %55 : vector<96x128xf32>
    %57 = vector.extract_strided_slice %50 {offsets = [256, 0], sizes = [128, 128], strides = [1, 1]} : vector<384x128xbf16> to vector<128x128xbf16>
    %cst_26 = arith.constant dense<0.000000e+00> : vector<96x128xf32>
    %58 = tpu.matmul %48, %57, %cst_26 {dimension_numbers = #tpu.dot_dimension_numbers<[1], [0], [0], [1], [0, 0, 1, 1], [], []>} : vector<96x128xbf16>, vector<128x128xbf16>, vector<96x128xf32> -> vector<96x128xf32>
    %c95_i32_27 = arith.constant 95 : i32
    %59 = tpu.dynamic_rotate %58 by %c95_i32_27 dim 0 : vector<96x128xf32>, i32 -> vector<96x128xf32>
    %60 = arith.addf %56, %59 : vector<96x128xf32>
    %c1_28 = arith.constant 1 : index
    %c0_29 = arith.constant 0 : index
    %c0_30 = arith.constant 0 : index
    %61 = vector.load %arg6[%c1_28, %c0_29, %c0_30] : memref<6x1x128xf32, #tpu.memory_space<vmem>>, vector<1x1x128xf32>
    %62 = vector.shape_cast %61 : vector<1x1x128xf32> to vector<1x128xf32>
    %63 = vector.broadcast %62 : vector<1x128xf32> to vector<96x128xf32>
    %64 = arith.addf %60, %63 : vector<96x128xf32>
    %cst_31 = arith.constant 0.000000e+00 : f32
    %65 = vector.shape_cast %9 : vector<96x1xi1> to vector<96x1xi1>
    %66 = vector.broadcast %65 : vector<96x1xi1> to vector<96x128xi1>
    %67 = vector.broadcast %cst_31 : f32 to vector<96x128xf32>
    %68 = arith.select %66, %64, %67 : vector<96x128xi1>, vector<96x128xf32>
    %69 = arith.addf %20, %68 : vector<96x128xf32>
    %cst_32 = arith.constant 0.00999999977 : f32
    %70 = vector.broadcast %cst_32 : f32 to vector<96x128xf32>
    %71 = arith.mulf %70, %69 : vector<96x128xf32>
    %72 = arith.maximumf %69, %71 : vector<96x128xf32>
    %73 = arith.truncf %72 : vector<96x128xf32> to vector<96x128xbf16>
    %c2 = arith.constant 2 : index
    %c0_33 = arith.constant 0 : index
    %c0_34 = arith.constant 0 : index
    %74 = vector.load %arg5[%c2, %c0_33, %c0_34] : memref<6x384x128xbf16, #tpu.memory_space<vmem>>, vector<1x384x128xbf16>
    %75 = vector.shape_cast %74 : vector<1x384x128xbf16> to vector<384x128xbf16>
    %76 = vector.extract_strided_slice %75 {offsets = [0, 0], sizes = [128, 128], strides = [1, 1]} : vector<384x128xbf16> to vector<128x128xbf16>
    %cst_35 = arith.constant dense<0.000000e+00> : vector<96x128xf32>
    %77 = tpu.matmul %73, %76, %cst_35 {dimension_numbers = #tpu.dot_dimension_numbers<[1], [0], [0], [1], [0, 0, 1, 1], [], []>} : vector<96x128xbf16>, vector<128x128xbf16>, vector<96x128xf32> -> vector<96x128xf32>
    %c3_i32 = arith.constant 3 : i32
    %78 = tpu.dynamic_rotate %77 by %c3_i32 dim 0 : vector<96x128xf32>, i32 -> vector<96x128xf32>
    %79 = vector.extract_strided_slice %75 {offsets = [128, 0], sizes = [128, 128], strides = [1, 1]} : vector<384x128xbf16> to vector<128x128xbf16>
    %cst_36 = arith.constant dense<0.000000e+00> : vector<96x128xf32>
    %80 = tpu.matmul %73, %79, %cst_36 {dimension_numbers = #tpu.dot_dimension_numbers<[1], [0], [0], [1], [0, 0, 1, 1], [], []>} : vector<96x128xbf16>, vector<128x128xbf16>, vector<96x128xf32> -> vector<96x128xf32>
    %81 = arith.addf %78, %80 : vector<96x128xf32>
    %82 = vector.extract_strided_slice %75 {offsets = [256, 0], sizes = [128, 128], strides = [1, 1]} : vector<384x128xbf16> to vector<128x128xbf16>
    %cst_37 = arith.constant dense<0.000000e+00> : vector<96x128xf32>
    %83 = tpu.matmul %73, %82, %cst_37 {dimension_numbers = #tpu.dot_dimension_numbers<[1], [0], [0], [1], [0, 0, 1, 1], [], []>} : vector<96x128xbf16>, vector<128x128xbf16>, vector<96x128xf32> -> vector<96x128xf32>
    %c93_i32 = arith.constant 93 : i32
    %84 = tpu.dynamic_rotate %83 by %c93_i32 dim 0 : vector<96x128xf32>, i32 -> vector<96x128xf32>
    %85 = arith.addf %81, %84 : vector<96x128xf32>
    %c2_38 = arith.constant 2 : index
    %c0_39 = arith.constant 0 : index
    %c0_40 = arith.constant 0 : index
    %86 = vector.load %arg6[%c2_38, %c0_39, %c0_40] : memref<6x1x128xf32, #tpu.memory_space<vmem>>, vector<1x1x128xf32>
    %87 = vector.shape_cast %86 : vector<1x1x128xf32> to vector<1x128xf32>
    %88 = vector.broadcast %87 : vector<1x128xf32> to vector<96x128xf32>
    %89 = arith.addf %85, %88 : vector<96x128xf32>
    %cst_41 = arith.constant 0.000000e+00 : f32
    %90 = vector.shape_cast %9 : vector<96x1xi1> to vector<96x1xi1>
    %91 = vector.broadcast %90 : vector<96x1xi1> to vector<96x128xi1>
    %92 = vector.broadcast %cst_41 : f32 to vector<96x128xf32>
    %93 = arith.select %91, %89, %92 : vector<96x128xi1>, vector<96x128xf32>
    %cst_42 = arith.constant 0.00999999977 : f32
    %94 = vector.broadcast %cst_42 : f32 to vector<96x128xf32>
    %95 = arith.mulf %94, %93 : vector<96x128xf32>
    %96 = arith.maximumf %93, %95 : vector<96x128xf32>
    %97 = arith.truncf %96 : vector<96x128xf32> to vector<96x128xbf16>
    %c3 = arith.constant 3 : index
    %c0_43 = arith.constant 0 : index
    %c0_44 = arith.constant 0 : index
    %98 = vector.load %arg5[%c3, %c0_43, %c0_44] : memref<6x384x128xbf16, #tpu.memory_space<vmem>>, vector<1x384x128xbf16>
    %99 = vector.shape_cast %98 : vector<1x384x128xbf16> to vector<384x128xbf16>
    %100 = vector.extract_strided_slice %99 {offsets = [0, 0], sizes = [128, 128], strides = [1, 1]} : vector<384x128xbf16> to vector<128x128xbf16>
    %cst_45 = arith.constant dense<0.000000e+00> : vector<96x128xf32>
    %101 = tpu.matmul %97, %100, %cst_45 {dimension_numbers = #tpu.dot_dimension_numbers<[1], [0], [0], [1], [0, 0, 1, 1], [], []>} : vector<96x128xbf16>, vector<128x128xbf16>, vector<96x128xf32> -> vector<96x128xf32>
    %c1_i32_46 = arith.constant 1 : i32
    %102 = tpu.dynamic_rotate %101 by %c1_i32_46 dim 0 : vector<96x128xf32>, i32 -> vector<96x128xf32>
    %103 = vector.extract_strided_slice %99 {offsets = [128, 0], sizes = [128, 128], strides = [1, 1]} : vector<384x128xbf16> to vector<128x128xbf16>
    %cst_47 = arith.constant dense<0.000000e+00> : vector<96x128xf32>
    %104 = tpu.matmul %97, %103, %cst_47 {dimension_numbers = #tpu.dot_dimension_numbers<[1], [0], [0], [1], [0, 0, 1, 1], [], []>} : vector<96x128xbf16>, vector<128x128xbf16>, vector<96x128xf32> -> vector<96x128xf32>
    %105 = arith.addf %102, %104 : vector<96x128xf32>
    %106 = vector.extract_strided_slice %99 {offsets = [256, 0], sizes = [128, 128], strides = [1, 1]} : vector<384x128xbf16> to vector<128x128xbf16>
    %cst_48 = arith.constant dense<0.000000e+00> : vector<96x128xf32>
    %107 = tpu.matmul %97, %106, %cst_48 {dimension_numbers = #tpu.dot_dimension_numbers<[1], [0], [0], [1], [0, 0, 1, 1], [], []>} : vector<96x128xbf16>, vector<128x128xbf16>, vector<96x128xf32> -> vector<96x128xf32>
    %c95_i32_49 = arith.constant 95 : i32
    %108 = tpu.dynamic_rotate %107 by %c95_i32_49 dim 0 : vector<96x128xf32>, i32 -> vector<96x128xf32>
    %109 = arith.addf %105, %108 : vector<96x128xf32>
    %c3_50 = arith.constant 3 : index
    %c0_51 = arith.constant 0 : index
    %c0_52 = arith.constant 0 : index
    %110 = vector.load %arg6[%c3_50, %c0_51, %c0_52] : memref<6x1x128xf32, #tpu.memory_space<vmem>>, vector<1x1x128xf32>
    %111 = vector.shape_cast %110 : vector<1x1x128xf32> to vector<1x128xf32>
    %112 = vector.broadcast %111 : vector<1x128xf32> to vector<96x128xf32>
    %113 = arith.addf %109, %112 : vector<96x128xf32>
    %cst_53 = arith.constant 0.000000e+00 : f32
    %114 = vector.shape_cast %9 : vector<96x1xi1> to vector<96x1xi1>
    %115 = vector.broadcast %114 : vector<96x1xi1> to vector<96x128xi1>
    %116 = vector.broadcast %cst_53 : f32 to vector<96x128xf32>
    %117 = arith.select %115, %113, %116 : vector<96x128xi1>, vector<96x128xf32>
    %118 = arith.addf %69, %117 : vector<96x128xf32>
    %cst_54 = arith.constant 0.00999999977 : f32
    %119 = vector.broadcast %cst_54 : f32 to vector<96x128xf32>
    %120 = arith.mulf %119, %118 : vector<96x128xf32>
    %121 = arith.maximumf %118, %120 : vector<96x128xf32>
    %122 = arith.truncf %121 : vector<96x128xf32> to vector<96x128xbf16>
    %c4 = arith.constant 4 : index
    %c0_55 = arith.constant 0 : index
    %c0_56 = arith.constant 0 : index
    %123 = vector.load %arg5[%c4, %c0_55, %c0_56] : memref<6x384x128xbf16, #tpu.memory_space<vmem>>, vector<1x384x128xbf16>
    %124 = vector.shape_cast %123 : vector<1x384x128xbf16> to vector<384x128xbf16>
    %125 = vector.extract_strided_slice %124 {offsets = [0, 0], sizes = [128, 128], strides = [1, 1]} : vector<384x128xbf16> to vector<128x128xbf16>
    %cst_57 = arith.constant dense<0.000000e+00> : vector<96x128xf32>
    %126 = tpu.matmul %122, %125, %cst_57 {dimension_numbers = #tpu.dot_dimension_numbers<[1], [0], [0], [1], [0, 0, 1, 1], [], []>} : vector<96x128xbf16>, vector<128x128xbf16>, vector<96x128xf32> -> vector<96x128xf32>
    %c5_i32 = arith.constant 5 : i32
    %127 = tpu.dynamic_rotate %126 by %c5_i32 dim 0 : vector<96x128xf32>, i32 -> vector<96x128xf32>
    %128 = vector.extract_strided_slice %124 {offsets = [128, 0], sizes = [128, 128], strides = [1, 1]} : vector<384x128xbf16> to vector<128x128xbf16>
    %cst_58 = arith.constant dense<0.000000e+00> : vector<96x128xf32>
    %129 = tpu.matmul %122, %128, %cst_58 {dimension_numbers = #tpu.dot_dimension_numbers<[1], [0], [0], [1], [0, 0, 1, 1], [], []>} : vector<96x128xbf16>, vector<128x128xbf16>, vector<96x128xf32> -> vector<96x128xf32>
    %130 = arith.addf %127, %129 : vector<96x128xf32>
    %131 = vector.extract_strided_slice %124 {offsets = [256, 0], sizes = [128, 128], strides = [1, 1]} : vector<384x128xbf16> to vector<128x128xbf16>
    %cst_59 = arith.constant dense<0.000000e+00> : vector<96x128xf32>
    %132 = tpu.matmul %122, %131, %cst_59 {dimension_numbers = #tpu.dot_dimension_numbers<[1], [0], [0], [1], [0, 0, 1, 1], [], []>} : vector<96x128xbf16>, vector<128x128xbf16>, vector<96x128xf32> -> vector<96x128xf32>
    %c91_i32 = arith.constant 91 : i32
    %133 = tpu.dynamic_rotate %132 by %c91_i32 dim 0 : vector<96x128xf32>, i32 -> vector<96x128xf32>
    %134 = arith.addf %130, %133 : vector<96x128xf32>
    %c4_60 = arith.constant 4 : index
    %c0_61 = arith.constant 0 : index
    %c0_62 = arith.constant 0 : index
    %135 = vector.load %arg6[%c4_60, %c0_61, %c0_62] : memref<6x1x128xf32, #tpu.memory_space<vmem>>, vector<1x1x128xf32>
    %136 = vector.shape_cast %135 : vector<1x1x128xf32> to vector<1x128xf32>
    %137 = vector.broadcast %136 : vector<1x128xf32> to vector<96x128xf32>
    %138 = arith.addf %134, %137 : vector<96x128xf32>
    %cst_63 = arith.constant 0.000000e+00 : f32
    %139 = vector.shape_cast %9 : vector<96x1xi1> to vector<96x1xi1>
    %140 = vector.broadcast %139 : vector<96x1xi1> to vector<96x128xi1>
    %141 = vector.broadcast %cst_63 : f32 to vector<96x128xf32>
    %142 = arith.select %140, %138, %141 : vector<96x128xi1>, vector<96x128xf32>
    %cst_64 = arith.constant 0.00999999977 : f32
    %143 = vector.broadcast %cst_64 : f32 to vector<96x128xf32>
    %144 = arith.mulf %143, %142 : vector<96x128xf32>
    %145 = arith.maximumf %142, %144 : vector<96x128xf32>
    %146 = arith.truncf %145 : vector<96x128xf32> to vector<96x128xbf16>
    %c5 = arith.constant 5 : index
    %c0_65 = arith.constant 0 : index
    %c0_66 = arith.constant 0 : index
    %147 = vector.load %arg5[%c5, %c0_65, %c0_66] : memref<6x384x128xbf16, #tpu.memory_space<vmem>>, vector<1x384x128xbf16>
    %148 = vector.shape_cast %147 : vector<1x384x128xbf16> to vector<384x128xbf16>
    %149 = vector.extract_strided_slice %148 {offsets = [0, 0], sizes = [128, 128], strides = [1, 1]} : vector<384x128xbf16> to vector<128x128xbf16>
    %cst_67 = arith.constant dense<0.000000e+00> : vector<96x128xf32>
    %150 = tpu.matmul %146, %149, %cst_67 {dimension_numbers = #tpu.dot_dimension_numbers<[1], [0], [0], [1], [0, 0, 1, 1], [], []>} : vector<96x128xbf16>, vector<128x128xbf16>, vector<96x128xf32> -> vector<96x128xf32>
    %c1_i32_68 = arith.constant 1 : i32
    %151 = tpu.dynamic_rotate %150 by %c1_i32_68 dim 0 : vector<96x128xf32>, i32 -> vector<96x128xf32>
    %152 = vector.extract_strided_slice %148 {offsets = [128, 0], sizes = [128, 128], strides = [1, 1]} : vector<384x128xbf16> to vector<128x128xbf16>
    %cst_69 = arith.constant dense<0.000000e+00> : vector<96x128xf32>
    %153 = tpu.matmul %146, %152, %cst_69 {dimension_numbers = #tpu.dot_dimension_numbers<[1], [0], [0], [1], [0, 0, 1, 1], [], []>} : vector<96x128xbf16>, vector<128x128xbf16>, vector<96x128xf32> -> vector<96x128xf32>
    %154 = arith.addf %151, %153 : vector<96x128xf32>
    %155 = vector.extract_strided_slice %148 {offsets = [256, 0], sizes = [128, 128], strides = [1, 1]} : vector<384x128xbf16> to vector<128x128xbf16>
    %cst_70 = arith.constant dense<0.000000e+00> : vector<96x128xf32>
    %156 = tpu.matmul %146, %155, %cst_70 {dimension_numbers = #tpu.dot_dimension_numbers<[1], [0], [0], [1], [0, 0, 1, 1], [], []>} : vector<96x128xbf16>, vector<128x128xbf16>, vector<96x128xf32> -> vector<96x128xf32>
    %c95_i32_71 = arith.constant 95 : i32
    %157 = tpu.dynamic_rotate %156 by %c95_i32_71 dim 0 : vector<96x128xf32>, i32 -> vector<96x128xf32>
    %158 = arith.addf %154, %157 : vector<96x128xf32>
    %c5_72 = arith.constant 5 : index
    %c0_73 = arith.constant 0 : index
    %c0_74 = arith.constant 0 : index
    %159 = vector.load %arg6[%c5_72, %c0_73, %c0_74] : memref<6x1x128xf32, #tpu.memory_space<vmem>>, vector<1x1x128xf32>
    %160 = vector.shape_cast %159 : vector<1x1x128xf32> to vector<1x128xf32>
    %161 = vector.broadcast %160 : vector<1x128xf32> to vector<96x128xf32>
    %162 = arith.addf %158, %161 : vector<96x128xf32>
    %cst_75 = arith.constant 0.000000e+00 : f32
    %163 = vector.shape_cast %9 : vector<96x1xi1> to vector<96x1xi1>
    %164 = vector.broadcast %163 : vector<96x1xi1> to vector<96x128xi1>
    %165 = vector.broadcast %cst_75 : f32 to vector<96x128xf32>
    %166 = arith.select %164, %162, %165 : vector<96x128xi1>, vector<96x128xf32>
    %167 = arith.addf %118, %166 : vector<96x128xf32>
    %168 = vector.extract_strided_slice %167 {offsets = [16, 0], sizes = [64, 128], strides = [1, 1]} : vector<96x128xf32> to vector<64x128xf32>
    %c0_76 = arith.constant 0 : index
    %c0_77 = arith.constant 0 : index
    %c0_78 = arith.constant 0 : index
    %169 = vector.load %arg7[%c0_76, %c0_77, %c0_78] : memref<1x64x128xf32, #tpu.memory_space<vmem>>, vector<1x64x128xf32>
    %170 = vector.shape_cast %169 : vector<1x64x128xf32> to vector<64x128xf32>
    %171 = vector.shape_cast %168 : vector<64x128xf32> to vector<1x64x128xf32>
    tpu.vector_store %arg7[%c0_76, %c0_77, %c0_78], %171 {strides = array<i32>} : memref<1x64x128xf32, #tpu.memory_space<vmem>>, vector<1x64x128xf32>,
    return
  }
  func.func @transform_0(%arg0: i32, %arg1: i32) -> (i32, i32, i32) {
    %c4_i32 = arith.constant 4 : i32
    %0 = arith.muli %arg1, %c4_i32 : i32
    %c1_i32 = arith.constant 1 : i32
    %1 = arith.subi %0, %c1_i32 : i32
    %c0_i32 = arith.constant 0 : i32
    %2 = arith.maxsi %1, %c0_i32 : i32
    %c0_i32_0 = arith.constant 0 : i32
    %c0_i32_1 = arith.constant 0 : i32
    return %arg0, %2, %c0_i32_0 : i32, i32, i32
  }
  func.func @transform_1(%arg0: i32, %arg1: i32) -> (i32, i32, i32) {
    %c0_i32 = arith.constant 0 : i32
    %c0_i32_0 = arith.constant 0 : i32
    return %arg0, %arg1, %c0_i32 : i32, i32, i32
  }
  func.func @transform_2(%arg0: i32, %arg1: i32) -> (i32, i32, i32) {
    %c1_i32 = arith.constant 1 : i32
    %0 = arith.addi %arg1, %c1_i32 : i32
    %c4_i32 = arith.constant 4 : i32
    %1 = arith.muli %0, %c4_i32 : i32
    %c3_i32 = arith.constant 3 : i32
    %2 = arith.minsi %1, %c3_i32 : i32
    %c0_i32 = arith.constant 0 : i32
    %c0_i32_0 = arith.constant 0 : i32
    return %arg0, %2, %c0_i32 : i32, i32, i32
  }
  func.func @transform_3(%arg0: i32, %arg1: i32) -> (i32, i32, i32) {
    %c0_i32 = arith.constant 0 : i32
    %c0_i32_0 = arith.constant 0 : i32
    %c0_i32_1 = arith.constant 0 : i32
    %c0_i32_2 = arith.constant 0 : i32
    return %c0_i32, %c0_i32_0, %c0_i32_1 : i32, i32, i32
  }
  func.func @transform_4(%arg0: i32, %arg1: i32) -> (i32, i32, i32) {
    %c0_i32 = arith.constant 0 : i32
    %c0_i32_0 = arith.constant 0 : i32
    %c0_i32_1 = arith.constant 0 : i32
    %c0_i32_2 = arith.constant 0 : i32
    return %c0_i32, %c0_i32_0, %c0_i32_1 : i32, i32, i32
  }
  func.func @transform_5(%arg0: i32, %arg1: i32) -> (i32, i32, i32) {
    %c0_i32 = arith.constant 0 : i32
    %c0_i32_0 = arith.constant 0 : i32
    return %arg0, %arg1, %c0_i32 : i32, i32, i32
  }
}

</mosaic_0001>

<llo_original>
// kernel: tpu_custom_call.1
$region0: #{tpu_custom_call.1}
  #allocation0 [shape = 'u32[]', space=smem, size = 0x4, offset = 0x4, fixed_abs, tag = 'smem constant byte address 0x4 - core index']
  #allocation1 [shape = 'u32[144,128]{1,0:T(1,128)}', space=vmem, size = 0x12000, scoped, tag = 'internal scratch']
  %s0 = inlined_call_operand.hbm [shape: f32[2,64,128], index: 0, kind: input, shape index: {}]
  %s1 = inlined_call_operand.hbm [shape: f32[2,64,128], index: 1, kind: input, shape index: {}]
  %s2 = inlined_call_operand.hbm [shape: f32[2,64,128], index: 2, kind: input, shape index: {}]
  %s3 = inlined_call_operand.hbm [shape: bf16[6,384,128], index: 3, kind: input, shape index: {}]
  %s4 = inlined_call_operand.vmem [shape: f32[6,1,128], index: 4, kind: input, shape index: {}]
  %s5 = inlined_call_operand.hbm [shape: f32[2,64,128], index: 5, kind: output, shape index: {}]
  %s6 = sld [smem:[#allocation0]]
  $region69: #{tpu_custom_call.1} parent=0
    _
  %s8 = ssub.s32 1, %s6
  %s9 = scalar_select 0, %s8, %s6
  $region1: #{tpu_custom_call.1} parent=0
    #allocation2 [shape = 'u8[16384]{0}', space=vmem, size = 0x4000, scoped, tag = 'input window, operand 0']
    #allocation3 [shape = 's32[2]{0}', space=sflag, size = 0x8, scoped, tag = 'scoped memory for tpu_custom_call.1']
    #allocation4 [shape = 's32[2]{0}', space=sflag, size = 0x8, scoped, tag = 'scoped memory for tpu_custom_call.1']
    #allocation5 [shape = 'u8[65536]{0}', space=vmem, size = 0x10000, scoped, tag = 'input window, operand 1']
    #allocation6 [shape = 's32[2]{0}', space=sflag, size = 0x8, scoped, tag = 'scoped memory for tpu_custom_call.1']
    #allocation7 [shape = 'u8[16384]{0}', space=vmem, size = 0x4000, scoped, tag = 'input window, operand 2']
    #allocation8 [shape = 'u8[589824]{0}', space=vmem, size = 0x90000, scoped, tag = 'input window, operand 3, single buffered']
    #allocation9 [shape = 's32[1]{0}', space=sflag, size = 0x4, scoped, tag = 'scoped memory for tpu_custom_call.1']
    #allocation10 [shape = 'u8[65536]{0}', space=vmem, size = 0x10000, scoped, tag = 'output window, operand 0']
    %10 = vsyncpa [#allocation3], 0
    %s11 = scalar_lea.sflag [#allocation3], 1
    %12 = vsyncpa %s11, 0
    %13 = vsyncpa [#allocation6], 0
    %s14 = scalar_lea.sflag [#allocation6], 1
    %15 = vsyncpa %s14, 0
    %16 = vsyncpa [#allocation9], 0
    %17 = vsyncpa [#allocation4], 0
    %s18 = scalar_lea.sflag [#allocation4], 1
    %19 = vsyncpa %s18, 0
    loop: start=0, step=1, limit=4
    $region2: #{tpu_custom_call.1} parent=1 // loop_pre_header
      _
    $region3: #{tpu_custom_call.1} parent=1 // loop_header
      %s21 = sphi 0, %s25
      %p22 = scmp.ge.s32.totalorder %s21, 4
      %s28 = sphi 0, %s40
      %s29 = sphi 0, %s36
      %s30 = sphi 0, %s28
      %s31 = sphi 0, %s29
      %s32 = sphi 0, %s30
      %s33 = sphi 0, %s31
      %s53 = sphi 0, %s55
      %s56 = sphi 0, %s53
      %s57 = sphi 0, %s56
      %s73 = sphi 0, %s57
      %s81 = sphi 0, %s83
      %s84 = sphi 0, %s81
      %s85 = sphi 0, %s84
      %s101 = sphi 0, %s85
      %s117 = sphi 0, %s119
      %s120 = sphi 0, %s117
      %s121 = sphi 0, %s120
      %s137 = sphi 0, %s121
      %s141 = sphi 0, %s141
      %s143 = sphi 0, %s141
      %s144 = sphi 0, %s143
      %s158 = sphi 0, %s144
      %s162 = sphi 0, %s162
      %s164 = sphi 0, %s162
      %s165 = sphi 0, %s164
      %s179 = sphi 0, %s165
      %s187 = sphi 0, %s189
      %s190 = sphi 0, %s187
      %s191 = sphi 0, %s190
      %s207 = sphi 0, %s191
    $region4: #{tpu_custom_call.1} parent=1 // loop_header_branch
      %24 = sbr.rel (%p22) target = $region8
    $region5: #{tpu_custom_call.1} parent=1 // loop_body
      %s26 = ssub.s32 %s21, 1
      %s27 = ssub.s32 %s21, 2
      %s34 = sadd.s32 1, %s29
      %p35 = scmp.ge.s32.totalorder %s34, 1
      %s36 = scalar_select %p35, 0, %s34
      %s37 = sadd.s32 1, %s28
      %s38 = scalar_select %p35, %s37, %s28
      %p39 = scmp.ge.s32.totalorder %s38, 2
      %s40 = scalar_select %p39, 0, %s38
      %s41 = smul.u32 %s29, 4
      %s42 = ssub.s32 %s41, 1
      %p43 = scmp.gt.s32.totalorder %s42, 0
      %s44 = scalar_select %p43, %s42, 0
      %s45 = smul.u32 %s36, 4
      %s46 = ssub.s32 %s45, 1
      %p47 = scmp.gt.s32.totalorder %s46, 0
      %s48 = scalar_select %p47, %s46, 0
      %s49 = ssub.s32 %s28, %s40
      %s50 = ssub.s32 %s44, %s48
      %s51 = sor.u32 %s49, %s50
      %p52 = scmp.eq.s32.totalorder %s51, 0
      %s54 = sadd.s32 %s53, 1
      %s55 = scalar_select %p52, %s53, %s54
      %p58 = pneg %p52
      %p59 = scmp.eq.s32.totalorder %s21, 1
      %p60 = por %p58, %p59
      %p61 = scmp.ne.s32.totalorder %s53, %s56
      %p62 = scmp.eq.s32.totalorder %s21, 0
      %p63 = por %p61, %p62
      %p64 = scmp.ne.s32.totalorder %s53, %s56
      %p65 = scmp.eq.s32.totalorder %s26, 1
      %p66 = por %p64, %p65
      %p67 = scmp.ne.s32.totalorder %s56, %s57
      %p68 = scmp.eq.s32.totalorder %s26, 0
      %p69 = por %p67, %p68
      %p70 = scmp.ne.s32.totalorder %s56, %s57
      %p71 = scmp.eq.s32.totalorder %s27, 1
      %p72 = por %p70, %p71
      %p74 = scmp.ne.s32.totalorder %s57, %s73
      %p75 = scmp.eq.s32.totalorder %s27, 0
      %p76 = por %p74, %p75
      %s77 = ssub.s32 %s28, %s40
      %s78 = ssub.s32 %s29, %s36
      %s79 = sor.u32 %s77, %s78
      %p80 = scmp.eq.s32.totalorder %s79, 0
      %s82 = sadd.s32 %s81, 1
      %s83 = scalar_select %p80, %s81, %s82
      %p86 = pneg %p80
      %p87 = scmp.eq.s32.totalorder %s21, 1
      %p88 = por %p86, %p87
      %p89 = scmp.ne.s32.totalorder %s81, %s84
      %p90 = scmp.eq.s32.totalorder %s21, 0
      %p91 = por %p89, %p90
      %p92 = scmp.ne.s32.totalorder %s81, %s84
      %p93 = scmp.eq.s32.totalorder %s26, 1
      %p94 = por %p92, %p93
      %p95 = scmp.ne.s32.totalorder %s84, %s85
      %p96 = scmp.eq.s32.totalorder %s26, 0
      %p97 = por %p95, %p96
      %p98 = scmp.ne.s32.totalorder %s84, %s85
      %p99 = scmp.eq.s32.totalorder %s27, 1
      %p100 = por %p98, %p99
      %p102 = scmp.ne.s32.totalorder %s85, %s101
      %p103 = scmp.eq.s32.totalorder %s27, 0
      %p104 = por %p102, %p103
      %s105 = sadd.s32 %s29, 1
      %s106 = smul.u32 %s105, 4
      %p107 = scmp.lt.s32.totalorder %s106, 3
      %s108 = scalar_select %p107, %s106, 3
      %s109 = sadd.s32 %s36, 1
      %s110 = smul.u32 %s109, 4
      %p111 = scmp.lt.s32.totalorder %s110, 3
      %s112 = scalar_select %p111, %s110, 3
      %s113 = ssub.s32 %s28, %s40
      %s114 = ssub.s32 %s108, %s112
      %s115 = sor.u32 %s113, %s114
      %p116 = scmp.eq.s32.totalorder %s115, 0
      %s118 = sadd.s32 %s117, 1
      %s119 = scalar_select %p116, %s117, %s118
      %p122 = pneg %p116
      %p123 = scmp.eq.s32.totalorder %s21, 1
      %p124 = por %p122, %p123
      %p125 = scmp.ne.s32.totalorder %s117, %s120
      %p126 = scmp.eq.s32.totalorder %s21, 0
      %p127 = por %p125, %p126
      %p128 = scmp.ne.s32.totalorder %s117, %s120
      %p129 = scmp.eq.s32.totalorder %s26, 1
      %p130 = por %p128, %p129
      %p131 = scmp.ne.s32.totalorder %s120, %s121
      %p132 = scmp.eq.s32.totalorder %s26, 0
      %p133 = por %p131, %p132
      %p134 = scmp.ne.s32.totalorder %s120, %s121
      %p135 = scmp.eq.s32.totalorder %s27, 1
      %p136 = por %p134, %p135
      %p138 = scmp.ne.s32.totalorder %s121, %s137
      %p139 = scmp.eq.s32.totalorder %s27, 0
      %p140 = por %p138, %p139
      %s142 = sadd.s32 %s141, 1
      %p145 = scmp.eq.s32.totalorder %s21, 1
      %p146 = scmp.ne.s32.totalorder %s141, %s143
      %p147 = scmp.eq.s32.totalorder %s21, 0
      %p148 = por %p146, %p147
      %p149 = scmp.ne.s32.totalorder %s141, %s143
      %p150 = scmp.eq.s32.totalorder %s26, 1
      %p151 = por %p149, %p150
      %p152 = scmp.ne.s32.totalorder %s143, %s144
      %p153 = scmp.eq.s32.totalorder %s26, 0
      %p154 = por %p152, %p153
      %p155 = scmp.ne.s32.totalorder %s143, %s144
      %p156 = scmp.eq.s32.totalorder %s27, 1
      %p157 = por %p155, %p156
      %p159 = scmp.ne.s32.totalorder %s144, %s158
      %p160 = scmp.eq.s32.totalorder %s27, 0
      %p161 = por %p159, %p160
      %s163 = sadd.s32 %s162, 1
      %p166 = scmp.eq.s32.totalorder %s21, 1
      %p167 = scmp.ne.s32.totalorder %s162, %s164
      %p168 = scmp.eq.s32.totalorder %s21, 0
      %p169 = por %p167, %p168
      %p170 = scmp.ne.s32.totalorder %s162, %s164
      %p171 = scmp.eq.s32.totalorder %s26, 1
      %p172 = por %p170, %p171
      %p173 = scmp.ne.s32.totalorder %s164, %s165
      %p174 = scmp.eq.s32.totalorder %s26, 0
      %p175 = por %p173, %p174
      %p176 = scmp.ne.s32.totalorder %s164, %s165
      %p177 = scmp.eq.s32.totalorder %s27, 1
      %p178 = por %p176, %p177
      %p180 = scmp.ne.s32.totalorder %s165, %s179
      %p181 = scmp.eq.s32.totalorder %s27, 0
      %p182 = por %p180, %p181
      %s183 = ssub.s32 %s28, %s40
      %s184 = ssub.s32 %s29, %s36
      %s185 = sor.u32 %s183, %s184
      %p186 = scmp.eq.s32.totalorder %s185, 0
      %s188 = sadd.s32 %s187, 1
      %s189 = scalar_select %p186, %s187, %s188
      %p192 = pneg %p186
      %p193 = scmp.eq.s32.totalorder %s21, 1
      %p194 = por %p192, %p193
      %p195 = scmp.ne.s32.totalorder %s187, %s190
      %p196 = scmp.eq.s32.totalorder %s21, 0
      %p197 = por %p195, %p196
      %p198 = scmp.ne.s32.totalorder %s187, %s190
      %p199 = scmp.eq.s32.totalorder %s26, 1
      %p200 = por %p198, %p199
      %p201 = scmp.ne.s32.totalorder %s190, %s191
      %p202 = scmp.eq.s32.totalorder %s26, 0
      %p203 = por %p201, %p202
      %p204 = scmp.ne.s32.totalorder %s190, %s191
      %p205 = scmp.eq.s32.totalorder %s27, 1
      %p206 = por %p204, %p205
      %p208 = scmp.ne.s32.totalorder %s191, %s207
      %p209 = scmp.eq.s32.totalorder %s27, 0
      %p210 = por %p208, %p209
      %p211 = scmp.le.s32.totalorder 1, %s21
      %p212 = scmp.lt.s32.totalorder %s21, 3
      %p213 = pnand %p211, %p212
      %p214 = pneg %p213
      // Predicated region
      $region9: #{tpu_custom_call.1} parent=5 // pred_check
        _
      $region10: #{tpu_custom_call.1} parent=5 // pred_check_branch
        %216 = sbr.rel (%p213) target = $region12
      $region11: #{tpu_custom_call.1} parent=5 // pred_region
        %s217 = ssub.s32 %s21, 1
        // Predicated region
        $region13: #{tpu_custom_call.1} parent=11 // pred_check
          %p218 = pneg %p154
        $region14: #{tpu_custom_call.1} parent=11 // pred_check_branch
          %220 = sbr.rel (%p218) target = $region16
        $region15: #{tpu_custom_call.1} parent=11 // pred_region
          %s222 = ssub.s32 18432, 18432
          %223 = vsyncadd [#allocation9], %s222
          %s224 = sshll.u32 [#allocation8], 4
          %s225 = int_to_ptr.vmem [resolvable:$true] %s224
          %230 = dma.hbm_to_vmem [thread:$0]  %s3, 18432, %s225, [#allocation9], 64, 64, 4
        $region16: #{tpu_custom_call.1} parent=11 // pred_fallthru
          _
        // Predicated region
        $region17: #{tpu_custom_call.1} parent=11 // pred_check
          %p231 = pneg %p175
        $region18: #{tpu_custom_call.1} parent=11 // pred_check_branch
          %233 = sbr.rel (%p231) target = $region20
        $region19: #{tpu_custom_call.1} parent=11 // pred_region
          _
        $region20: #{tpu_custom_call.1} parent=11 // pred_fallthru
          _
      $region12: #{tpu_custom_call.1} parent=5 // pred_fallthru
        _
      %p234 = scmp.lt.s32.totalorder %s21, 2
      // Predicated region
      $region21: #{tpu_custom_call.1} parent=5 // pred_check
        %p235 = pneg %p234
      $region22: #{tpu_custom_call.1} parent=5 // pred_check_branch
        %237 = sbr.rel (%p235) target = $region24
      $region23: #{tpu_custom_call.1} parent=5 // pred_region
        // Predicated region
        $region25: #{tpu_custom_call.1} parent=23 // pred_check
          %p238 = pneg %p63
        $region26: #{tpu_custom_call.1} parent=23 // pred_check_branch
          %240 = sbr.rel (%p238) target = $region28
        $region27: #{tpu_custom_call.1} parent=23 // pred_region
          %s241 = sand.u32 %s53, 1
          %s242 = scalar_lea.sflag [#allocation3], %s241
          %s243 = sand.u32 %s53, 1
          %s244 = smul.addr %s243, 16
          %s245 = scalar_lea.vmem [#allocation2], %s244
          %s246 = smul.u32 %s29, 4
          %s247 = ssub.s32 %s246, 1
          %p248 = scmp.gt.s32.totalorder %s247, 0
          %s249 = scalar_select %p248, %s247, 0
          %s250 = smul.u32 2, %s249
          %s252 = ssub.s32 256, 256
          %253 = vsyncadd %s242, %s252
          %s254 = smul.addr %s28, 8
          %s255 = sadd.s32 %s250, %s254
          %s256 = smul.addr %s255, 128
          %s257 = scalar_lea.hbm %s0, %s256
          %s258 = sshll.u32 %s245, 4
          %s259 = int_to_ptr.vmem [resolvable:$true] %s258
          %264 = dma.hbm_to_vmem [thread:$0]  %s257, 256, %s259, %s242, 128, 128, 8
        $region28: #{tpu_custom_call.1} parent=23 // pred_fallthru
          _
        // Predicated region
        $region29: #{tpu_custom_call.1} parent=23 // pred_check
          %p265 = pneg %p91
        $region30: #{tpu_custom_call.1} parent=23 // pred_check_branch
          %267 = sbr.rel (%p265) target = $region32
        $region31: #{tpu_custom_call.1} parent=23 // pred_region
          %s268 = sand.u32 %s21, 1
          %s269 = scalar_lea.sflag [#allocation6], %s268
          %s270 = sand.u32 %s81, 1
          %s271 = smul.addr %s270, 64
          %s272 = scalar_lea.vmem [#allocation5], %s271
          %s273 = smul.u32 8, %s29
          %s275 = ssub.s32 1024, 1024
          %276 = vsyncadd %s269, %s275
          %s277 = smul.addr %s28, 8
          %s278 = sadd.s32 %s273, %s277
          %s279 = smul.addr %s278, 128
          %s280 = scalar_lea.hbm %s1, %s279
          %s281 = sshll.u32 %s272, 4
          %s282 = int_to_ptr.vmem [resolvable:$true] %s281
          %287 = dma.hbm_to_vmem [thread:$0]  %s280, 1024, %s282, %s269, 128, 128, 8
        $region32: #{tpu_custom_call.1} parent=23 // pred_fallthru
          _
        // Predicated region
        $region33: #{tpu_custom_call.1} parent=23 // pred_check
          %p288 = pneg %p127
        $region34: #{tpu_custom_call.1} parent=23 // pred_check_branch
          %290 = sbr.rel (%p288) target = $region36
        $region35: #{tpu_custom_call.1} parent=23 // pred_region
          %s291 = sand.u32 %s21, 1
          %s292 = scalar_lea.sflag [#allocation6], %s291
          %s293 = sand.u32 %s117, 1
          %s294 = smul.addr %s293, 16
          %s295 = scalar_lea.vmem [#allocation7], %s294
          %s296 = sadd.s32 %s29, 1
          %s297 = smul.u32 %s296, 4
          %p298 = scmp.lt.s32.totalorder %s297, 3
          %s299 = scalar_select %p298, %s297, 3
          %s300 = smul.u32 2, %s299
          %s302 = ssub.s32 256, 256
          %303 = vsyncadd %s292, %s302
          %s304 = smul.addr %s28, 8
          %s305 = sadd.s32 %s300, %s304
          %s306 = smul.addr %s305, 128
          %s307 = scalar_lea.hbm %s2, %s306
          %s308 = sshll.u32 %s295, 4
          %s309 = int_to_ptr.vmem [resolvable:$true] %s308
          %314 = dma.hbm_to_vmem [thread:$0]  %s307, 256, %s309, %s292, 128, 128, 8
        $region36: #{tpu_custom_call.1} parent=23 // pred_fallthru
          _
      $region24: #{tpu_custom_call.1} parent=5 // pred_fallthru
        _
      %p315 = scmp.le.s32.totalorder 1, %s21
      %p316 = scmp.lt.s32.totalorder %s21, 3
      %p317 = pnand %p315, %p316
      %p318 = pneg %p317
      // Predicated region
      $region37: #{tpu_custom_call.1} parent=5 // pred_check
        _
      $region38: #{tpu_custom_call.1} parent=5 // pred_check_branch
        %320 = sbr.rel (%p317) target = $region40
      $region39: #{tpu_custom_call.1} parent=5 // pred_region
        %s321 = ssub.s32 %s21, 1
        %s322 = sand.u32 %s56, 1
        %s323 = scalar_lea.sflag [#allocation3], %s322
        %s324 = sand.u32 %s56, 1
        %s325 = smul.addr %s324, 16
        %s326 = scalar_lea.vmem [#allocation2], %s325
        // Predicated region
        $region41: #{tpu_custom_call.1} parent=39 // pred_check
          %p327 = pneg %p69
        $region42: #{tpu_custom_call.1} parent=39 // pred_check_branch
          %329 = sbr.rel (%p327) target = $region44
        $region43: #{tpu_custom_call.1} parent=39 // pred_region
          %330 = dma.done %s323, 256
        $region44: #{tpu_custom_call.1} parent=39 // pred_fallthru
          _
        %s331 = sand.u32 %s26, 1
        %s332 = scalar_lea.sflag [#allocation6], %s331
        %s333 = sand.u32 %s84, 1
        %s334 = smul.addr %s333, 64
        %s335 = scalar_lea.vmem [#allocation5], %s334
        // Predicated region
        $region45: #{tpu_custom_call.1} parent=39 // pred_check
          %p336 = pneg %p97
        $region46: #{tpu_custom_call.1} parent=39 // pred_check_branch
          %338 = sbr.rel (%p336) target = $region48
        $region47: #{tpu_custom_call.1} parent=39 // pred_region
          %339 = dma.done %s332, 1024
        $region48: #{tpu_custom_call.1} parent=39 // pred_fallthru
          _
        %s340 = sand.u32 %s26, 1
        %s341 = scalar_lea.sflag [#allocation6], %s340
        %s342 = sand.u32 %s120, 1
        %s343 = smul.addr %s342, 16
        %s344 = scalar_lea.vmem [#allocation7], %s343
        // Predicated region
        $region49: #{tpu_custom_call.1} parent=39 // pred_check
          %p345 = pneg %p133
        $region50: #{tpu_custom_call.1} parent=39 // pred_check_branch
          %347 = sbr.rel (%p345) target = $region52
        $region51: #{tpu_custom_call.1} parent=39 // pred_region
          %348 = dma.done %s341, 256
        $region52: #{tpu_custom_call.1} parent=39 // pred_fallthru
          _
        // Predicated region
        $region53: #{tpu_custom_call.1} parent=39 // pred_check
          %p349 = pneg %p154
        $region54: #{tpu_custom_call.1} parent=39 // pred_check_branch
          %351 = sbr.rel (%p349) target = $region56
        $region55: #{tpu_custom_call.1} parent=39 // pred_region
          %352 = dma.done [#allocation9], 18432
        $region56: #{tpu_custom_call.1} parent=39 // pred_fallthru
          _
        %s353 = sand.u32 %s56, 1
        %s354 = scalar_lea.sflag [#allocation3], %s353
        %s355 = sand.u32 %s56, 1
        %s356 = smul.addr %s355, 16
        %s357 = scalar_lea.vmem [#allocation2], %s356
        %p358 = pneg %p69
        %p359 = pneg %p66
        %s360 = sand.u32 %s26, 1
        %s361 = scalar_lea.sflag [#allocation6], %s360
        %s362 = sand.u32 %s84, 1
        %s363 = smul.addr %s362, 64
        %s364 = scalar_lea.vmem [#allocation5], %s363
        %p365 = pneg %p97
        %p366 = pneg %p94
        %s367 = sand.u32 %s26, 1
        %s368 = scalar_lea.sflag [#allocation6], %s367
        %s369 = sand.u32 %s120, 1
        %s370 = smul.addr %s369, 16
        %s371 = scalar_lea.vmem [#allocation7], %s370
        %p372 = pneg %p133
        %p373 = pneg %p130
        %p374 = pneg %p154
        %p375 = pneg %p151
        %p376 = pneg %p175
        %p377 = pneg %p172
        %p378 = pneg %p203
        %p379 = pneg %p200
        %s380 = sand.u32 %s190, 1
        %s381 = scalar_lea.sflag [#allocation4], %s380
        %s382 = sand.u32 %s190, 1
        %s383 = smul.addr %s382, 64
        %s384 = scalar_lea.vmem [#allocation10], %s383
        %s385 = smul.u32 %s31, 4
        %s386 = ssub.s32 %s385, 1
        %p387 = scmp.gt.s32.totalorder %s386, 0
        %s388 = scalar_select %p387, %s386, 0
        %s389 = smul.u32 2, %s388
        %s390 = smul.u32 8, %s31
        %s391 = sadd.s32 %s31, 1
        %s392 = smul.u32 %s391, 4
        %p393 = scmp.lt.s32.totalorder %s392, 3
        %s394 = scalar_select %p393, %s392, 3
        %s395 = smul.u32 2, %s394
        %s396 = smul.u32 8, %s31
        %v398 = vlaneseq
        %v399 = vshrl.u32 %v398, 7
        %v400 = vadd.s32 %v399, 8
        %v401 = vadd.s32 %v399, 16
        %v402 = vadd.s32 %v399, 24
        %v403 = vadd.s32 %v399, 32
        %v404 = vadd.s32 %v399, 40
        %v405 = vadd.s32 %v399, 48
        %v406 = vadd.s32 %v399, 56
        %v407 = vadd.s32 %v399, 64
        %v408 = vadd.s32 %v399, 72
        %v409 = vadd.s32 %v399, 80
        %v410 = vadd.s32 %v399, 88
        %s411 = smul.u32 %s31, 64
        %s412 = ssub.s32 %s411, 16
        %v413 = vstv %s412
        %v414 = vadd.s32 %v399, %v413
        %v415 = vadd.s32 %v400, %v413
        %v416 = vadd.s32 %v401, %v413
        %v417 = vadd.s32 %v402, %v413
        %v418 = vadd.s32 %v403, %v413
        %v419 = vadd.s32 %v404, %v413
        %v420 = vadd.s32 %v405, %v413
        %v421 = vadd.s32 %v406, %v413
        %v422 = vadd.s32 %v407, %v413
        %v423 = vadd.s32 %v408, %v413
        %v424 = vadd.s32 %v409, %v413
        %v425 = vadd.s32 %v410, %v413
        %vm426 = vcmp.ge.s32.totalorder %v414, 0
        %vm427 = vcmp.ge.s32.totalorder %v415, 0
        %vm428 = vcmp.ge.s32.totalorder %v416, 0
        %vm429 = vcmp.ge.s32.totalorder %v417, 0
        %vm430 = vcmp.ge.s32.totalorder %v418, 0
        %vm431 = vcmp.ge.s32.totalorder %v419, 0
        %vm432 = vcmp.ge.s32.totalorder %v420, 0
        %vm433 = vcmp.ge.s32.totalorder %v421, 0
        %vm434 = vcmp.ge.s32.totalorder %v422, 0
        %vm435 = vcmp.ge.s32.totalorder %v423, 0
        %vm436 = vcmp.ge.s32.totalorder %v424, 0
        %vm437 = vcmp.ge.s32.totalorder %v425, 0
        %vm438 = vcmp.lt.s32.totalorder %v414, 64
        %vm439 = vcmp.lt.s32.totalorder %v415, 64
        %vm440 = vcmp.lt.s32.totalorder %v416, 64
        %vm441 = vcmp.lt.s32.totalorder %v417, 64
        %vm442 = vcmp.lt.s32.totalorder %v418, 64
        %vm443 = vcmp.lt.s32.totalorder %v419, 64
        %vm444 = vcmp.lt.s32.totalorder %v420, 64
        %vm445 = vcmp.lt.s32.totalorder %v421, 64
        %vm446 = vcmp.lt.s32.totalorder %v422, 64
        %vm447 = vcmp.lt.s32.totalorder %v423, 64
        %vm448 = vcmp.lt.s32.totalorder %v424, 64
        %vm449 = vcmp.lt.s32.totalorder %v425, 64
        %vm450 = vmand %vm426, %vm438
        %vm451 = vmand %vm427, %vm439
        %vm452 = vmand %vm428, %vm440
        %vm453 = vmand %vm429, %vm441
        %vm454 = vmand %vm430, %vm442
        %vm455 = vmand %vm431, %vm443
        %vm456 = vmand %vm432, %vm444
        %vm457 = vmand %vm433, %vm445
        %vm458 = vmand %vm434, %vm446
        %vm459 = vmand %vm435, %vm447
        %vm460 = vmand %vm436, %vm448
        %vm461 = vmand %vm437, %vm449
        %v462 = vld [vmem:[%s326] sm:$0xff]
        %v463 = vld [vmem:[%s326 + $0x8] sm:$0xff]
        %v464 = vld [vmem:[%s335] sm:$0xff]
        %v465 = vld [vmem:[%s335 + $0x8] sm:$0xff]
        %v466 = vld [vmem:[%s335 + $0x10] sm:$0xff]
        %v467 = vld [vmem:[%s335 + $0x18] sm:$0xff]
        %v468 = vld [vmem:[%s335 + $0x20] sm:$0xff]
        %v469 = vld [vmem:[%s335 + $0x28] sm:$0xff]
        %v470 = vld [vmem:[%s335 + $0x30] sm:$0xff]
        %v471 = vld [vmem:[%s335 + $0x38] sm:$0xff]
        %v472 = vld [vmem:[%s344] sm:$0xff]
        %v473 = vld [vmem:[%s344 + $0x8] sm:$0xff]
        %v474 = vsel %vm450, 1, 0
        %v475 = vsel %vm451, 1, 0
        %v476 = vsel %vm452, 1, 0
        %v477 = vsel %vm453, 1, 0
        %v478 = vsel %vm454, 1, 0
        %v479 = vsel %vm455, 1, 0
        %v480 = vsel %vm456, 1, 0
        %v481 = vsel %vm457, 1, 0
        %v482 = vsel %vm458, 1, 0
        %v483 = vsel %vm459, 1, 0
        %v484 = vsel %vm460, 1, 0
        %v485 = vsel %vm461, 1, 0
        %vm486 = vcmp.eq.s32.totalorder %v474, 1
        %vm487 = vcmp.eq.s32.totalorder %v475, 1
        %vm488 = vcmp.eq.s32.totalorder %v476, 1
        %vm489 = vcmp.eq.s32.totalorder %v477, 1
        %vm490 = vcmp.eq.s32.totalorder %v478, 1
        %vm491 = vcmp.eq.s32.totalorder %v479, 1
        %vm492 = vcmp.eq.s32.totalorder %v480, 1
        %vm493 = vcmp.eq.s32.totalorder %v481, 1
        %vm494 = vcmp.eq.s32.totalorder %v482, 1
        %vm495 = vcmp.eq.s32.totalorder %v483, 1
        %vm496 = vcmp.eq.s32.totalorder %v484, 1
        %vm497 = vcmp.eq.s32.totalorder %v485, 1
        %v498 = vsel %vm486, %v462, 0.0
        %v499 = vsel %vm487, %v463, 0.0
        %v500 = vsel %vm488, %v464, 0.0
        %v501 = vsel %vm489, %v465, 0.0
        %v502 = vsel %vm490, %v466, 0.0
        %v503 = vsel %vm491, %v467, 0.0
        %v504 = vsel %vm492, %v468, 0.0
        %v505 = vsel %vm493, %v469, 0.0
        %v506 = vsel %vm494, %v470, 0.0
        %v507 = vsel %vm495, %v471, 0.0
        %v508 = vsel %vm496, %v472, 0.0
        %v509 = vsel %vm497, %v473, 0.0
        %v510 = vmul.f32 %v498, 0.01
        %v511 = vmul.f32 %v499, 0.01
        %v512 = vmul.f32 %v500, 0.01
        %v513 = vmul.f32 %v501, 0.01
        %v514 = vmul.f32 %v502, 0.01
        %v515 = vmul.f32 %v503, 0.01
        %v516 = vmul.f32 %v504, 0.01
        %v517 = vmul.f32 %v505, 0.01
        %v518 = vmul.f32 %v506, 0.01
        %v519 = vmul.f32 %v507, 0.01
        %v520 = vmul.f32 %v508, 0.01
        %v521 = vmul.f32 %v509, 0.01
        %v522 = vmax.f32 %v498, %v510
        %v523 = vmax.f32 %v499, %v511
        %v524 = vmax.f32 %v500, %v512
        %v525 = vmax.f32 %v501, %v513
        %v526 = vmax.f32 %v502, %v514
        %v527 = vmax.f32 %v503, %v515
        %v528 = vmax.f32 %v504, %v516
        %v529 = vmax.f32 %v505, %v517
        %v530 = vmax.f32 %v506, %v518
        %v531 = vmax.f32 %v507, %v519
        %v532 = vmax.f32 %v508, %v520
        %v533 = vmax.f32 %v509, %v521
        %v534 = vpack.c.bf16 %v523, %v522
        %v535 = vpack.c.bf16 %v525, %v524
        %v536 = vpack.c.bf16 %v527, %v526
        %v537 = vpack.c.bf16 %v529, %v528
        %v538 = vpack.c.bf16 %v531, %v530
        %v539 = vpack.c.bf16 %v533, %v532
        %v540 = vld [vmem:[#allocation8] sm:$0xf]
        %v541 = vld [vmem:[#allocation8 + $0x4] sm:$0xf]
        %v542 = vld [vmem:[#allocation8 + $0x8] sm:$0xf]
        %v543 = vld [vmem:[#allocation8 + $0xc] sm:$0xf]
        %v544 = vld [vmem:[#allocation8 + $0x10] sm:$0xf]
        %v545 = vld [vmem:[#allocation8 + $0x14] sm:$0xf]
        %v546 = vld [vmem:[#allocation8 + $0x18] sm:$0xf]
        %v547 = vld [vmem:[#allocation8 + $0x1c] sm:$0xf]
        %v548 = vld [vmem:[#allocation8 + $0x20] sm:$0xf]
        %v549 = vld [vmem:[#allocation8 + $0x24] sm:$0xf]
        %v550 = vld [vmem:[#allocation8 + $0x28] sm:$0xf]
        %v551 = vld [vmem:[#allocation8 + $0x2c] sm:$0xf]
        %v552 = vld [vmem:[#allocation8 + $0x30] sm:$0xf]
        %v553 = vld [vmem:[#allocation8 + $0x34] sm:$0xf]
        %v554 = vld [vmem:[#allocation8 + $0x38] sm:$0xf]
        %v555 = vld [vmem:[#allocation8 + $0x3c] sm:$0xf]
        %v556 = vld [vmem:[#allocation8 + $0x40] sm:$0xf]
        %v557 = vld [vmem:[#allocation8 + $0x44] sm:$0xf]
        %v558 = vld [vmem:[#allocation8 + $0x48] sm:$0xf]
        %v559 = vld [vmem:[#allocation8 + $0x4c] sm:$0xf]
        %v560 = vld [vmem:[#allocation8 + $0x50] sm:$0xf]
        %v561 = vld [vmem:[#allocation8 + $0x54] sm:$0xf]
        %v562 = vld [vmem:[#allocation8 + $0x58] sm:$0xf]
        %v563 = vld [vmem:[#allocation8 + $0x5c] sm:$0xf]
        %v564 = vld [vmem:[#allocation8 + $0x60] sm:$0xf]
        %v565 = vld [vmem:[#allocation8 + $0x64] sm:$0xf]
        %v566 = vld [vmem:[#allocation8 + $0x68] sm:$0xf]
        %v567 = vld [vmem:[#allocation8 + $0x6c] sm:$0xf]
        %v568 = vld [vmem:[#allocation8 + $0x70] sm:$0xf]
        %v569 = vld [vmem:[#allocation8 + $0x74] sm:$0xf]
        %v570 = vld [vmem:[#allocation8 + $0x78] sm:$0xf]
        %v571 = vld [vmem:[#allocation8 + $0x7c] sm:$0xf]
        %v572 = vld [vmem:[#allocation8 + $0x80] sm:$0xf]
        %v573 = vld [vmem:[#allocation8 + $0x84] sm:$0xf]
        %v574 = vld [vmem:[#allocation8 + $0x88] sm:$0xf]
        %v575 = vld [vmem:[#allocation8 + $0x8c] sm:$0xf]
        %v576 = vld [vmem:[#allocation8 + $0x90] sm:$0xf]
        %v577 = vld [vmem:[#allocation8 + $0x94] sm:$0xf]
        %v578 = vld [vmem:[#allocation8 + $0x98] sm:$0xf]
        %v579 = vld [vmem:[#allocation8 + $0x9c] sm:$0xf]
        %v580 = vld [vmem:[#allocation8 + $0xa0] sm:$0xf]
        %v581 = vld [vmem:[#allocation8 + $0xa4] sm:$0xf]
        %v582 = vld [vmem:[#allocation8 + $0xa8] sm:$0xf]
        %v583 = vld [vmem:[#allocation8 + $0xac] sm:$0xf]
        %v584 = vld [vmem:[#allocation8 + $0xb0] sm:$0xf]
        %v585 = vld [vmem:[#allocation8 + $0xb4] sm:$0xf]
        %v586 = vld [vmem:[#allocation8 + $0xb8] sm:$0xf]
        %v587 = vld [vmem:[#allocation8 + $0xbc] sm:$0xf]
        %v604 = vunpack.c.l.b16 %v540
        %v605 = vunpack.c.l.b16 %v541
        %v606 = vunpack.c.l.b16 %v542
        %v607 = vunpack.c.l.b16 %v543
        %v608 = vunpack.c.l.b16 %v544
        %v609 = vunpack.c.l.b16 %v545
        %v610 = vunpack.c.l.b16 %v546
        %v611 = vunpack.c.l.b16 %v547
        %v612 = vunpack.c.l.b16 %v548
        %v613 = vunpack.c.l.b16 %v549
        %v614 = vunpack.c.l.b16 %v550
        %v615 = vunpack.c.l.b16 %v551
        %v616 = vunpack.c.l.b16 %v552
        %v617 = vunpack.c.l.b16 %v553
        %v618 = vunpack.c.l.b16 %v554
        %v619 = vunpack.c.l.b16 %v555
        %v620 = vpack.c.b16 %v605, %v604
        %v621 = vpack.c.b16 %v607, %v606
        %v622 = vpack.c.b16 %v609, %v608
        %v623 = vpack.c.b16 %v611, %v610
        %v624 = vpack.c.b16 %v613, %v612
        %v625 = vpack.c.b16 %v615, %v614
        %v626 = vpack.c.b16 %v617, %v616
        %v627 = vpack.c.b16 %v619, %v618
        %636 = vmatprep.subr.bf16.mxu0 0
        %637 = vmatpush1.bf16.msra.mxu0 %v620
        %638 = vmatprep.subr.bf16.mxu0 0
        %639 = vmatpush1.bf16.msra.mxu0 %v621
        %640 = vmatprep.subr.bf16.mxu0 0
        %641 = vmatpush1.bf16.msra.mxu0 %v622
        %642 = vmatprep.subr.bf16.mxu0 0
        %643 = vmatpush1.bf16.msra.mxu0 %v623
        %644 = vmatprep.subr.bf16.mxu0 0
        %645 = vmatpush1.bf16.msra.mxu0 %v624
        %646 = vmatprep.subr.bf16.mxu0 0
        %647 = vmatpush1.bf16.msra.mxu0 %v625
        %648 = vmatprep.subr.bf16.mxu0 0
        %649 = vmatpush1.bf16.msra.mxu0 %v626
        %650 = vmatprep.subr.bf16.mxu0 0
        %651 = vmatpush1.bf16.msra.mxu0 %v627
        %652 = vmatprep.subr.bf16.mxu0 0
        %653 = vmatpush1.bf16.msra.mxu0 0
        %654 = vmatprep.subr.bf16.mxu0 0
        %655 = vmatpush1.bf16.msra.mxu0 0
        %656 = vmatprep.subr.bf16.mxu0 0
        %657 = vmatpush1.bf16.msra.mxu0 0
        %658 = vmatprep.subr.bf16.mxu0 0
        %659 = vmatpush1.bf16.msra.mxu0 0
        %660 = vmatprep.subr.bf16.mxu0 0
        %661 = vmatpush1.bf16.msra.mxu0 0
        %662 = vmatprep.subr.bf16.mxu0 0
        %663 = vmatpush1.bf16.msra.mxu0 0
        %664 = vmatprep.subr.bf16.mxu0 0
        %665 = vmatpush1.bf16.msra.mxu0 0
        %666 = vmatprep.subr.bf16.mxu0 0
        %667 = vmatpush1.bf16.msra.mxu0 0
        %668 = vmatprep.mubr.bf16.mxu0 0
        %669 = vmatmul.mubr.bf16.gmra.mrb[0].mxu0 %v534
        %v670 = vpop.f32.mrb[0].mxu0
        %v671 = vadd.f32 0.0, %v670
        %v672 = vpop.f32.mrb[0].mxu0
        %v673 = vpop.f32.mrb[0].mxu0
        %v674 = vadd.f32 0.0, %v673
        %v675 = vpop.f32.mrb[0].mxu0
        %676 = vmatprep.mubr.bf16.mxu0 0
        %677 = vmatmul.mubr.bf16.gmra.mrb[0].mxu0 %v535
        %v678 = vpop.f32.mrb[0].mxu0
        %v679 = vadd.f32 0.0, %v678
        %v680 = vpop.f32.mrb[0].mxu0
        %v681 = vpop.f32.mrb[0].mxu0
        %v682 = vadd.f32 0.0, %v681
        %v683 = vpop.f32.mrb[0].mxu0
        %684 = vmatprep.mubr.bf16.mxu0 0
        %685 = vmatmul.mubr.bf16.gmra.mrb[0].mxu0 %v536
        %v686 = vpop.f32.mrb[0].mxu0
        %v687 = vadd.f32 0.0, %v686
        %v688 = vpop.f32.mrb[0].mxu0
        %v689 = vpop.f32.mrb[0].mxu0
        %v690 = vadd.f32 0.0, %v689
        %v691 = vpop.f32.mrb[0].mxu0
        %692 = vmatprep.mubr.bf16.mxu0 0
        %693 = vmatmul.mubr.bf16.gmra.mrb[0].mxu0 %v537
        %v694 = vpop.f32.mrb[0].mxu0
        %v695 = vadd.f32 0.0, %v694
        %v696 = vpop.f32.mrb[0].mxu0
        %v697 = vpop.f32.mrb[0].mxu0
        %v698 = vadd.f32 0.0, %v697
        %v699 = vpop.f32.mrb[0].mxu0
        %700 = vmatprep.mubr.bf16.mxu0 0
        %701 = vmatmul.mubr.bf16.gmra.mrb[0].mxu0 %v538
        %v702 = vpop.f32.mrb[0].mxu0
        %v703 = vadd.f32 0.0, %v702
        %v704 = vpop.f32.mrb[0].mxu0
        %v705 = vpop.f32.mrb[0].mxu0
        %v706 = vadd.f32 0.0, %v705
        %v707 = vpop.f32.mrb[0].mxu0
        %708 = vmatprep.mubr.bf16.mxu0 0
        %709 = vmatmul.mubr.bf16.gmra.mrb[0].mxu0 %v539
        %v710 = vpop.f32.mrb[0].mxu0
        %v711 = vadd.f32 0.0, %v710
        %v712 = vpop.f32.mrb[0].mxu0
        %v713 = vpop.f32.mrb[0].mxu0
        %v714 = vadd.f32 0.0, %v713
        %v715 = vpop.f32.mrb[0].mxu0
        %716 = vdwg.mxu0
        %v717 = vrot.slane %v671, 7
        %v718 = vrot.slane %v674, 7
        %v719 = vrot.slane %v679, 7
        %v720 = vrot.slane %v682, 7
        %v721 = vrot.slane %v687, 7
        %v722 = vrot.slane %v690, 7
        %v723 = vrot.slane %v695, 7
        %v724 = vrot.slane %v698, 7
        %v725 = vrot.slane %v703, 7
        %v726 = vrot.slane %v706, 7
        %v727 = vrot.slane %v711, 7
        %v728 = vrot.slane %v714, 7
        %vm729 = vcmp.lt.s32.totalorder %v399, 1
        %v730 = vsel %vm729, %v727, %v728
        %v731 = vsel %vm729, %v726, %v727
        %v732 = vsel %vm729, %v725, %v726
        %v733 = vsel %vm729, %v724, %v725
        %v734 = vsel %vm729, %v723, %v724
        %v735 = vsel %vm729, %v722, %v723
        %v736 = vsel %vm729, %v721, %v722
        %v737 = vsel %vm729, %v720, %v721
        %v738 = vsel %vm729, %v719, %v720
        %v739 = vsel %vm729, %v718, %v719
        %v740 = vsel %vm729, %v717, %v718
        %v741 = vsel %vm729, %v728, %v717
        %v758 = vunpack.c.l.b16 %v556
        %v759 = vunpack.c.l.b16 %v557
        %v760 = vunpack.c.l.b16 %v558
        %v761 = vunpack.c.l.b16 %v559
        %v762 = vunpack.c.l.b16 %v560
        %v763 = vunpack.c.l.b16 %v561
        %v764 = vunpack.c.l.b16 %v562
        %v765 = vunpack.c.l.b16 %v563
        %v766 = vunpack.c.l.b16 %v564
        %v767 = vunpack.c.l.b16 %v565
        %v768 = vunpack.c.l.b16 %v566
        %v769 = vunpack.c.l.b16 %v567
        %v770 = vunpack.c.l.b16 %v568
        %v771 = vunpack.c.l.b16 %v569
        %v772 = vunpack.c.l.b16 %v570
        %v773 = vunpack.c.l.b16 %v571
        %v774 = vpack.c.b16 %v759, %v758
        %v775 = vpack.c.b16 %v761, %v760
        %v776 = vpack.c.b16 %v763, %v762
        %v777 = vpack.c.b16 %v765, %v764
        %v778 = vpack.c.b16 %v767, %v766
        %v779 = vpack.c.b16 %v769, %v768
        %v780 = vpack.c.b16 %v771, %v770
        %v781 = vpack.c.b16 %v773, %v772
        %790 = vmatprep.subr.bf16.mxu0 0
        %791 = vmatpush1.bf16.msra.mxu0 %v774
        %792 = vmatprep.subr.bf16.mxu0 0
        %793 = vmatpush1.bf16.msra.mxu0 %v775
        %794 = vmatprep.subr.bf16.mxu0 0
        %795 = vmatpush1.bf16.msra.mxu0 %v776
        %796 = vmatprep.subr.bf16.mxu0 0
        %797 = vmatpush1.bf16.msra.mxu0 %v777
        %798 = vmatprep.subr.bf16.mxu0 0
        %799 = vmatpush1.bf16.msra.mxu0 %v778
        %800 = vmatprep.subr.bf16.mxu0 0
        %801 = vmatpush1.bf16.msra.mxu0 %v779
        %802 = vmatprep.subr.bf16.mxu0 0
        %803 = vmatpush1.bf16.msra.mxu0 %v780
        %804 = vmatprep.subr.bf16.mxu0 0
        %805 = vmatpush1.bf16.msra.mxu0 %v781
        %806 = vmatprep.subr.bf16.mxu0 0
        %807 = vmatpush1.bf16.msra.mxu0 0
        %808 = vmatprep.subr.bf16.mxu0 0
        %809 = vmatpush1.bf16.msra.mxu0 0
        %810 = vmatprep.subr.bf16.mxu0 0
        %811 = vmatpush1.bf16.msra.mxu0 0
        %812 = vmatprep.subr.bf16.mxu0 0
        %813 = vmatpush1.bf16.msra.mxu0 0
        %814 = vmatprep.subr.bf16.mxu0 0
        %815 = vmatpush1.bf16.msra.mxu0 0
        %816 = vmatprep.subr.bf16.mxu0 0
        %817 = vmatpush1.bf16.msra.mxu0 0
        %818 = vmatprep.subr.bf16.mxu0 0
        %819 = vmatpush1.bf16.msra.mxu0 0
        %820 = vmatprep.subr.bf16.mxu0 0
        %821 = vmatpush1.bf16.msra.mxu0 0
        %822 = vmatprep.mubr.bf16.mxu0 0
        %823 = vmatmul.mubr.bf16.gmra.mrb[0].mxu0 %v534
        %v824 = vpop.f32.mrb[0].mxu0
        %v825 = vadd.f32 0.0, %v824
        %v826 = vpop.f32.mrb[0].mxu0
        %v827 = vpop.f32.mrb[0].mxu0
        %v828 = vadd.f32 0.0, %v827
        %v829 = vpop.f32.mrb[0].mxu0
        %830 = vmatprep.mubr.bf16.mxu0 0
        %831 = vmatmul.mubr.bf16.gmra.mrb[0].mxu0 %v535
        %v832 = vpop.f32.mrb[0].mxu0
        %v833 = vadd.f32 0.0, %v832
        %v834 = vpop.f32.mrb[0].mxu0
        %v835 = vpop.f32.mrb[0].mxu0
        %v836 = vadd.f32 0.0, %v835
        %v837 = vpop.f32.mrb[0].mxu0
        %838 = vmatprep.mubr.bf16.mxu0 0
        %839 = vmatmul.mubr.bf16.gmra.mrb[0].mxu0 %v536
        %v840 = vpop.f32.mrb[0].mxu0
        %v841 = vadd.f32 0.0, %v840
        %v842 = vpop.f32.mrb[0].mxu0
        %v843 = vpop.f32.mrb[0].mxu0
        %v844 = vadd.f32 0.0, %v843
        %v845 = vpop.f32.mrb[0].mxu0
        %846 = vmatprep.mubr.bf16.mxu0 0
        %847 = vmatmul.mubr.bf16.gmra.mrb[0].mxu0 %v537
        %v848 = vpop.f32.mrb[0].mxu0
        %v849 = vadd.f32 0.0, %v848
        %v850 = vpop.f32.mrb[0].mxu0
        %v851 = vpop.f32.mrb[0].mxu0
        %v852 = vadd.f32 0.0, %v851
        %v853 = vpop.f32.mrb[0].mxu0
        %854 = vmatprep.mubr.bf16.mxu0 0
        %855 = vmatmul.mubr.bf16.gmra.mrb[0].mxu0 %v538
        %v856 = vpop.f32.mrb[0].mxu0
        %v857 = vadd.f32 0.0, %v856
        %v858 = vpop.f32.mrb[0].mxu0
        %v859 = vpop.f32.mrb[0].mxu0
        %v860 = vadd.f32 0.0, %v859
        %v861 = vpop.f32.mrb[0].mxu0
        %862 = vmatprep.mubr.bf16.mxu0 0
        %863 = vmatmul.mubr.bf16.gmra.mrb[0].mxu0 %v539
        %v864 = vpop.f32.mrb[0].mxu0
        %v865 = vadd.f32 0.0, %v864
        %v866 = vpop.f32.mrb[0].mxu0
        %v867 = vpop.f32.mrb[0].mxu0
        %v868 = vadd.f32 0.0, %v867
        %v869 = vpop.f32.mrb[0].mxu0
        %870 = vdwg.mxu0
        %v871 = vadd.f32 %v741, %v825
        %v872 = vadd.f32 %v740, %v828
        %v873 = vadd.f32 %v739, %v833
        %v874 = vadd.f32 %v738, %v836
        %v875 = vadd.f32 %v737, %v841
        %v876 = vadd.f32 %v736, %v844
        %v877 = vadd.f32 %v735, %v849
        %v878 = vadd.f32 %v734, %v852
        %v879 = vadd.f32 %v733, %v857
        %v880 = vadd.f32 %v732, %v860
        %v881 = vadd.f32 %v731, %v865
        %v882 = vadd.f32 %v730, %v868
        %v899 = vunpack.c.l.b16 %v572
        %v900 = vunpack.c.l.b16 %v573
        %v901 = vunpack.c.l.b16 %v574
        %v902 = vunpack.c.l.b16 %v575
        %v903 = vunpack.c.l.b16 %v576
        %v904 = vunpack.c.l.b16 %v577
        %v905 = vunpack.c.l.b16 %v578
        %v906 = vunpack.c.l.b16 %v579
        %v907 = vunpack.c.l.b16 %v580
        %v908 = vunpack.c.l.b16 %v581
        %v909 = vunpack.c.l.b16 %v582
        %v910 = vunpack.c.l.b16 %v583
        %v911 = vunpack.c.l.b16 %v584
        %v912 = vunpack.c.l.b16 %v585
        %v913 = vunpack.c.l.b16 %v586
        %v914 = vunpack.c.l.b16 %v587
        %v915 = vpack.c.b16 %v900, %v899
        %v916 = vpack.c.b16 %v902, %v901
        %v917 = vpack.c.b16 %v904, %v903
        %v918 = vpack.c.b16 %v906, %v905
        %v919 = vpack.c.b16 %v908, %v907
        %v920 = vpack.c.b16 %v910, %v909
        %v921 = vpack.c.b16 %v912, %v911
        %v922 = vpack.c.b16 %v914, %v913
        %931 = vmatprep.subr.bf16.mxu0 0
        %932 = vmatpush1.bf16.msra.mxu0 %v915
        %933 = vmatprep.subr.bf16.mxu0 0
        %934 = vmatpush1.bf16.msra.mxu0 %v916
        %935 = vmatprep.subr.bf16.mxu0 0
        %936 = vmatpush1.bf16.msra.mxu0 %v917
        %937 = vmatprep.subr.bf16.mxu0 0
        %938 = vmatpush1.bf16.msra.mxu0 %v918
        %939 = vmatprep.subr.bf16.mxu0 0
        %940 = vmatpush1.bf16.msra.mxu0 %v919
        %941 = vmatprep.subr.bf16.mxu0 0
        %942 = vmatpush1.bf16.msra.mxu0 %v920
        %943 = vmatprep.subr.bf16.mxu0 0
        %944 = vmatpush1.bf16.msra.mxu0 %v921
        %945 = vmatprep.subr.bf16.mxu0 0
        %946 = vmatpush1.bf16.msra.mxu0 %v922
        %947 = vmatprep.subr.bf16.mxu0 0
        %948 = vmatpush1.bf16.msra.mxu0 0
        %949 = vmatprep.subr.bf16.mxu0 0
        %950 = vmatpush1.bf16.msra.mxu0 0
        %951 = vmatprep.subr.bf16.mxu0 0
        %952 = vmatpush1.bf16.msra.mxu0 0
        %953 = vmatprep.subr.bf16.mxu0 0
        %954 = vmatpush1.bf16.msra.mxu0 0
        %955 = vmatprep.subr.bf16.mxu0 0
        %956 = vmatpush1.bf16.msra.mxu0 0
        %957 = vmatprep.subr.bf16.mxu0 0
        %958 = vmatpush1.bf16.msra.mxu0 0
        %959 = vmatprep.subr.bf16.mxu0 0
        %960 = vmatpush1.bf16.msra.mxu0 0
        %961 = vmatprep.subr.bf16.mxu0 0
        %962 = vmatpush1.bf16.msra.mxu0 0
        %963 = vmatprep.mubr.bf16.mxu0 0
        %964 = vmatmul.mubr.bf16.gmra.mrb[0].mxu0 %v534
        %v965 = vpop.f32.mrb[0].mxu0
        %v966 = vadd.f32 0.0, %v965
        %v967 = vpop.f32.mrb[0].mxu0
        %v968 = vpop.f32.mrb[0].mxu0
        %v969 = vadd.f32 0.0, %v968
        %v970 = vpop.f32.mrb[0].mxu0
        %971 = vmatprep.mubr.bf16.mxu0 0
        %972 = vmatmul.mubr.bf16.gmra.mrb[0].mxu0 %v535
        %v973 = vpop.f32.mrb[0].mxu0
        %v974 = vadd.f32 0.0, %v973
        %v975 = vpop.f32.mrb[0].mxu0
        %v976 = vpop.f32.mrb[0].mxu0
        %v977 = vadd.f32 0.0, %v976
        %v978 = vpop.f32.mrb[0].mxu0
        %979 = vmatprep.mubr.bf16.mxu0 0
        %980 = vmatmul.mubr.bf16.gmra.mrb[0].mxu0 %v536
        %v981 = vpop.f32.mrb[0].mxu0
        %v982 = vadd.f32 0.0, %v981
        %v983 = vpop.f32.mrb[0].mxu0
        %v984 = vpop.f32.mrb[0].mxu0
        %v985 = vadd.f32 0.0, %v984
        %v986 = vpop.f32.mrb[0].mxu0
        %987 = vmatprep.mubr.bf16.mxu0 0
        %988 = vmatmul.mubr.bf16.gmra.mrb[0].mxu0 %v537
        %v989 = vpop.f32.mrb[0].mxu0
        %v990 = vadd.f32 0.0, %v989
        %v991 = vpop.f32.mrb[0].mxu0
        %v992 = vpop.f32.mrb[0].mxu0
        %v993 = vadd.f32 0.0, %v992
        %v994 = vpop.f32.mrb[0].mxu0
        %995 = vmatprep.mubr.bf16.mxu0 0
        %996 = vmatmul.mubr.bf16.gmra.mrb[0].mxu0 %v538
        %v997 = vpop.f32.mrb[0].mxu0
        %v998 = vadd.f32 0.0, %v997
        %v999 = vpop.f32.mrb[0].mxu0
        %v1000 = vpop.f32.mrb[0].mxu0
        %v1001 = vadd.f32 0.0, %v1000
        %v1002 = vpop.f32.mrb[0].mxu0
        %1003 = vmatprep.mubr.bf16.mxu0 0
        %1004 = vmatmul.mubr.bf16.gmra.mrb[0].mxu0 %v539
        %v1005 = vpop.f32.mrb[0].mxu0
        %v1006 = vadd.f32 0.0, %v1005
        %v1007 = vpop.f32.mrb[0].mxu0
        %v1008 = vpop.f32.mrb[0].mxu0
        %v1009 = vadd.f32 0.0, %v1008
        %v1010 = vpop.f32.mrb[0].mxu0
        %1011 = vdwg.mxu0
        %v1012 = vrot.slane %v966, 1
        %v1013 = vrot.slane %v969, 1
        %v1014 = vrot.slane %v974, 1
        %v1015 = vrot.slane %v977, 1
        %v1016 = vrot.slane %v982, 1
        %v1017 = vrot.slane %v985, 1
        %v1018 = vrot.slane %v990, 1
        %v1019 = vrot.slane %v993, 1
        %v1020 = vrot.slane %v998, 1
        %v1021 = vrot.slane %v1001, 1
        %v1022 = vrot.slane %v1006, 1
        %v1023 = vrot.slane %v1009, 1
        %vm1024 = vcmp.lt.s32.totalorder %v399, 7
        %v1025 = vsel %vm1024, %v1022, %v1023
        %v1026 = vsel %vm1024, %v1021, %v1022
        %v1027 = vsel %vm1024, %v1020, %v1021
        %v1028 = vsel %vm1024, %v1019, %v1020
        %v1029 = vsel %vm1024, %v1018, %v1019
        %v1030 = vsel %vm1024, %v1017, %v1018
        %v1031 = vsel %vm1024, %v1016, %v1017
        %v1032 = vsel %vm1024, %v1015, %v1016
        %v1033 = vsel %vm1024, %v1014, %v1015
        %v1034 = vsel %vm1024, %v1013, %v1014
        %v1035 = vsel %vm1024, %v1012, %v1013
        %v1036 = vsel %vm1024, %v1023, %v1012
        %v1037 = vadd.f32 %v871, %v1035
        %v1038 = vadd.f32 %v872, %v1034
        %v1039 = vadd.f32 %v873, %v1033
        %v1040 = vadd.f32 %v874, %v1032
        %v1041 = vadd.f32 %v875, %v1031
        %v1042 = vadd.f32 %v876, %v1030
        %v1043 = vadd.f32 %v877, %v1029
        %v1044 = vadd.f32 %v878, %v1028
        %v1045 = vadd.f32 %v879, %v1027
        %v1046 = vadd.f32 %v880, %v1026
        %v1047 = vadd.f32 %v881, %v1025
        %v1048 = vadd.f32 %v882, %v1036
        %v1049 = vld [vmem:[%s4] sm:$0x1]
        %v1051 = vlaneseq
        %v1052 = vshrl.u32 %v1051, 7
        %v1053 = vsub.s32 0, %v1052
        %v1054 = vrot.slane %v1049, %v1053
        %v1056 = vadd.f32 %v1037, %v1054
        %v1057 = vadd.f32 %v1038, %v1054
        %v1058 = vadd.f32 %v1039, %v1054
        %v1059 = vadd.f32 %v1040, %v1054
        %v1060 = vadd.f32 %v1041, %v1054
        %v1061 = vadd.f32 %v1042, %v1054
        %v1062 = vadd.f32 %v1043, %v1054
        %v1063 = vadd.f32 %v1044, %v1054
        %v1064 = vadd.f32 %v1045, %v1054
        %v1065 = vadd.f32 %v1046, %v1054
        %v1066 = vadd.f32 %v1047, %v1054
        %v1067 = vadd.f32 %v1048, %v1054
        %v1068 = vsel %vm486, %v1056, 0.0
        %v1069 = vsel %vm487, %v1057, 0.0
        %v1070 = vsel %vm488, %v1058, 0.0
        %v1071 = vsel %vm489, %v1059, 0.0
        %v1072 = vsel %vm490, %v1060, 0.0
        %v1073 = vsel %vm491, %v1061, 0.0
        %v1074 = vsel %vm492, %v1062, 0.0
        %v1075 = vsel %vm493, %v1063, 0.0
        %v1076 = vsel %vm494, %v1064, 0.0
        %v1077 = vsel %vm495, %v1065, 0.0
        %v1078 = vsel %vm496, %v1066, 0.0
        %v1079 = vsel %vm497, %v1067, 0.0
        %v1080 = vmul.f32 %v1068, 0.01
        %v1081 = vmul.f32 %v1069, 0.01
        %v1082 = vmul.f32 %v1070, 0.01
        %v1083 = vmul.f32 %v1071, 0.01
        %v1084 = vmul.f32 %v1072, 0.01
        %v1085 = vmul.f32 %v1073, 0.01
        %v1086 = vmul.f32 %v1074, 0.01
        %v1087 = vmul.f32 %v1075, 0.01
        %v1088 = vmul.f32 %v1076, 0.01
        %v1089 = vmul.f32 %v1077, 0.01
        %v1090 = vmul.f32 %v1078, 0.01
        %v1091 = vmul.f32 %v1079, 0.01
        %v1092 = vmax.f32 %v1068, %v1080
        %v1093 = vmax.f32 %v1069, %v1081
        %v1094 = vmax.f32 %v1070, %v1082
        %v1095 = vmax.f32 %v1071, %v1083
        %v1096 = vmax.f32 %v1072, %v1084
        %v1097 = vmax.f32 %v1073, %v1085
        %v1098 = vmax.f32 %v1074, %v1086
        %v1099 = vmax.f32 %v1075, %v1087
        %v1100 = vmax.f32 %v1076, %v1088
        %v1101 = vmax.f32 %v1077, %v1089
        %v1102 = vmax.f32 %v1078, %v1090
        %v1103 = vmax.f32 %v1079, %v1091
        %v1104 = vpack.c.bf16 %v1093, %v1092
        %v1105 = vpack.c.bf16 %v1095, %v1094
        %v1106 = vpack.c.bf16 %v1097, %v1096
        %v1107 = vpack.c.bf16 %v1099, %v1098
        %v1108 = vpack.c.bf16 %v1101, %v1100
        %v1109 = vpack.c.bf16 %v1103, %v1102
        %s1110 = scalar_lea.vmem [#allocation8], 192
        %v1111 = vld [vmem:[%s1110] sm:$0xf]
        %v1112 = vld [vmem:[%s1110 + $0x4] sm:$0xf]
        %v1113 = vld [vmem:[%s1110 + $0x8] sm:$0xf]
        %v1114 = vld [vmem:[%s1110 + $0xc] sm:$0xf]
        %v1115 = vld [vmem:[%s1110 + $0x10] sm:$0xf]
        %v1116 = vld [vmem:[%s1110 + $0x14] sm:$0xf]
        %v1117 = vld [vmem:[%s1110 + $0x18] sm:$0xf]
        %v1118 = vld [vmem:[%s1110 + $0x1c] sm:$0xf]
        %v1119 = vld [vmem:[%s1110 + $0x20] sm:$0xf]
        %v1120 = vld [vmem:[%s1110 + $0x24] sm:$0xf]
        %v1121 = vld [vmem:[%s1110 + $0x28] sm:$0xf]
        %v1122 = vld [vmem:[%s1110 + $0x2c] sm:$0xf]
        %v1123 = vld [vmem:[%s1110 + $0x30] sm:$0xf]
        %v1124 = vld [vmem:[%s1110 + $0x34] sm:$0xf]
        %v1125 = vld [vmem:[%s1110 + $0x38] sm:$0xf]
        %v1126 = vld [vmem:[%s1110 + $0x3c] sm:$0xf]
        %v1127 = vld [vmem:[%s1110 + $0x40] sm:$0xf]
        %v1128 = vld [vmem:[%s1110 + $0x44] sm:$0xf]
        %v1129 = vld [vmem:[%s1110 + $0x48] sm:$0xf]
        %v1130 = vld [vmem:[%s1110 + $0x4c] sm:$0xf]
        %v1131 = vld [vmem:[%s1110 + $0x50] sm:$0xf]
        %v1132 = vld [vmem:[%s1110 + $0x54] sm:$0xf]
        %v1133 = vld [vmem:[%s1110 + $0x58] sm:$0xf]
        %v1134 = vld [vmem:[%s1110 + $0x5c] sm:$0xf]
        %v1135 = vld [vmem:[%s1110 + $0x60] sm:$0xf]
        %v1136 = vld [vmem:[%s1110 + $0x64] sm:$0xf]
        %v1137 = vld [vmem:[%s1110 + $0x68] sm:$0xf]
        %v1138 = vld [vmem:[%s1110 + $0x6c] sm:$0xf]
        %v1139 = vld [vmem:[%s1110 + $0x70] sm:$0xf]
        %v1140 = vld [vmem:[%s1110 + $0x74] sm:$0xf]
        %v1141 = vld [vmem:[%s1110 + $0x78] sm:$0xf]
        %v1142 = vld [vmem:[%s1110 + $0x7c] sm:$0xf]
        %v1143 = vld [vmem:[%s1110 + $0x80] sm:$0xf]
        %v1144 = vld [vmem:[%s1110 + $0x84] sm:$0xf]
        %v1145 = vld [vmem:[%s1110 + $0x88] sm:$0xf]
        %v1146 = vld [vmem:[%s1110 + $0x8c] sm:$0xf]
        %v1147 = vld [vmem:[%s1110 + $0x90] sm:$0xf]
        %v1148 = vld [vmem:[%s1110 + $0x94] sm:$0xf]
        %v1149 = vld [vmem:[%s1110 + $0x98] sm:$0xf]
        %v1150 = vld [vmem:[%s1110 + $0x9c] sm:$0xf]
        %v1151 = vld [vmem:[%s1110 + $0xa0] sm:$0xf]
        %v1152 = vld [vmem:[%s1110 + $0xa4] sm:$0xf]
        %v1153 = vld [vmem:[%s1110 + $0xa8] sm:$0xf]
        %v1154 = vld [vmem:[%s1110 + $0xac] sm:$0xf]
        %v1155 = vld [vmem:[%s1110 + $0xb0] sm:$0xf]
        %v1156 = vld [vmem:[%s1110 + $0xb4] sm:$0xf]
        %v1157 = vld [vmem:[%s1110 + $0xb8] sm:$0xf]
        %v1158 = vld [vmem:[%s1110 + $0xbc] sm:$0xf]
        %v1175 = vunpack.c.l.b16 %v1111
        %v1176 = vunpack.c.l.b16 %v1112
        %v1177 = vunpack.c.l.b16 %v1113
        %v1178 = vunpack.c.l.b16 %v1114
        %v1179 = vunpack.c.l.b16 %v1115
        %v1180 = vunpack.c.l.b16 %v1116
        %v1181 = vunpack.c.l.b16 %v1117
        %v1182 = vunpack.c.l.b16 %v1118
        %v1183 = vunpack.c.l.b16 %v1119
        %v1184 = vunpack.c.l.b16 %v1120
        %v1185 = vunpack.c.l.b16 %v1121
        %v1186 = vunpack.c.l.b16 %v1122
        %v1187 = vunpack.c.l.b16 %v1123
        %v1188 = vunpack.c.l.b16 %v1124
        %v1189 = vunpack.c.l.b16 %v1125
        %v1190 = vunpack.c.l.b16 %v1126
        %v1191 = vpack.c.b16 %v1176, %v1175
        %v1192 = vpack.c.b16 %v1178, %v1177
        %v1193 = vpack.c.b16 %v1180, %v1179
        %v1194 = vpack.c.b16 %v1182, %v1181
        %v1195 = vpack.c.b16 %v1184, %v1183
        %v1196 = vpack.c.b16 %v1186, %v1185
        %v1197 = vpack.c.b16 %v1188, %v1187
        %v1198 = vpack.c.b16 %v1190, %v1189
        %1207 = vmatprep.subr.bf16.mxu0 0
        %1208 = vmatpush1.bf16.msra.mxu0 %v1191
        %1209 = vmatprep.subr.bf16.mxu0 0
        %1210 = vmatpush1.bf16.msra.mxu0 %v1192
        %1211 = vmatprep.subr.bf16.mxu0 0
        %1212 = vmatpush1.bf16.msra.mxu0 %v1193
        %1213 = vmatprep.subr.bf16.mxu0 0
        %1214 = vmatpush1.bf16.msra.mxu0 %v1194
        %1215 = vmatprep.subr.bf16.mxu0 0
        %1216 = vmatpush1.bf16.msra.mxu0 %v1195
        %1217 = vmatprep.subr.bf16.mxu0 0
        %1218 = vmatpush1.bf16.msra.mxu0 %v1196
        %1219 = vmatprep.subr.bf16.mxu0 0
        %1220 = vmatpush1.bf16.msra.mxu0 %v1197
        %1221 = vmatprep.subr.bf16.mxu0 0
        %1222 = vmatpush1.bf16.msra.mxu0 %v1198
        %1223 = vmatprep.subr.bf16.mxu0 0
        %1224 = vmatpush1.bf16.msra.mxu0 0
        %1225 = vmatprep.subr.bf16.mxu0 0
        %1226 = vmatpush1.bf16.msra.mxu0 0
        %1227 = vmatprep.subr.bf16.mxu0 0
        %1228 = vmatpush1.bf16.msra.mxu0 0
        %1229 = vmatprep.subr.bf16.mxu0 0
        %1230 = vmatpush1.bf16.msra.mxu0 0
        %1231 = vmatprep.subr.bf16.mxu0 0
        %1232 = vmatpush1.bf16.msra.mxu0 0
        %1233 = vmatprep.subr.bf16.mxu0 0
        %1234 = vmatpush1.bf16.msra.mxu0 0
        %1235 = vmatprep.subr.bf16.mxu0 0
        %1236 = vmatpush1.bf16.msra.mxu0 0
        %1237 = vmatprep.subr.bf16.mxu0 0
        %1238 = vmatpush1.bf16.msra.mxu0 0
        %1239 = vmatprep.mubr.bf16.mxu0 0
        %1240 = vmatmul.mubr.bf16.gmra.mrb[0].mxu0 %v1104
        %v1241 = vpop.f32.mrb[0].mxu0
        %v1242 = vadd.f32 0.0, %v1241
        %v1243 = vpop.f32.mrb[0].mxu0
        %v1244 = vpop.f32.mrb[0].mxu0
        %v1245 = vadd.f32 0.0, %v1244
        %v1246 = vpop.f32.mrb[0].mxu0
        %1247 = vmatprep.mubr.bf16.mxu0 0
        %1248 = vmatmul.mubr.bf16.gmra.mrb[0].mxu0 %v1105
        %v1249 = vpop.f32.mrb[0].mxu0
        %v1250 = vadd.f32 0.0, %v1249
        %v1251 = vpop.f32.mrb[0].mxu0
        %v1252 = vpop.f32.mrb[0].mxu0
        %v1253 = vadd.f32 0.0, %v1252
        %v1254 = vpop.f32.mrb[0].mxu0
        %1255 = vmatprep.mubr.bf16.mxu0 0
        %1256 = vmatmul.mubr.bf16.gmra.mrb[0].mxu0 %v1106
        %v1257 = vpop.f32.mrb[0].mxu0
        %v1258 = vadd.f32 0.0, %v1257
        %v1259 = vpop.f32.mrb[0].mxu0
        %v1260 = vpop.f32.mrb[0].mxu0
        %v1261 = vadd.f32 0.0, %v1260
        %v1262 = vpop.f32.mrb[0].mxu0
        %1263 = vmatprep.mubr.bf16.mxu0 0
        %1264 = vmatmul.mubr.bf16.gmra.mrb[0].mxu0 %v1107
        %v1265 = vpop.f32.mrb[0].mxu0
        %v1266 = vadd.f32 0.0, %v1265
        %v1267 = vpop.f32.mrb[0].mxu0
        %v1268 = vpop.f32.mrb[0].mxu0
        %v1269 = vadd.f32 0.0, %v1268
        %v1270 = vpop.f32.mrb[0].mxu0
        %1271 = vmatprep.mubr.bf16.mxu0 0
        %1272 = vmatmul.mubr.bf16.gmra.mrb[0].mxu0 %v1108
        %v1273 = vpop.f32.mrb[0].mxu0
        %v1274 = vadd.f32 0.0, %v1273
        %v1275 = vpop.f32.mrb[0].mxu0
        %v1276 = vpop.f32.mrb[0].mxu0
        %v1277 = vadd.f32 0.0, %v1276
        %v1278 = vpop.f32.mrb[0].mxu0
        %1279 = vmatprep.mubr.bf16.mxu0 0
        %1280 = vmatmul.mubr.bf16.gmra.mrb[0].mxu0 %v1109
        %v1281 = vpop.f32.mrb[0].mxu0
        %v1282 = vadd.f32 0.0, %v1281
        %v1283 = vpop.f32.mrb[0].mxu0
        %v1284 = vpop.f32.mrb[0].mxu0
        %v1285 = vadd.f32 0.0, %v1284
        %v1286 = vpop.f32.mrb[0].mxu0
        %1287 = vdwg.mxu0
        %v1288 = vrot.slane %v1242, 7
        %v1289 = vrot.slane %v1245, 7
        %v1290 = vrot.slane %v1250, 7
        %v1291 = vrot.slane %v1253, 7
        %v1292 = vrot.slane %v1258, 7
        %v1293 = vrot.slane %v1261, 7
        %v1294 = vrot.slane %v1266, 7
        %v1295 = vrot.slane %v1269, 7
        %v1296 = vrot.slane %v1274, 7
        %v1297 = vrot.slane %v1277, 7
        %v1298 = vrot.slane %v1282, 7
        %v1299 = vrot.slane %v1285, 7
        %v1300 = vsel %vm729, %v1298, %v1299
        %v1301 = vsel %vm729, %v1297, %v1298
        %v1302 = vsel %vm729, %v1296, %v1297
        %v1303 = vsel %vm729, %v1295, %v1296
        %v1304 = vsel %vm729, %v1294, %v1295
        %v1305 = vsel %vm729, %v1293, %v1294
        %v1306 = vsel %vm729, %v1292, %v1293
        %v1307 = vsel %vm729, %v1291, %v1292
        %v1308 = vsel %vm729, %v1290, %v1291
        %v1309 = vsel %vm729, %v1289, %v1290
        %v1310 = vsel %vm729, %v1288, %v1289
        %v1311 = vsel %vm729, %v1299, %v1288
        %v1328 = vunpack.c.l.b16 %v1127
        %v1329 = vunpack.c.l.b16 %v1128
        %v1330 = vunpack.c.l.b16 %v1129
        %v1331 = vunpack.c.l.b16 %v1130
        %v1332 = vunpack.c.l.b16 %v1131
        %v1333 = vunpack.c.l.b16 %v1132
        %v1334 = vunpack.c.l.b16 %v1133
        %v1335 = vunpack.c.l.b16 %v1134
        %v1336 = vunpack.c.l.b16 %v1135
        %v1337 = vunpack.c.l.b16 %v1136
        %v1338 = vunpack.c.l.b16 %v1137
        %v1339 = vunpack.c.l.b16 %v1138
        %v1340 = vunpack.c.l.b16 %v1139
        %v1341 = vunpack.c.l.b16 %v1140
        %v1342 = vunpack.c.l.b16 %v1141
        %v1343 = vunpack.c.l.b16 %v1142
        %v1344 = vpack.c.b16 %v1329, %v1328
        %v1345 = vpack.c.b16 %v1331, %v1330
        %v1346 = vpack.c.b16 %v1333, %v1332
        %v1347 = vpack.c.b16 %v1335, %v1334
        %v1348 = vpack.c.b16 %v1337, %v1336
        %v1349 = vpack.c.b16 %v1339, %v1338
        %v1350 = vpack.c.b16 %v1341, %v1340
        %v1351 = vpack.c.b16 %v1343, %v1342
        %1360 = vmatprep.subr.bf16.mxu0 0
        %1361 = vmatpush1.bf16.msra.mxu0 %v1344
        %1362 = vmatprep.subr.bf16.mxu0 0
        %1363 = vmatpush1.bf16.msra.mxu0 %v1345
        %1364 = vmatprep.subr.bf16.mxu0 0
        %1365 = vmatpush1.bf16.msra.mxu0 %v1346
        %1366 = vmatprep.subr.bf16.mxu0 0
        %1367 = vmatpush1.bf16.msra.mxu0 %v1347
        %1368 = vmatprep.subr.bf16.mxu0 0
        %1369 = vmatpush1.bf16.msra.mxu0 %v1348
        %1370 = vmatprep.subr.bf16.mxu0 0
        %1371 = vmatpush1.bf16.msra.mxu0 %v1349
        %1372 = vmatprep.subr.bf16.mxu0 0
        %1373 = vmatpush1.bf16.msra.mxu0 %v1350
        %1374 = vmatprep.subr.bf16.mxu0 0
        %1375 = vmatpush1.bf16.msra.mxu0 %v1351
        %1376 = vmatprep.subr.bf16.mxu0 0
        %1377 = vmatpush1.bf16.msra.mxu0 0
        %1378 = vmatprep.subr.bf16.mxu0 0
        %1379 = vmatpush1.bf16.msra.mxu0 0
        %1380 = vmatprep.subr.bf16.mxu0 0
        %1381 = vmatpush1.bf16.msra.mxu0 0
        %1382 = vmatprep.subr.bf16.mxu0 0
        %1383 = vmatpush1.bf16.msra.mxu0 0
        %1384 = vmatprep.subr.bf16.mxu0 0
        %1385 = vmatpush1.bf16.msra.mxu0 0
        %1386 = vmatprep.subr.bf16.mxu0 0
        %1387 = vmatpush1.bf16.msra.mxu0 0
        %1388 = vmatprep.subr.bf16.mxu0 0
        %1389 = vmatpush1.bf16.msra.mxu0 0
        %1390 = vmatprep.subr.bf16.mxu0 0
        %1391 = vmatpush1.bf16.msra.mxu0 0
        %1392 = vmatprep.mubr.bf16.mxu0 0
        %1393 = vmatmul.mubr.bf16.gmra.mrb[0].mxu0 %v1104
        %v1394 = vpop.f32.mrb[0].mxu0
        %v1395 = vadd.f32 0.0, %v1394
        %v1396 = vpop.f32.mrb[0].mxu0
        %v1397 = vpop.f32.mrb[0].mxu0
        %v1398 = vadd.f32 0.0, %v1397
        %v1399 = vpop.f32.mrb[0].mxu0
        %1400 = vmatprep.mubr.bf16.mxu0 0
        %1401 = vmatmul.mubr.bf16.gmra.mrb[0].mxu0 %v1105
        %v1402 = vpop.f32.mrb[0].mxu0
        %v1403 = vadd.f32 0.0, %v1402
        %v1404 = vpop.f32.mrb[0].mxu0
        %v1405 = vpop.f32.mrb[0].mxu0
        %v1406 = vadd.f32 0.0, %v1405
        %v1407 = vpop.f32.mrb[0].mxu0
        %1408 = vmatprep.mubr.bf16.mxu0 0
        %1409 = vmatmul.mubr.bf16.gmra.mrb[0].mxu0 %v1106
        %v1410 = vpop.f32.mrb[0].mxu0
        %v1411 = vadd.f32 0.0, %v1410
        %v1412 = vpop.f32.mrb[0].mxu0
        %v1413 = vpop.f32.mrb[0].mxu0
        %v1414 = vadd.f32 0.0, %v1413
        %v1415 = vpop.f32.mrb[0].mxu0
        %1416 = vmatprep.mubr.bf16.mxu0 0
        %1417 = vmatmul.mubr.bf16.gmra.mrb[0].mxu0 %v1107
        %v1418 = vpop.f32.mrb[0].mxu0
        %v1419 = vadd.f32 0.0, %v1418
        %v1420 = vpop.f32.mrb[0].mxu0
        %v1421 = vpop.f32.mrb[0].mxu0
        %v1422 = vadd.f32 0.0, %v1421
        %v1423 = vpop.f32.mrb[0].mxu0
        %1424 = vmatprep.mubr.bf16.mxu0 0
        %1425 = vmatmul.mubr.bf16.gmra.mrb[0].mxu0 %v1108
        %v1426 = vpop.f32.mrb[0].mxu0
        %v1427 = vadd.f32 0.0, %v1426
        %v1428 = vpop.f32.mrb[0].mxu0
        %v1429 = vpop.f32.mrb[0].mxu0
        %v1430 = vadd.f32 0.0, %v1429
        %v1431 = vpop.f32.mrb[0].mxu0
        %1432 = vmatprep.mubr.bf16.mxu0 0
        %1433 = vmatmul.mubr.bf16.gmra.mrb[0].mxu0 %v1109
        %v1434 = vpop.f32.mrb[0].mxu0
        %v1435 = vadd.f32 0.0, %v1434
        %v1436 = vpop.f32.mrb[0].mxu0
        %v1437 = vpop.f32.mrb[0].mxu0
        %v1438 = vadd.f32 0.0, %v1437
        %v1439 = vpop.f32.mrb[0].mxu0
        %1440 = vdwg.mxu0
        %v1441 = vadd.f32 %v1311, %v1395
        %v1442 = vadd.f32 %v1310, %v1398
        %v1443 = vadd.f32 %v1309, %v1403
        %v1444 = vadd.f32 %v1308, %v1406
        %v1445 = vadd.f32 %v1307, %v1411
        %v1446 = vadd.f32 %v1306, %v1414
        %v1447 = vadd.f32 %v1305, %v1419
        %v1448 = vadd.f32 %v1304, %v1422
        %v1449 = vadd.f32 %v1303, %v1427
        %v1450 = vadd.f32 %v1302, %v1430
        %v1451 = vadd.f32 %v1301, %v1435
        %v1452 = vadd.f32 %v1300, %v1438
        %v1469 = vunpack.c.l.b16 %v1143
        %v1470 = vunpack.c.l.b16 %v1144
        %v1471 = vunpack.c.l.b16 %v1145
        %v1472 = vunpack.c.l.b16 %v1146
        %v1473 = vunpack.c.l.b16 %v1147
        %v1474 = vunpack.c.l.b16 %v1148
        %v1475 = vunpack.c.l.b16 %v1149
        %v1476 = vunpack.c.l.b16 %v1150
        %v1477 = vunpack.c.l.b16 %v1151
        %v1478 = vunpack.c.l.b16 %v1152
        %v1479 = vunpack.c.l.b16 %v1153
        %v1480 = vunpack.c.l.b16 %v1154
        %v1481 = vunpack.c.l.b16 %v1155
        %v1482 = vunpack.c.l.b16 %v1156
        %v1483 = vunpack.c.l.b16 %v1157
        %v1484 = vunpack.c.l.b16 %v1158
        %v1485 = vpack.c.b16 %v1470, %v1469
        %v1486 = vpack.c.b16 %v1472, %v1471
        %v1487 = vpack.c.b16 %v1474, %v1473
        %v1488 = vpack.c.b16 %v1476, %v1475
        %v1489 = vpack.c.b16 %v1478, %v1477
        %v1490 = vpack.c.b16 %v1480, %v1479
        %v1491 = vpack.c.b16 %v1482, %v1481
        %v1492 = vpack.c.b16 %v1484, %v1483
        %1501 = vmatprep.subr.bf16.mxu0 0
        %1502 = vmatpush1.bf16.msra.mxu0 %v1485
        %1503 = vmatprep.subr.bf16.mxu0 0
        %1504 = vmatpush1.bf16.msra.mxu0 %v1486
        %1505 = vmatprep.subr.bf16.mxu0 0
        %1506 = vmatpush1.bf16.msra.mxu0 %v1487
        %1507 = vmatprep.subr.bf16.mxu0 0
        %1508 = vmatpush1.bf16.msra.mxu0 %v1488
        %1509 = vmatprep.subr.bf16.mxu0 0
        %1510 = vmatpush1.bf16.msra.mxu0 %v1489
        %1511 = vmatprep.subr.bf16.mxu0 0
        %1512 = vmatpush1.bf16.msra.mxu0 %v1490
        %1513 = vmatprep.subr.bf16.mxu0 0
        %1514 = vmatpush1.bf16.msra.mxu0 %v1491
        %1515 = vmatprep.subr.bf16.mxu0 0
        %1516 = vmatpush1.bf16.msra.mxu0 %v1492
        %1517 = vmatprep.subr.bf16.mxu0 0
        %1518 = vmatpush1.bf16.msra.mxu0 0
        %1519 = vmatprep.subr.bf16.mxu0 0
        %1520 = vmatpush1.bf16.msra.mxu0 0
        %1521 = vmatprep.subr.bf16.mxu0 0
        %1522 = vmatpush1.bf16.msra.mxu0 0
        %1523 = vmatprep.subr.bf16.mxu0 0
        %1524 = vmatpush1.bf16.msra.mxu0 0
        %1525 = vmatprep.subr.bf16.mxu0 0
        %1526 = vmatpush1.bf16.msra.mxu0 0
        %1527 = vmatprep.subr.bf16.mxu0 0
        %1528 = vmatpush1.bf16.msra.mxu0 0
        %1529 = vmatprep.subr.bf16.mxu0 0
        %1530 = vmatpush1.bf16.msra.mxu0 0
        %1531 = vmatprep.subr.bf16.mxu0 0
        %1532 = vmatpush1.bf16.msra.mxu0 0
        %1533 = vmatprep.mubr.bf16.mxu0 0
        %1534 = vmatmul.mubr.bf16.gmra.mrb[0].mxu0 %v1104
        %v1535 = vpop.f32.mrb[0].mxu0
        %v1536 = vadd.f32 0.0, %v1535
        %v1537 = vpop.f32.mrb[0].mxu0
        %v1538 = vpop.f32.mrb[0].mxu0
        %v1539 = vadd.f32 0.0, %v1538
        %v1540 = vpop.f32.mrb[0].mxu0
        %1541 = vmatprep.mubr.bf16.mxu0 0
        %1542 = vmatmul.mubr.bf16.gmra.mrb[0].mxu0 %v1105
        %v1543 = vpop.f32.mrb[0].mxu0
        %v1544 = vadd.f32 0.0, %v1543
        %v1545 = vpop.f32.mrb[0].mxu0
        %v1546 = vpop.f32.mrb[0].mxu0
        %v1547 = vadd.f32 0.0, %v1546
        %v1548 = vpop.f32.mrb[0].mxu0
        %1549 = vmatprep.mubr.bf16.mxu0 0
        %1550 = vmatmul.mubr.bf16.gmra.mrb[0].mxu0 %v1106
        %v1551 = vpop.f32.mrb[0].mxu0
        %v1552 = vadd.f32 0.0, %v1551
        %v1553 = vpop.f32.mrb[0].mxu0
        %v1554 = vpop.f32.mrb[0].mxu0
        %v1555 = vadd.f32 0.0, %v1554
        %v1556 = vpop.f32.mrb[0].mxu0
        %1557 = vmatprep.mubr.bf16.mxu0 0
        %1558 = vmatmul.mubr.bf16.gmra.mrb[0].mxu0 %v1107
        %v1559 = vpop.f32.mrb[0].mxu0
        %v1560 = vadd.f32 0.0, %v1559
        %v1561 = vpop.f32.mrb[0].mxu0
        %v1562 = vpop.f32.mrb[0].mxu0
        %v1563 = vadd.f32 0.0, %v1562
        %v1564 = vpop.f32.mrb[0].mxu0
        %1565 = vmatprep.mubr.bf16.mxu0 0
        %1566 = vmatmul.mubr.bf16.gmra.mrb[0].mxu0 %v1108
        %v1567 = vpop.f32.mrb[0].mxu0
        %v1568 = vadd.f32 0.0, %v1567
        %v1569 = vpop.f32.mrb[0].mxu0
        %v1570 = vpop.f32.mrb[0].mxu0
        %v1571 = vadd.f32 0.0, %v1570
        %v1572 = vpop.f32.mrb[0].mxu0
        %1573 = vmatprep.mubr.bf16.mxu0 0
        %1574 = vmatmul.mubr.bf16.gmra.mrb[0].mxu0 %v1109
        %v1575 = vpop.f32.mrb[0].mxu0
        %v1576 = vadd.f32 0.0, %v1575
        %v1577 = vpop.f32.mrb[0].mxu0
        %v1578 = vpop.f32.mrb[0].mxu0
        %v1579 = vadd.f32 0.0, %v1578
        %v1580 = vpop.f32.mrb[0].mxu0
        %1581 = vdwg.mxu0
        %v1582 = vrot.slane %v1536, 1
        %v1583 = vrot.slane %v1539, 1
        %v1584 = vrot.slane %v1544, 1
        %v1585 = vrot.slane %v1547, 1
        %v1586 = vrot.slane %v1552, 1
        %v1587 = vrot.slane %v1555, 1
        %v1588 = vrot.slane %v1560, 1
        %v1589 = vrot.slane %v1563, 1
        %v1590 = vrot.slane %v1568, 1
        %v1591 = vrot.slane %v1571, 1
        %v1592 = vrot.slane %v1576, 1
        %v1593 = vrot.slane %v1579, 1
        %v1594 = vsel %vm1024, %v1592, %v1593
        %v1595 = vsel %vm1024, %v1591, %v1592
        %v1596 = vsel %vm1024, %v1590, %v1591
        %v1597 = vsel %vm1024, %v1589, %v1590
        %v1598 = vsel %vm1024, %v1588, %v1589
        %v1599 = vsel %vm1024, %v1587, %v1588
        %v1600 = vsel %vm1024, %v1586, %v1587
        %v1601 = vsel %vm1024, %v1585, %v1586
        %v1602 = vsel %vm1024, %v1584, %v1585
        %v1603 = vsel %vm1024, %v1583, %v1584
        %v1604 = vsel %vm1024, %v1582, %v1583
        %v1605 = vsel %vm1024, %v1593, %v1582
        %v1606 = vadd.f32 %v1441, %v1604
        %v1607 = vadd.f32 %v1442, %v1603
        %v1608 = vadd.f32 %v1443, %v1602
        %v1609 = vadd.f32 %v1444, %v1601
        %v1610 = vadd.f32 %v1445, %v1600
        %v1611 = vadd.f32 %v1446, %v1599
        %v1612 = vadd.f32 %v1447, %v1598
        %v1613 = vadd.f32 %v1448, %v1597
        %v1614 = vadd.f32 %v1449, %v1596
        %v1615 = vadd.f32 %v1450, %v1595
        %v1616 = vadd.f32 %v1451, %v1594
        %v1617 = vadd.f32 %v1452, %v1605
        %s1618 = scalar_lea.vmem %s4, 1
        %v1619 = vld [vmem:[%s1618] sm:$0x1]
        %v1621 = vlaneseq
        %v1622 = vshrl.u32 %v1621, 7
        %v1623 = vsub.s32 0, %v1622
        %v1624 = vrot.slane %v1619, %v1623
        %v1626 = vadd.f32 %v1606, %v1624
        %v1627 = vadd.f32 %v1607, %v1624
        %v1628 = vadd.f32 %v1608, %v1624
        %v1629 = vadd.f32 %v1609, %v1624
        %v1630 = vadd.f32 %v1610, %v1624
        %v1631 = vadd.f32 %v1611, %v1624
        %v1632 = vadd.f32 %v1612, %v1624
        %v1633 = vadd.f32 %v1613, %v1624
        %v1634 = vadd.f32 %v1614, %v1624
        %v1635 = vadd.f32 %v1615, %v1624
        %v1636 = vadd.f32 %v1616, %v1624
        %v1637 = vadd.f32 %v1617, %v1624
        %v1638 = vsel %vm486, %v1626, 0.0
        %v1639 = vsel %vm487, %v1627, 0.0
        %v1640 = vsel %vm488, %v1628, 0.0
        %v1641 = vsel %vm489, %v1629, 0.0
        %v1642 = vsel %vm490, %v1630, 0.0
        %v1643 = vsel %vm491, %v1631, 0.0
        %v1644 = vsel %vm492, %v1632, 0.0
        %v1645 = vsel %vm493, %v1633, 0.0
        %v1646 = vsel %vm494, %v1634, 0.0
        %v1647 = vsel %vm495, %v1635, 0.0
        %v1648 = vsel %vm496, %v1636, 0.0
        %v1649 = vsel %vm497, %v1637, 0.0
        %v1650 = vadd.f32 %v498, %v1638
        %v1651 = vadd.f32 %v499, %v1639
        %v1652 = vadd.f32 %v500, %v1640
        %v1653 = vadd.f32 %v501, %v1641
        %v1654 = vadd.f32 %v502, %v1642
        %v1655 = vadd.f32 %v503, %v1643
        %v1656 = vadd.f32 %v504, %v1644
        %v1657 = vadd.f32 %v505, %v1645
        %v1658 = vadd.f32 %v506, %v1646
        %v1659 = vadd.f32 %v507, %v1647
        %v1660 = vadd.f32 %v508, %v1648
        %v1661 = vadd.f32 %v509, %v1649
        %v1662 = vmul.f32 %v1650, 0.01
        %v1663 = vmul.f32 %v1651, 0.01
        %v1664 = vmul.f32 %v1652, 0.01
        %v1665 = vmul.f32 %v1653, 0.01
        %v1666 = vmul.f32 %v1654, 0.01
        %v1667 = vmul.f32 %v1655, 0.01
        %v1668 = vmul.f32 %v1656, 0.01
        %v1669 = vmul.f32 %v1657, 0.01
        %v1670 = vmul.f32 %v1658, 0.01
        %v1671 = vmul.f32 %v1659, 0.01
        %v1672 = vmul.f32 %v1660, 0.01
        %v1673 = vmul.f32 %v1661, 0.01
        %v1674 = vmax.f32 %v1650, %v1662
        %v1675 = vmax.f32 %v1651, %v1663
        %v1676 = vmax.f32 %v1652, %v1664
        %v1677 = vmax.f32 %v1653, %v1665
        %v1678 = vmax.f32 %v1654, %v1666
        %v1679 = vmax.f32 %v1655, %v1667
        %v1680 = vmax.f32 %v1656, %v1668
        %v1681 = vmax.f32 %v1657, %v1669
        %v1682 = vmax.f32 %v1658, %v1670
        %v1683 = vmax.f32 %v1659, %v1671
        %v1684 = vmax.f32 %v1660, %v1672
        %v1685 = vmax.f32 %v1661, %v1673
        %v1686 = vpack.c.bf16 %v1675, %v1674
        %v1687 = vpack.c.bf16 %v1677, %v1676
        %v1688 = vpack.c.bf16 %v1679, %v1678
        %v1689 = vpack.c.bf16 %v1681, %v1680
        %v1690 = vpack.c.bf16 %v1683, %v1682
        %v1691 = vpack.c.bf16 %v1685, %v1684
        %s1692 = scalar_lea.vmem [#allocation8], 384
        %v1693 = vld [vmem:[%s1692] sm:$0xf]
        %v1694 = vld [vmem:[%s1692 + $0x4] sm:$0xf]
        %v1695 = vld [vmem:[%s1692 + $0x8] sm:$0xf]
        %v1696 = vld [vmem:[%s1692 + $0xc] sm:$0xf]
        %v1697 = vld [vmem:[%s1692 + $0x10] sm:$0xf]
        %v1698 = vld [vmem:[%s1692 + $0x14] sm:$0xf]
        %v1699 = vld [vmem:[%s1692 + $0x18] sm:$0xf]
        %v1700 = vld [vmem:[%s1692 + $0x1c] sm:$0xf]
        %v1701 = vld [vmem:[%s1692 + $0x20] sm:$0xf]
        %v1702 = vld [vmem:[%s1692 + $0x24] sm:$0xf]
        %v1703 = vld [vmem:[%s1692 + $0x28] sm:$0xf]
        %v1704 = vld [vmem:[%s1692 + $0x2c] sm:$0xf]
        %v1705 = vld [vmem:[%s1692 + $0x30] sm:$0xf]
        %v1706 = vld [vmem:[%s1692 + $0x34] sm:$0xf]
        %v1707 = vld [vmem:[%s1692 + $0x38] sm:$0xf]
        %v1708 = vld [vmem:[%s1692 + $0x3c] sm:$0xf]
        %v1709 = vld [vmem:[%s1692 + $0x40] sm:$0xf]
        %v1710 = vld [vmem:[%s1692 + $0x44] sm:$0xf]
        %v1711 = vld [vmem:[%s1692 + $0x48] sm:$0xf]
        %v1712 = vld [vmem:[%s1692 + $0x4c] sm:$0xf]
        %v1713 = vld [vmem:[%s1692 + $0x50] sm:$0xf]
        %v1714 = vld [vmem:[%s1692 + $0x54] sm:$0xf]
        %v1715 = vld [vmem:[%s1692 + $0x58] sm:$0xf]
        %v1716 = vld [vmem:[%s1692 + $0x5c] sm:$0xf]
        %v1717 = vld [vmem:[%s1692 + $0x60] sm:$0xf]
        %v1718 = vld [vmem:[%s1692 + $0x64] sm:$0xf]
        %v1719 = vld [vmem:[%s1692 + $0x68] sm:$0xf]
        %v1720 = vld [vmem:[%s1692 + $0x6c] sm:$0xf]
        %v1721 = vld [vmem:[%s1692 + $0x70] sm:$0xf]
        %v1722 = vld [vmem:[%s1692 + $0x74] sm:$0xf]
        %v1723 = vld [vmem:[%s1692 + $0x78] sm:$0xf]
        %v1724 = vld [vmem:[%s1692 + $0x7c] sm:$0xf]
        %v1725 = vld [vmem:[%s1692 + $0x80] sm:$0xf]
        %v1726 = vld [vmem:[%s1692 + $0x84] sm:$0xf]
        %v1727 = vld [vmem:[%s1692 + $0x88] sm:$0xf]
        %v1728 = vld [vmem:[%s1692 + $0x8c] sm:$0xf]
        %v1729 = vld [vmem:[%s1692 + $0x90] sm:$0xf]
        %v1730 = vld [vmem:[%s1692 + $0x94] sm:$0xf]
        %v1731 = vld [vmem:[%s1692 + $0x98] sm:$0xf]
        %v1732 = vld [vmem:[%s1692 + $0x9c] sm:$0xf]
        %v1733 = vld [vmem:[%s1692 + $0xa0] sm:$0xf]
        %v1734 = vld [vmem:[%s1692 + $0xa4] sm:$0xf]
        %v1735 = vld [vmem:[%s1692 + $0xa8] sm:$0xf]
        %v1736 = vld [vmem:[%s1692 + $0xac] sm:$0xf]
        %v1737 = vld [vmem:[%s1692 + $0xb0] sm:$0xf]
        %v1738 = vld [vmem:[%s1692 + $0xb4] sm:$0xf]
        %v1739 = vld [vmem:[%s1692 + $0xb8] sm:$0xf]
        %v1740 = vld [vmem:[%s1692 + $0xbc] sm:$0xf]
        %v1757 = vunpack.c.l.b16 %v1693
        %v1758 = vunpack.c.l.b16 %v1694
        %v1759 = vunpack.c.l.b16 %v1695
        %v1760 = vunpack.c.l.b16 %v1696
        %v1761 = vunpack.c.l.b16 %v1697
        %v1762 = vunpack.c.l.b16 %v1698
        %v1763 = vunpack.c.l.b16 %v1699
        %v1764 = vunpack.c.l.b16 %v1700
        %v1765 = vunpack.c.l.b16 %v1701
        %v1766 = vunpack.c.l.b16 %v1702
        %v1767 = vunpack.c.l.b16 %v1703
        %v1768 = vunpack.c.l.b16 %v1704
        %v1769 = vunpack.c.l.b16 %v1705
        %v1770 = vunpack.c.l.b16 %v1706
        %v1771 = vunpack.c.l.b16 %v1707
        %v1772 = vunpack.c.l.b16 %v1708
        %v1773 = vpack.c.b16 %v1758, %v1757
        %v1774 = vpack.c.b16 %v1760, %v1759
        %v1775 = vpack.c.b16 %v1762, %v1761
        %v1776 = vpack.c.b16 %v1764, %v1763
        %v1777 = vpack.c.b16 %v1766, %v1765
        %v1778 = vpack.c.b16 %v1768, %v1767
        %v1779 = vpack.c.b16 %v1770, %v1769
        %v1780 = vpack.c.b16 %v1772, %v1771
        %1789 = vmatprep.subr.bf16.mxu0 0
        %1790 = vmatpush1.bf16.msra.mxu0 %v1773
        %1791 = vmatprep.subr.bf16.mxu0 0
        %1792 = vmatpush1.bf16.msra.mxu0 %v1774
        %1793 = vmatprep.subr.bf16.mxu0 0
        %1794 = vmatpush1.bf16.msra.mxu0 %v1775
        %1795 = vmatprep.subr.bf16.mxu0 0
        %1796 = vmatpush1.bf16.msra.mxu0 %v1776
        %1797 = vmatprep.subr.bf16.mxu0 0
        %1798 = vmatpush1.bf16.msra.mxu0 %v1777
        %1799 = vmatprep.subr.bf16.mxu0 0
        %1800 = vmatpush1.bf16.msra.mxu0 %v1778
        %1801 = vmatprep.subr.bf16.mxu0 0
        %1802 = vmatpush1.bf16.msra.mxu0 %v1779
        %1803 = vmatprep.subr.bf16.mxu0 0
        %1804 = vmatpush1.bf16.msra.mxu0 %v1780
        %1805 = vmatprep.subr.bf16.mxu0 0
        %1806 = vmatpush1.bf16.msra.mxu0 0
        %1807 = vmatprep.subr.bf16.mxu0 0
        %1808 = vmatpush1.bf16.msra.mxu0 0
        %1809 = vmatprep.subr.bf16.mxu0 0
        %1810 = vmatpush1.bf16.msra.mxu0 0
        %1811 = vmatprep.subr.bf16.mxu0 0
        %1812 = vmatpush1.bf16.msra.mxu0 0
        %1813 = vmatprep.subr.bf16.mxu0 0
        %1814 = vmatpush1.bf16.msra.mxu0 0
        %1815 = vmatprep.subr.bf16.mxu0 0
        %1816 = vmatpush1.bf16.msra.mxu0 0
        %1817 = vmatprep.subr.bf16.mxu0 0
        %1818 = vmatpush1.bf16.msra.mxu0 0
        %1819 = vmatprep.subr.bf16.mxu0 0
        %1820 = vmatpush1.bf16.msra.mxu0 0
        %1821 = vmatprep.mubr.bf16.mxu0 0
        %1822 = vmatmul.mubr.bf16.gmra.mrb[0].mxu0 %v1686
        %v1823 = vpop.f32.mrb[0].mxu0
        %v1824 = vadd.f32 0.0, %v1823
        %v1825 = vpop.f32.mrb[0].mxu0
        %v1826 = vpop.f32.mrb[0].mxu0
        %v1827 = vadd.f32 0.0, %v1826
        %v1828 = vpop.f32.mrb[0].mxu0
        %1829 = vmatprep.mubr.bf16.mxu0 0
        %1830 = vmatmul.mubr.bf16.gmra.mrb[0].mxu0 %v1687
        %v1831 = vpop.f32.mrb[0].mxu0
        %v1832 = vadd.f32 0.0, %v1831
        %v1833 = vpop.f32.mrb[0].mxu0
        %v1834 = vpop.f32.mrb[0].mxu0
        %v1835 = vadd.f32 0.0, %v1834
        %v1836 = vpop.f32.mrb[0].mxu0
        %1837 = vmatprep.mubr.bf16.mxu0 0
        %1838 = vmatmul.mubr.bf16.gmra.mrb[0].mxu0 %v1688
        %v1839 = vpop.f32.mrb[0].mxu0
        %v1840 = vadd.f32 0.0, %v1839
        %v1841 = vpop.f32.mrb[0].mxu0
        %v1842 = vpop.f32.mrb[0].mxu0
        %v1843 = vadd.f32 0.0, %v1842
        %v1844 = vpop.f32.mrb[0].mxu0
        %1845 = vmatprep.mubr.bf16.mxu0 0
        %1846 = vmatmul.mubr.bf16.gmra.mrb[0].mxu0 %v1689
        %v1847 = vpop.f32.mrb[0].mxu0
        %v1848 = vadd.f32 0.0, %v1847
        %v1849 = vpop.f32.mrb[0].mxu0
        %v1850 = vpop.f32.mrb[0].mxu0
        %v1851 = vadd.f32 0.0, %v1850
        %v1852 = vpop.f32.mrb[0].mxu0
        %1853 = vmatprep.mubr.bf16.mxu0 0
        %1854 = vmatmul.mubr.bf16.gmra.mrb[0].mxu0 %v1690
        %v1855 = vpop.f32.mrb[0].mxu0
        %v1856 = vadd.f32 0.0, %v1855
        %v1857 = vpop.f32.mrb[0].mxu0
        %v1858 = vpop.f32.mrb[0].mxu0
        %v1859 = vadd.f32 0.0, %v1858
        %v1860 = vpop.f32.mrb[0].mxu0
        %1861 = vmatprep.mubr.bf16.mxu0 0
        %1862 = vmatmul.mubr.bf16.gmra.mrb[0].mxu0 %v1691
        %v1863 = vpop.f32.mrb[0].mxu0
        %v1864 = vadd.f32 0.0, %v1863
        %v1865 = vpop.f32.mrb[0].mxu0
        %v1866 = vpop.f32.mrb[0].mxu0
        %v1867 = vadd.f32 0.0, %v1866
        %v1868 = vpop.f32.mrb[0].mxu0
        %1869 = vdwg.mxu0
        %v1870 = vrot.slane %v1824, 5
        %v1871 = vrot.slane %v1827, 5
        %v1872 = vrot.slane %v1832, 5
        %v1873 = vrot.slane %v1835, 5
        %v1874 = vrot.slane %v1840, 5
        %v1875 = vrot.slane %v1843, 5
        %v1876 = vrot.slane %v1848, 5
        %v1877 = vrot.slane %v1851, 5
        %v1878 = vrot.slane %v1856, 5
        %v1879 = vrot.slane %v1859, 5
        %v1880 = vrot.slane %v1864, 5
        %v1881 = vrot.slane %v1867, 5
        %vm1882 = vcmp.lt.s32.totalorder %v399, 3
        %v1883 = vsel %vm1882, %v1880, %v1881
        %v1884 = vsel %vm1882, %v1879, %v1880
        %v1885 = vsel %vm1882, %v1878, %v1879
        %v1886 = vsel %vm1882, %v1877, %v1878
        %v1887 = vsel %vm1882, %v1876, %v1877
        %v1888 = vsel %vm1882, %v1875, %v1876
        %v1889 = vsel %vm1882, %v1874, %v1875
        %v1890 = vsel %vm1882, %v1873, %v1874
        %v1891 = vsel %vm1882, %v1872, %v1873
        %v1892 = vsel %vm1882, %v1871, %v1872
        %v1893 = vsel %vm1882, %v1870, %v1871
        %v1894 = vsel %vm1882, %v1881, %v1870
        %v1911 = vunpack.c.l.b16 %v1709
        %v1912 = vunpack.c.l.b16 %v1710
        %v1913 = vunpack.c.l.b16 %v1711
        %v1914 = vunpack.c.l.b16 %v1712
        %v1915 = vunpack.c.l.b16 %v1713
        %v1916 = vunpack.c.l.b16 %v1714
        %v1917 = vunpack.c.l.b16 %v1715
        %v1918 = vunpack.c.l.b16 %v1716
        %v1919 = vunpack.c.l.b16 %v1717
        %v1920 = vunpack.c.l.b16 %v1718
        %v1921 = vunpack.c.l.b16 %v1719
        %v1922 = vunpack.c.l.b16 %v1720
        %v1923 = vunpack.c.l.b16 %v1721
        %v1924 = vunpack.c.l.b16 %v1722
        %v1925 = vunpack.c.l.b16 %v1723
        %v1926 = vunpack.c.l.b16 %v1724
        %v1927 = vpack.c.b16 %v1912, %v1911
        %v1928 = vpack.c.b16 %v1914, %v1913
        %v1929 = vpack.c.b16 %v1916, %v1915
        %v1930 = vpack.c.b16 %v1918, %v1917
        %v1931 = vpack.c.b16 %v1920, %v1919
        %v1932 = vpack.c.b16 %v1922, %v1921
        %v1933 = vpack.c.b16 %v1924, %v1923
        %v1934 = vpack.c.b16 %v1926, %v1925
        %1943 = vmatprep.subr.bf16.mxu0 0
        %1944 = vmatpush1.bf16.msra.mxu0 %v1927
        %1945 = vmatprep.subr.bf16.mxu0 0
        %1946 = vmatpush1.bf16.msra.mxu0 %v1928
        %1947 = vmatprep.subr.bf16.mxu0 0
        %1948 = vmatpush1.bf16.msra.mxu0 %v1929
        %1949 = vmatprep.subr.bf16.mxu0 0
        %1950 = vmatpush1.bf16.msra.mxu0 %v1930
        %1951 = vmatprep.subr.bf16.mxu0 0
        %1952 = vmatpush1.bf16.msra.mxu0 %v1931
        %1953 = vmatprep.subr.bf16.mxu0 0
        %1954 = vmatpush1.bf16.msra.mxu0 %v1932
        %1955 = vmatprep.subr.bf16.mxu0 0
        %1956 = vmatpush1.bf16.msra.mxu0 %v1933
        %1957 = vmatprep.subr.bf16.mxu0 0
        %1958 = vmatpush1.bf16.msra.mxu0 %v1934
        %1959 = vmatprep.subr.bf16.mxu0 0
        %1960 = vmatpush1.bf16.msra.mxu0 0
        %1961 = vmatprep.subr.bf16.mxu0 0
        %1962 = vmatpush1.bf16.msra.mxu0 0
        %1963 = vmatprep.subr.bf16.mxu0 0
        %1964 = vmatpush1.bf16.msra.mxu0 0
        %1965 = vmatprep.subr.bf16.mxu0 0
        %1966 = vmatpush1.bf16.msra.mxu0 0
        %1967 = vmatprep.subr.bf16.mxu0 0
        %1968 = vmatpush1.bf16.msra.mxu0 0
        %1969 = vmatprep.subr.bf16.mxu0 0
        %1970 = vmatpush1.bf16.msra.mxu0 0
        %1971 = vmatprep.subr.bf16.mxu0 0
        %1972 = vmatpush1.bf16.msra.mxu0 0
        %1973 = vmatprep.subr.bf16.mxu0 0
        %1974 = vmatpush1.bf16.msra.mxu0 0
        %1975 = vmatprep.mubr.bf16.mxu0 0
        %1976 = vmatmul.mubr.bf16.gmra.mrb[0].mxu0 %v1686
        %v1977 = vpop.f32.mrb[0].mxu0
        %v1978 = vadd.f32 0.0, %v1977
        %v1979 = vpop.f32.mrb[0].mxu0
        %v1980 = vpop.f32.mrb[0].mxu0
        %v1981 = vadd.f32 0.0, %v1980
        %v1982 = vpop.f32.mrb[0].mxu0
        %1983 = vmatprep.mubr.bf16.mxu0 0
        %1984 = vmatmul.mubr.bf16.gmra.mrb[0].mxu0 %v1687
        %v1985 = vpop.f32.mrb[0].mxu0
        %v1986 = vadd.f32 0.0, %v1985
        %v1987 = vpop.f32.mrb[0].mxu0
        %v1988 = vpop.f32.mrb[0].mxu0
        %v1989 = vadd.f32 0.0, %v1988
        %v1990 = vpop.f32.mrb[0].mxu0
        %1991 = vmatprep.mubr.bf16.mxu0 0
        %1992 = vmatmul.mubr.bf16.gmra.mrb[0].mxu0 %v1688
        %v1993 = vpop.f32.mrb[0].mxu0
        %v1994 = vadd.f32 0.0, %v1993
        %v1995 = vpop.f32.mrb[0].mxu0
        %v1996 = vpop.f32.mrb[0].mxu0
        %v1997 = vadd.f32 0.0, %v1996
        %v1998 = vpop.f32.mrb[0].mxu0
        %1999 = vmatprep.mubr.bf16.mxu0 0
        %2000 = vmatmul.mubr.bf16.gmra.mrb[0].mxu0 %v1689
        %v2001 = vpop.f32.mrb[0].mxu0
        %v2002 = vadd.f32 0.0, %v2001
        %v2003 = vpop.f32.mrb[0].mxu0
        %v2004 = vpop.f32.mrb[0].mxu0
        %v2005 = vadd.f32 0.0, %v2004
        %v2006 = vpop.f32.mrb[0].mxu0
        %2007 = vmatprep.mubr.bf16.mxu0 0
        %2008 = vmatmul.mubr.bf16.gmra.mrb[0].mxu0 %v1690
        %v2009 = vpop.f32.mrb[0].mxu0
        %v2010 = vadd.f32 0.0, %v2009
        %v2011 = vpop.f32.mrb[0].mxu0
        %v2012 = vpop.f32.mrb[0].mxu0
        %v2013 = vadd.f32 0.0, %v2012
        %v2014 = vpop.f32.mrb[0].mxu0
        %2015 = vmatprep.mubr.bf16.mxu0 0
        %2016 = vmatmul.mubr.bf16.gmra.mrb[0].mxu0 %v1691
        %v2017 = vpop.f32.mrb[0].mxu0
        %v2018 = vadd.f32 0.0, %v2017
        %v2019 = vpop.f32.mrb[0].mxu0
        %v2020 = vpop.f32.mrb[0].mxu0
        %v2021 = vadd.f32 0.0, %v2020
        %v2022 = vpop.f32.mrb[0].mxu0
        %2023 = vdwg.mxu0
        %v2024 = vadd.f32 %v1894, %v1978
        %v2025 = vadd.f32 %v1893, %v1981
        %v2026 = vadd.f32 %v1892, %v1986
        %v2027 = vadd.f32 %v1891, %v1989
        %v2028 = vadd.f32 %v1890, %v1994
        %v2029 = vadd.f32 %v1889, %v1997
        %v2030 = vadd.f32 %v1888, %v2002
        %v2031 = vadd.f32 %v1887, %v2005
        %v2032 = vadd.f32 %v1886, %v2010
        %v2033 = vadd.f32 %v1885, %v2013
        %v2034 = vadd.f32 %v1884, %v2018
        %v2035 = vadd.f32 %v1883, %v2021
        %v2052 = vunpack.c.l.b16 %v1725
        %v2053 = vunpack.c.l.b16 %v1726
        %v2054 = vunpack.c.l.b16 %v1727
        %v2055 = vunpack.c.l.b16 %v1728
        %v2056 = vunpack.c.l.b16 %v1729
        %v2057 = vunpack.c.l.b16 %v1730
        %v2058 = vunpack.c.l.b16 %v1731
        %v2059 = vunpack.c.l.b16 %v1732
        %v2060 = vunpack.c.l.b16 %v1733
        %v2061 = vunpack.c.l.b16 %v1734
        %v2062 = vunpack.c.l.b16 %v1735
        %v2063 = vunpack.c.l.b16 %v1736
        %v2064 = vunpack.c.l.b16 %v1737
        %v2065 = vunpack.c.l.b16 %v1738
        %v2066 = vunpack.c.l.b16 %v1739
        %v2067 = vunpack.c.l.b16 %v1740
        %v2068 = vpack.c.b16 %v2053, %v2052
        %v2069 = vpack.c.b16 %v2055, %v2054
        %v2070 = vpack.c.b16 %v2057, %v2056
        %v2071 = vpack.c.b16 %v2059, %v2058
        %v2072 = vpack.c.b16 %v2061, %v2060
        %v2073 = vpack.c.b16 %v2063, %v2062
        %v2074 = vpack.c.b16 %v2065, %v2064
        %v2075 = vpack.c.b16 %v2067, %v2066
        %2084 = vmatprep.subr.bf16.mxu0 0
        %2085 = vmatpush1.bf16.msra.mxu0 %v2068
        %2086 = vmatprep.subr.bf16.mxu0 0
        %2087 = vmatpush1.bf16.msra.mxu0 %v2069
        %2088 = vmatprep.subr.bf16.mxu0 0
        %2089 = vmatpush1.bf16.msra.mxu0 %v2070
        %2090 = vmatprep.subr.bf16.mxu0 0
        %2091 = vmatpush1.bf16.msra.mxu0 %v2071
        %2092 = vmatprep.subr.bf16.mxu0 0
        %2093 = vmatpush1.bf16.msra.mxu0 %v2072
        %2094 = vmatprep.subr.bf16.mxu0 0
        %2095 = vmatpush1.bf16.msra.mxu0 %v2073
        %2096 = vmatprep.subr.bf16.mxu0 0
        %2097 = vmatpush1.bf16.msra.mxu0 %v2074
        %2098 = vmatprep.subr.bf16.mxu0 0
        %2099 = vmatpush1.bf16.msra.mxu0 %v2075
        %2100 = vmatprep.subr.bf16.mxu0 0
        %2101 = vmatpush1.bf16.msra.mxu0 0
        %2102 = vmatprep.subr.bf16.mxu0 0
        %2103 = vmatpush1.bf16.msra.mxu0 0
        %2104 = vmatprep.subr.bf16.mxu0 0
        %2105 = vmatpush1.bf16.msra.mxu0 0
        %2106 = vmatprep.subr.bf16.mxu0 0
        %2107 = vmatpush1.bf16.msra.mxu0 0
        %2108 = vmatprep.subr.bf16.mxu0 0
        %2109 = vmatpush1.bf16.msra.mxu0 0
        %2110 = vmatprep.subr.bf16.mxu0 0
        %2111 = vmatpush1.bf16.msra.mxu0 0
        %2112 = vmatprep.subr.bf16.mxu0 0
        %2113 = vmatpush1.bf16.msra.mxu0 0
        %2114 = vmatprep.subr.bf16.mxu0 0
        %2115 = vmatpush1.bf16.msra.mxu0 0
        %2116 = vmatprep.mubr.bf16.mxu0 0
        %2117 = vmatmul.mubr.bf16.gmra.mrb[0].mxu0 %v1686
        %v2118 = vpop.f32.mrb[0].mxu0
        %v2119 = vadd.f32 0.0, %v2118
        %v2120 = vpop.f32.mrb[0].mxu0
        %v2121 = vpop.f32.mrb[0].mxu0
        %v2122 = vadd.f32 0.0, %v2121
        %v2123 = vpop.f32.mrb[0].mxu0
        %2124 = vmatprep.mubr.bf16.mxu0 0
        %2125 = vmatmul.mubr.bf16.gmra.mrb[0].mxu0 %v1687
        %v2126 = vpop.f32.mrb[0].mxu0
        %v2127 = vadd.f32 0.0, %v2126
        %v2128 = vpop.f32.mrb[0].mxu0
        %v2129 = vpop.f32.mrb[0].mxu0
        %v2130 = vadd.f32 0.0, %v2129
        %v2131 = vpop.f32.mrb[0].mxu0
        %2132 = vmatprep.mubr.bf16.mxu0 0
        %2133 = vmatmul.mubr.bf16.gmra.mrb[0].mxu0 %v1688
        %v2134 = vpop.f32.mrb[0].mxu0
        %v2135 = vadd.f32 0.0, %v2134
        %v2136 = vpop.f32.mrb[0].mxu0
        %v2137 = vpop.f32.mrb[0].mxu0
        %v2138 = vadd.f32 0.0, %v2137
        %v2139 = vpop.f32.mrb[0].mxu0
        %2140 = vmatprep.mubr.bf16.mxu0 0
        %2141 = vmatmul.mubr.bf16.gmra.mrb[0].mxu0 %v1689
        %v2142 = vpop.f32.mrb[0].mxu0
        %v2143 = vadd.f32 0.0, %v2142
        %v2144 = vpop.f32.mrb[0].mxu0
        %v2145 = vpop.f32.mrb[0].mxu0
        %v2146 = vadd.f32 0.0, %v2145
        %v2147 = vpop.f32.mrb[0].mxu0
        %2148 = vmatprep.mubr.bf16.mxu0 0
        %2149 = vmatmul.mubr.bf16.gmra.mrb[0].mxu0 %v1690
        %v2150 = vpop.f32.mrb[0].mxu0
        %v2151 = vadd.f32 0.0, %v2150
        %v2152 = vpop.f32.mrb[0].mxu0
        %v2153 = vpop.f32.mrb[0].mxu0
        %v2154 = vadd.f32 0.0, %v2153
        %v2155 = vpop.f32.mrb[0].mxu0
        %2156 = vmatprep.mubr.bf16.mxu0 0
        %2157 = vmatmul.mubr.bf16.gmra.mrb[0].mxu0 %v1691
        %v2158 = vpop.f32.mrb[0].mxu0
        %v2159 = vadd.f32 0.0, %v2158
        %v2160 = vpop.f32.mrb[0].mxu0
        %v2161 = vpop.f32.mrb[0].mxu0
        %v2162 = vadd.f32 0.0, %v2161
        %v2163 = vpop.f32.mrb[0].mxu0
        %2164 = vdwg.mxu0
        %v2165 = vrot.slane %v2119, 3
        %v2166 = vrot.slane %v2122, 3
        %v2167 = vrot.slane %v2127, 3
        %v2168 = vrot.slane %v2130, 3
        %v2169 = vrot.slane %v2135, 3
        %v2170 = vrot.slane %v2138, 3
        %v2171 = vrot.slane %v2143, 3
        %v2172 = vrot.slane %v2146, 3
        %v2173 = vrot.slane %v2151, 3
        %v2174 = vrot.slane %v2154, 3
        %v2175 = vrot.slane %v2159, 3
        %v2176 = vrot.slane %v2162, 3
        %vm2177 = vcmp.lt.s32.totalorder %v399, 5
        %v2178 = vsel %vm2177, %v2175, %v2176
        %v2179 = vsel %vm2177, %v2174, %v2175
        %v2180 = vsel %vm2177, %v2173, %v2174
        %v2181 = vsel %vm2177, %v2172, %v2173
        %v2182 = vsel %vm2177, %v2171, %v2172
        %v2183 = vsel %vm2177, %v2170, %v2171
        %v2184 = vsel %vm2177, %v2169, %v2170
        %v2185 = vsel %vm2177, %v2168, %v2169
        %v2186 = vsel %vm2177, %v2167, %v2168
        %v2187 = vsel %vm2177, %v2166, %v2167
        %v2188 = vsel %vm2177, %v2165, %v2166
        %v2189 = vsel %vm2177, %v2176, %v2165
        %v2190 = vadd.f32 %v2024, %v2188
        %v2191 = vadd.f32 %v2025, %v2187
        %v2192 = vadd.f32 %v2026, %v2186
        %v2193 = vadd.f32 %v2027, %v2185
        %v2194 = vadd.f32 %v2028, %v2184
        %v2195 = vadd.f32 %v2029, %v2183
        %v2196 = vadd.f32 %v2030, %v2182
        %v2197 = vadd.f32 %v2031, %v2181
        %v2198 = vadd.f32 %v2032, %v2180
        %v2199 = vadd.f32 %v2033, %v2179
        %v2200 = vadd.f32 %v2034, %v2178
        %v2201 = vadd.f32 %v2035, %v2189
        %s2202 = scalar_lea.vmem %s4, 2
        %v2203 = vld [vmem:[%s2202] sm:$0x1]
        %v2205 = vlaneseq
        %v2206 = vshrl.u32 %v2205, 7
        %v2207 = vsub.s32 0, %v2206
        %v2208 = vrot.slane %v2203, %v2207
        %v2210 = vadd.f32 %v2190, %v2208
        %v2211 = vadd.f32 %v2191, %v2208
        %v2212 = vadd.f32 %v2192, %v2208
        %v2213 = vadd.f32 %v2193, %v2208
        %v2214 = vadd.f32 %v2194, %v2208
        %v2215 = vadd.f32 %v2195, %v2208
        %v2216 = vadd.f32 %v2196, %v2208
        %v2217 = vadd.f32 %v2197, %v2208
        %v2218 = vadd.f32 %v2198, %v2208
        %v2219 = vadd.f32 %v2199, %v2208
        %v2220 = vadd.f32 %v2200, %v2208
        %v2221 = vadd.f32 %v2201, %v2208
        %v2222 = vsel %vm486, %v2210, 0.0
        %v2223 = vsel %vm487, %v2211, 0.0
        %v2224 = vsel %vm488, %v2212, 0.0
        %v2225 = vsel %vm489, %v2213, 0.0
        %v2226 = vsel %vm490, %v2214, 0.0
        %v2227 = vsel %vm491, %v2215, 0.0
        %v2228 = vsel %vm492, %v2216, 0.0
        %v2229 = vsel %vm493, %v2217, 0.0
        %v2230 = vsel %vm494, %v2218, 0.0
        %v2231 = vsel %vm495, %v2219, 0.0
        %v2232 = vsel %vm496, %v2220, 0.0
        %v2233 = vsel %vm497, %v2221, 0.0
        %v2234 = vmul.f32 %v2222, 0.01
        %v2235 = vmul.f32 %v2223, 0.01
        %v2236 = vmul.f32 %v2224, 0.01
        %v2237 = vmul.f32 %v2225, 0.01
        %v2238 = vmul.f32 %v2226, 0.01
        %v2239 = vmul.f32 %v2227, 0.01
        %v2240 = vmul.f32 %v2228, 0.01
        %v2241 = vmul.f32 %v2229, 0.01
        %v2242 = vmul.f32 %v2230, 0.01
        %v2243 = vmul.f32 %v2231, 0.01
        %v2244 = vmul.f32 %v2232, 0.01
        %v2245 = vmul.f32 %v2233, 0.01
        %v2246 = vmax.f32 %v2222, %v2234
        %v2247 = vmax.f32 %v2223, %v2235
        %v2248 = vmax.f32 %v2224, %v2236
        %v2249 = vmax.f32 %v2225, %v2237
        %v2250 = vmax.f32 %v2226, %v2238
        %v2251 = vmax.f32 %v2227, %v2239
        %v2252 = vmax.f32 %v2228, %v2240
        %v2253 = vmax.f32 %v2229, %v2241
        %v2254 = vmax.f32 %v2230, %v2242
        %v2255 = vmax.f32 %v2231, %v2243
        %v2256 = vmax.f32 %v2232, %v2244
        %v2257 = vmax.f32 %v2233, %v2245
        %v2258 = vpack.c.bf16 %v2247, %v2246
        %v2259 = vpack.c.bf16 %v2249, %v2248
        %v2260 = vpack.c.bf16 %v2251, %v2250
        %v2261 = vpack.c.bf16 %v2253, %v2252
        %v2262 = vpack.c.bf16 %v2255, %v2254
        %v2263 = vpack.c.bf16 %v2257, %v2256
        %s2264 = scalar_lea.vmem [#allocation8], 576
        %v2265 = vld [vmem:[%s2264] sm:$0xf]
        %v2266 = vld [vmem:[%s2264 + $0x4] sm:$0xf]
        %v2267 = vld [vmem:[%s2264 + $0x8] sm:$0xf]
        %v2268 = vld [vmem:[%s2264 + $0xc] sm:$0xf]
        %v2269 = vld [vmem:[%s2264 + $0x10] sm:$0xf]
        %v2270 = vld [vmem:[%s2264 + $0x14] sm:$0xf]
        %v2271 = vld [vmem:[%s2264 + $0x18] sm:$0xf]
        %v2272 = vld [vmem:[%s2264 + $0x1c] sm:$0xf]
        %v2273 = vld [vmem:[%s2264 + $0x20] sm:$0xf]
        %v2274 = vld [vmem:[%s2264 + $0x24] sm:$0xf]
        %v2275 = vld [vmem:[%s2264 + $0x28] sm:$0xf]
        %v2276 = vld [vmem:[%s2264 + $0x2c] sm:$0xf]
        %v2277 = vld [vmem:[%s2264 + $0x30] sm:$0xf]
        %v2278 = vld [vmem:[%s2264 + $0x34] sm:$0xf]
        %v2279 = vld [vmem:[%s2264 + $0x38] sm:$0xf]
        %v2280 = vld [vmem:[%s2264 + $0x3c] sm:$0xf]
        %v2281 = vld [vmem:[%s2264 + $0x40] sm:$0xf]
        %v2282 = vld [vmem:[%s2264 + $0x44] sm:$0xf]
        %v2283 = vld [vmem:[%s2264 + $0x48] sm:$0xf]
        %v2284 = vld [vmem:[%s2264 + $0x4c] sm:$0xf]
        %v2285 = vld [vmem:[%s2264 + $0x50] sm:$0xf]
        %v2286 = vld [vmem:[%s2264 + $0x54] sm:$0xf]
        %v2287 = vld [vmem:[%s2264 + $0x58] sm:$0xf]
        %v2288 = vld [vmem:[%s2264 + $0x5c] sm:$0xf]
        %v2289 = vld [vmem:[%s2264 + $0x60] sm:$0xf]
        %v2290 = vld [vmem:[%s2264 + $0x64] sm:$0xf]
        %v2291 = vld [vmem:[%s2264 + $0x68] sm:$0xf]
        %v2292 = vld [vmem:[%s2264 + $0x6c] sm:$0xf]
        %v2293 = vld [vmem:[%s2264 + $0x70] sm:$0xf]
        %v2294 = vld [vmem:[%s2264 + $0x74] sm:$0xf]
        %v2295 = vld [vmem:[%s2264 + $0x78] sm:$0xf]
        %v2296 = vld [vmem:[%s2264 + $0x7c] sm:$0xf]
        %v2297 = vld [vmem:[%s2264 + $0x80] sm:$0xf]
        %v2298 = vld [vmem:[%s2264 + $0x84] sm:$0xf]
        %v2299 = vld [vmem:[%s2264 + $0x88] sm:$0xf]
        %v2300 = vld [vmem:[%s2264 + $0x8c] sm:$0xf]
        %v2301 = vld [vmem:[%s2264 + $0x90] sm:$0xf]
        %v2302 = vld [vmem:[%s2264 + $0x94] sm:$0xf]
        %v2303 = vld [vmem:[%s2264 + $0x98] sm:$0xf]
        %v2304 = vld [vmem:[%s2264 + $0x9c] sm:$0xf]
        %v2305 = vld [vmem:[%s2264 + $0xa0] sm:$0xf]
        %v2306 = vld [vmem:[%s2264 + $0xa4] sm:$0xf]
        %v2307 = vld [vmem:[%s2264 + $0xa8] sm:$0xf]
        %v2308 = vld [vmem:[%s2264 + $0xac] sm:$0xf]
        %v2309 = vld [vmem:[%s2264 + $0xb0] sm:$0xf]
        %v2310 = vld [vmem:[%s2264 + $0xb4] sm:$0xf]
        %v2311 = vld [vmem:[%s2264 + $0xb8] sm:$0xf]
        %v2312 = vld [vmem:[%s2264 + $0xbc] sm:$0xf]
        %v2329 = vunpack.c.l.b16 %v2265
        %v2330 = vunpack.c.l.b16 %v2266
        %v2331 = vunpack.c.l.b16 %v2267
        %v2332 = vunpack.c.l.b16 %v2268
        %v2333 = vunpack.c.l.b16 %v2269
        %v2334 = vunpack.c.l.b16 %v2270
        %v2335 = vunpack.c.l.b16 %v2271
        %v2336 = vunpack.c.l.b16 %v2272
        %v2337 = vunpack.c.l.b16 %v2273
        %v2338 = vunpack.c.l.b16 %v2274
        %v2339 = vunpack.c.l.b16 %v2275
        %v2340 = vunpack.c.l.b16 %v2276
        %v2341 = vunpack.c.l.b16 %v2277
        %v2342 = vunpack.c.l.b16 %v2278
        %v2343 = vunpack.c.l.b16 %v2279
        %v2344 = vunpack.c.l.b16 %v2280
        %v2345 = vpack.c.b16 %v2330, %v2329
        %v2346 = vpack.c.b16 %v2332, %v2331
        %v2347 = vpack.c.b16 %v2334, %v2333
        %v2348 = vpack.c.b16 %v2336, %v2335
        %v2349 = vpack.c.b16 %v2338, %v2337
        %v2350 = vpack.c.b16 %v2340, %v2339
        %v2351 = vpack.c.b16 %v2342, %v2341
        %v2352 = vpack.c.b16 %v2344, %v2343
        %2361 = vmatprep.subr.bf16.mxu0 0
        %2362 = vmatpush1.bf16.msra.mxu0 %v2345
        %2363 = vmatprep.subr.bf16.mxu0 0
        %2364 = vmatpush1.bf16.msra.mxu0 %v2346
        %2365 = vmatprep.subr.bf16.mxu0 0
        %2366 = vmatpush1.bf16.msra.mxu0 %v2347
        %2367 = vmatprep.subr.bf16.mxu0 0
        %2368 = vmatpush1.bf16.msra.mxu0 %v2348
        %2369 = vmatprep.subr.bf16.mxu0 0
        %2370 = vmatpush1.bf16.msra.mxu0 %v2349
        %2371 = vmatprep.subr.bf16.mxu0 0
        %2372 = vmatpush1.bf16.msra.mxu0 %v2350
        %2373 = vmatprep.subr.bf16.mxu0 0
        %2374 = vmatpush1.bf16.msra.mxu0 %v2351
        %2375 = vmatprep.subr.bf16.mxu0 0
        %2376 = vmatpush1.bf16.msra.mxu0 %v2352
        %2377 = vmatprep.subr.bf16.mxu0 0
        %2378 = vmatpush1.bf16.msra.mxu0 0
        %2379 = vmatprep.subr.bf16.mxu0 0
        %2380 = vmatpush1.bf16.msra.mxu0 0
        %2381 = vmatprep.subr.bf16.mxu0 0
        %2382 = vmatpush1.bf16.msra.mxu0 0
        %2383 = vmatprep.subr.bf16.mxu0 0
        %2384 = vmatpush1.bf16.msra.mxu0 0
        %2385 = vmatprep.subr.bf16.mxu0 0
        %2386 = vmatpush1.bf16.msra.mxu0 0
        %2387 = vmatprep.subr.bf16.mxu0 0
        %2388 = vmatpush1.bf16.msra.mxu0 0
        %2389 = vmatprep.subr.bf16.mxu0 0
        %2390 = vmatpush1.bf16.msra.mxu0 0
        %2391 = vmatprep.subr.bf16.mxu0 0
        %2392 = vmatpush1.bf16.msra.mxu0 0
        %2393 = vmatprep.mubr.bf16.mxu0 0
        %2394 = vmatmul.mubr.bf16.gmra.mrb[0].mxu0 %v2258
        %v2395 = vpop.f32.mrb[0].mxu0
        %v2396 = vadd.f32 0.0, %v2395
        %v2397 = vpop.f32.mrb[0].mxu0
        %v2398 = vpop.f32.mrb[0].mxu0
        %v2399 = vadd.f32 0.0, %v2398
        %v2400 = vpop.f32.mrb[0].mxu0
        %2401 = vmatprep.mubr.bf16.mxu0 0
        %2402 = vmatmul.mubr.bf16.gmra.mrb[0].mxu0 %v2259
        %v2403 = vpop.f32.mrb[0].mxu0
        %v2404 = vadd.f32 0.0, %v2403
        %v2405 = vpop.f32.mrb[0].mxu0
        %v2406 = vpop.f32.mrb[0].mxu0
        %v2407 = vadd.f32 0.0, %v2406
        %v2408 = vpop.f32.mrb[0].mxu0
        %2409 = vmatprep.mubr.bf16.mxu0 0
        %2410 = vmatmul.mubr.bf16.gmra.mrb[0].mxu0 %v2260
        %v2411 = vpop.f32.mrb[0].mxu0
        %v2412 = vadd.f32 0.0, %v2411
        %v2413 = vpop.f32.mrb[0].mxu0
        %v2414 = vpop.f32.mrb[0].mxu0
        %v2415 = vadd.f32 0.0, %v2414
        %v2416 = vpop.f32.mrb[0].mxu0
        %2417 = vmatprep.mubr.bf16.mxu0 0
        %2418 = vmatmul.mubr.bf16.gmra.mrb[0].mxu0 %v2261
        %v2419 = vpop.f32.mrb[0].mxu0
        %v2420 = vadd.f32 0.0, %v2419
        %v2421 = vpop.f32.mrb[0].mxu0
        %v2422 = vpop.f32.mrb[0].mxu0
        %v2423 = vadd.f32 0.0, %v2422
        %v2424 = vpop.f32.mrb[0].mxu0
        %2425 = vmatprep.mubr.bf16.mxu0 0
        %2426 = vmatmul.mubr.bf16.gmra.mrb[0].mxu0 %v2262
        %v2427 = vpop.f32.mrb[0].mxu0
        %v2428 = vadd.f32 0.0, %v2427
        %v2429 = vpop.f32.mrb[0].mxu0
        %v2430 = vpop.f32.mrb[0].mxu0
        %v2431 = vadd.f32 0.0, %v2430
        %v2432 = vpop.f32.mrb[0].mxu0
        %2433 = vmatprep.mubr.bf16.mxu0 0
        %2434 = vmatmul.mubr.bf16.gmra.mrb[0].mxu0 %v2263
        %v2435 = vpop.f32.mrb[0].mxu0
        %v2436 = vadd.f32 0.0, %v2435
        %v2437 = vpop.f32.mrb[0].mxu0
        %v2438 = vpop.f32.mrb[0].mxu0
        %v2439 = vadd.f32 0.0, %v2438
        %v2440 = vpop.f32.mrb[0].mxu0
        %2441 = vdwg.mxu0
        %v2442 = vrot.slane %v2396, 7
        %v2443 = vrot.slane %v2399, 7
        %v2444 = vrot.slane %v2404, 7
        %v2445 = vrot.slane %v2407, 7
        %v2446 = vrot.slane %v2412, 7
        %v2447 = vrot.slane %v2415, 7
        %v2448 = vrot.slane %v2420, 7
        %v2449 = vrot.slane %v2423, 7
        %v2450 = vrot.slane %v2428, 7
        %v2451 = vrot.slane %v2431, 7
        %v2452 = vrot.slane %v2436, 7
        %v2453 = vrot.slane %v2439, 7
        %v2454 = vsel %vm729, %v2452, %v2453
        %v2455 = vsel %vm729, %v2451, %v2452
        %v2456 = vsel %vm729, %v2450, %v2451
        %v2457 = vsel %vm729, %v2449, %v2450
        %v2458 = vsel %vm729, %v2448, %v2449
        %v2459 = vsel %vm729, %v2447, %v2448
        %v2460 = vsel %vm729, %v2446, %v2447
        %v2461 = vsel %vm729, %v2445, %v2446
        %v2462 = vsel %vm729, %v2444, %v2445
        %v2463 = vsel %vm729, %v2443, %v2444
        %v2464 = vsel %vm729, %v2442, %v2443
        %v2465 = vsel %vm729, %v2453, %v2442
        %v2482 = vunpack.c.l.b16 %v2281
        %v2483 = vunpack.c.l.b16 %v2282
        %v2484 = vunpack.c.l.b16 %v2283
        %v2485 = vunpack.c.l.b16 %v2284
        %v2486 = vunpack.c.l.b16 %v2285
        %v2487 = vunpack.c.l.b16 %v2286
        %v2488 = vunpack.c.l.b16 %v2287
        %v2489 = vunpack.c.l.b16 %v2288
        %v2490 = vunpack.c.l.b16 %v2289
        %v2491 = vunpack.c.l.b16 %v2290
        %v2492 = vunpack.c.l.b16 %v2291
        %v2493 = vunpack.c.l.b16 %v2292
        %v2494 = vunpack.c.l.b16 %v2293
        %v2495 = vunpack.c.l.b16 %v2294
        %v2496 = vunpack.c.l.b16 %v2295
        %v2497 = vunpack.c.l.b16 %v2296
        %v2498 = vpack.c.b16 %v2483, %v2482
        %v2499 = vpack.c.b16 %v2485, %v2484
        %v2500 = vpack.c.b16 %v2487, %v2486
        %v2501 = vpack.c.b16 %v2489, %v2488
        %v2502 = vpack.c.b16 %v2491, %v2490
        %v2503 = vpack.c.b16 %v2493, %v2492
        %v2504 = vpack.c.b16 %v2495, %v2494
        %v2505 = vpack.c.b16 %v2497, %v2496
        %2514 = vmatprep.subr.bf16.mxu0 0
        %2515 = vmatpush1.bf16.msra.mxu0 %v2498
        %2516 = vmatprep.subr.bf16.mxu0 0
        %2517 = vmatpush1.bf16.msra.mxu0 %v2499
        %2518 = vmatprep.subr.bf16.mxu0 0
        %2519 = vmatpush1.bf16.msra.mxu0 %v2500
        %2520 = vmatprep.subr.bf16.mxu0 0
        %2521 = vmatpush1.bf16.msra.mxu0 %v2501
        %2522 = vmatprep.subr.bf16.mxu0 0
        %2523 = vmatpush1.bf16.msra.mxu0 %v2502
        %2524 = vmatprep.subr.bf16.mxu0 0
        %2525 = vmatpush1.bf16.msra.mxu0 %v2503
        %2526 = vmatprep.subr.bf16.mxu0 0
        %2527 = vmatpush1.bf16.msra.mxu0 %v2504
        %2528 = vmatprep.subr.bf16.mxu0 0
        %2529 = vmatpush1.bf16.msra.mxu0 %v2505
        %2530 = vmatprep.subr.bf16.mxu0 0
        %2531 = vmatpush1.bf16.msra.mxu0 0
        %2532 = vmatprep.subr.bf16.mxu0 0
        %2533 = vmatpush1.bf16.msra.mxu0 0
        %2534 = vmatprep.subr.bf16.mxu0 0
        %2535 = vmatpush1.bf16.msra.mxu0 0
        %2536 = vmatprep.subr.bf16.mxu0 0
        %2537 = vmatpush1.bf16.msra.mxu0 0
        %2538 = vmatprep.subr.bf16.mxu0 0
        %2539 = vmatpush1.bf16.msra.mxu0 0
        %2540 = vmatprep.subr.bf16.mxu0 0
        %2541 = vmatpush1.bf16.msra.mxu0 0
        %2542 = vmatprep.subr.bf16.mxu0 0
        %2543 = vmatpush1.bf16.msra.mxu0 0
        %2544 = vmatprep.subr.bf16.mxu0 0
        %2545 = vmatpush1.bf16.msra.mxu0 0
        %2546 = vmatprep.mubr.bf16.mxu0 0
        %2547 = vmatmul.mubr.bf16.gmra.mrb[0].mxu0 %v2258
        %v2548 = vpop.f32.mrb[0].mxu0
        %v2549 = vadd.f32 0.0, %v2548
        %v2550 = vpop.f32.mrb[0].mxu0
        %v2551 = vpop.f32.mrb[0].mxu0
        %v2552 = vadd.f32 0.0, %v2551
        %v2553 = vpop.f32.mrb[0].mxu0
        %2554 = vmatprep.mubr.bf16.mxu0 0
        %2555 = vmatmul.mubr.bf16.gmra.mrb[0].mxu0 %v2259
        %v2556 = vpop.f32.mrb[0].mxu0
        %v2557 = vadd.f32 0.0, %v2556
        %v2558 = vpop.f32.mrb[0].mxu0
        %v2559 = vpop.f32.mrb[0].mxu0
        %v2560 = vadd.f32 0.0, %v2559
        %v2561 = vpop.f32.mrb[0].mxu0
        %2562 = vmatprep.mubr.bf16.mxu0 0
        %2563 = vmatmul.mubr.bf16.gmra.mrb[0].mxu0 %v2260
        %v2564 = vpop.f32.mrb[0].mxu0
        %v2565 = vadd.f32 0.0, %v2564
        %v2566 = vpop.f32.mrb[0].mxu0
        %v2567 = vpop.f32.mrb[0].mxu0
        %v2568 = vadd.f32 0.0, %v2567
        %v2569 = vpop.f32.mrb[0].mxu0
        %2570 = vmatprep.mubr.bf16.mxu0 0
        %2571 = vmatmul.mubr.bf16.gmra.mrb[0].mxu0 %v2261
        %v2572 = vpop.f32.mrb[0].mxu0
        %v2573 = vadd.f32 0.0, %v2572
        %v2574 = vpop.f32.mrb[0].mxu0
        %v2575 = vpop.f32.mrb[0].mxu0
        %v2576 = vadd.f32 0.0, %v2575
        %v2577 = vpop.f32.mrb[0].mxu0
        %2578 = vmatprep.mubr.bf16.mxu0 0
        %2579 = vmatmul.mubr.bf16.gmra.mrb[0].mxu0 %v2262
        %v2580 = vpop.f32.mrb[0].mxu0
        %v2581 = vadd.f32 0.0, %v2580
        %v2582 = vpop.f32.mrb[0].mxu0
        %v2583 = vpop.f32.mrb[0].mxu0
        %v2584 = vadd.f32 0.0, %v2583
        %v2585 = vpop.f32.mrb[0].mxu0
        %2586 = vmatprep.mubr.bf16.mxu0 0
        %2587 = vmatmul.mubr.bf16.gmra.mrb[0].mxu0 %v2263
        %v2588 = vpop.f32.mrb[0].mxu0
        %v2589 = vadd.f32 0.0, %v2588
        %v2590 = vpop.f32.mrb[0].mxu0
        %v2591 = vpop.f32.mrb[0].mxu0
        %v2592 = vadd.f32 0.0, %v2591
        %v2593 = vpop.f32.mrb[0].mxu0
        %2594 = vdwg.mxu0
        %v2595 = vadd.f32 %v2465, %v2549
        %v2596 = vadd.f32 %v2464, %v2552
        %v2597 = vadd.f32 %v2463, %v2557
        %v2598 = vadd.f32 %v2462, %v2560
        %v2599 = vadd.f32 %v2461, %v2565
        %v2600 = vadd.f32 %v2460, %v2568
        %v2601 = vadd.f32 %v2459, %v2573
        %v2602 = vadd.f32 %v2458, %v2576
        %v2603 = vadd.f32 %v2457, %v2581
        %v2604 = vadd.f32 %v2456, %v2584
        %v2605 = vadd.f32 %v2455, %v2589
        %v2606 = vadd.f32 %v2454, %v2592
        %v2623 = vunpack.c.l.b16 %v2297
        %v2624 = vunpack.c.l.b16 %v2298
        %v2625 = vunpack.c.l.b16 %v2299
        %v2626 = vunpack.c.l.b16 %v2300
        %v2627 = vunpack.c.l.b16 %v2301
        %v2628 = vunpack.c.l.b16 %v2302
        %v2629 = vunpack.c.l.b16 %v2303
        %v2630 = vunpack.c.l.b16 %v2304
        %v2631 = vunpack.c.l.b16 %v2305
        %v2632 = vunpack.c.l.b16 %v2306
        %v2633 = vunpack.c.l.b16 %v2307
        %v2634 = vunpack.c.l.b16 %v2308
        %v2635 = vunpack.c.l.b16 %v2309
        %v2636 = vunpack.c.l.b16 %v2310
        %v2637 = vunpack.c.l.b16 %v2311
        %v2638 = vunpack.c.l.b16 %v2312
        %v2639 = vpack.c.b16 %v2624, %v2623
        %v2640 = vpack.c.b16 %v2626, %v2625
        %v2641 = vpack.c.b16 %v2628, %v2627
        %v2642 = vpack.c.b16 %v2630, %v2629
        %v2643 = vpack.c.b16 %v2632, %v2631
        %v2644 = vpack.c.b16 %v2634, %v2633
        %v2645 = vpack.c.b16 %v2636, %v2635
        %v2646 = vpack.c.b16 %v2638, %v2637
        %2655 = vmatprep.subr.bf16.mxu0 0
        %2656 = vmatpush1.bf16.msra.mxu0 %v2639
        %2657 = vmatprep.subr.bf16.mxu0 0
        %2658 = vmatpush1.bf16.msra.mxu0 %v2640
        %2659 = vmatprep.subr.bf16.mxu0 0
        %2660 = vmatpush1.bf16.msra.mxu0 %v2641
        %2661 = vmatprep.subr.bf16.mxu0 0
        %2662 = vmatpush1.bf16.msra.mxu0 %v2642
        %2663 = vmatprep.subr.bf16.mxu0 0
        %2664 = vmatpush1.bf16.msra.mxu0 %v2643
        %2665 = vmatprep.subr.bf16.mxu0 0
        %2666 = vmatpush1.bf16.msra.mxu0 %v2644
        %2667 = vmatprep.subr.bf16.mxu0 0
        %2668 = vmatpush1.bf16.msra.mxu0 %v2645
        %2669 = vmatprep.subr.bf16.mxu0 0
        %2670 = vmatpush1.bf16.msra.mxu0 %v2646
        %2671 = vmatprep.subr.bf16.mxu0 0
        %2672 = vmatpush1.bf16.msra.mxu0 0
        %2673 = vmatprep.subr.bf16.mxu0 0
        %2674 = vmatpush1.bf16.msra.mxu0 0
        %2675 = vmatprep.subr.bf16.mxu0 0
        %2676 = vmatpush1.bf16.msra.mxu0 0
        %2677 = vmatprep.subr.bf16.mxu0 0
        %2678 = vmatpush1.bf16.msra.mxu0 0
        %2679 = vmatprep.subr.bf16.mxu0 0
        %2680 = vmatpush1.bf16.msra.mxu0 0
        %2681 = vmatprep.subr.bf16.mxu0 0
        %2682 = vmatpush1.bf16.msra.mxu0 0
        %2683 = vmatprep.subr.bf16.mxu0 0
        %2684 = vmatpush1.bf16.msra.mxu0 0
        %2685 = vmatprep.subr.bf16.mxu0 0
        %2686 = vmatpush1.bf16.msra.mxu0 0
        %2687 = vmatprep.mubr.bf16.mxu0 0
        %2688 = vmatmul.mubr.bf16.gmra.mrb[0].mxu0 %v2258
        %v2689 = vpop.f32.mrb[0].mxu0
        %v2690 = vadd.f32 0.0, %v2689
        %v2691 = vpop.f32.mrb[0].mxu0
        %v2692 = vpop.f32.mrb[0].mxu0
        %v2693 = vadd.f32 0.0, %v2692
        %v2694 = vpop.f32.mrb[0].mxu0
        %2695 = vmatprep.mubr.bf16.mxu0 0
        %2696 = vmatmul.mubr.bf16.gmra.mrb[0].mxu0 %v2259
        %v2697 = vpop.f32.mrb[0].mxu0
        %v2698 = vadd.f32 0.0, %v2697
        %v2699 = vpop.f32.mrb[0].mxu0
        %v2700 = vpop.f32.mrb[0].mxu0
        %v2701 = vadd.f32 0.0, %v2700
        %v2702 = vpop.f32.mrb[0].mxu0
        %2703 = vmatprep.mubr.bf16.mxu0 0
        %2704 = vmatmul.mubr.bf16.gmra.mrb[0].mxu0 %v2260
        %v2705 = vpop.f32.mrb[0].mxu0
        %v2706 = vadd.f32 0.0, %v2705
        %v2707 = vpop.f32.mrb[0].mxu0
        %v2708 = vpop.f32.mrb[0].mxu0
        %v2709 = vadd.f32 0.0, %v2708
        %v2710 = vpop.f32.mrb[0].mxu0
        %2711 = vmatprep.mubr.bf16.mxu0 0
        %2712 = vmatmul.mubr.bf16.gmra.mrb[0].mxu0 %v2261
        %v2713 = vpop.f32.mrb[0].mxu0
        %v2714 = vadd.f32 0.0, %v2713
        %v2715 = vpop.f32.mrb[0].mxu0
        %v2716 = vpop.f32.mrb[0].mxu0
        %v2717 = vadd.f32 0.0, %v2716
        %v2718 = vpop.f32.mrb[0].mxu0
        %2719 = vmatprep.mubr.bf16.mxu0 0
        %2720 = vmatmul.mubr.bf16.gmra.mrb[0].mxu0 %v2262
        %v2721 = vpop.f32.mrb[0].mxu0
        %v2722 = vadd.f32 0.0, %v2721
        %v2723 = vpop.f32.mrb[0].mxu0
        %v2724 = vpop.f32.mrb[0].mxu0
        %v2725 = vadd.f32 0.0, %v2724
        %v2726 = vpop.f32.mrb[0].mxu0
        %2727 = vmatprep.mubr.bf16.mxu0 0
        %2728 = vmatmul.mubr.bf16.gmra.mrb[0].mxu0 %v2263
        %v2729 = vpop.f32.mrb[0].mxu0
        %v2730 = vadd.f32 0.0, %v2729
        %v2731 = vpop.f32.mrb[0].mxu0
        %v2732 = vpop.f32.mrb[0].mxu0
        %v2733 = vadd.f32 0.0, %v2732
        %v2734 = vpop.f32.mrb[0].mxu0
        %2735 = vdwg.mxu0
        %v2736 = vrot.slane %v2690, 1
        %v2737 = vrot.slane %v2693, 1
        %v2738 = vrot.slane %v2698, 1
        %v2739 = vrot.slane %v2701, 1
        %v2740 = vrot.slane %v2706, 1
        %v2741 = vrot.slane %v2709, 1
        %v2742 = vrot.slane %v2714, 1
        %v2743 = vrot.slane %v2717, 1
        %v2744 = vrot.slane %v2722, 1
        %v2745 = vrot.slane %v2725, 1
        %v2746 = vrot.slane %v2730, 1
        %v2747 = vrot.slane %v2733, 1
        %v2748 = vsel %vm1024, %v2746, %v2747
        %v2749 = vsel %vm1024, %v2745, %v2746
        %v2750 = vsel %vm1024, %v2744, %v2745
        %v2751 = vsel %vm1024, %v2743, %v2744
        %v2752 = vsel %vm1024, %v2742, %v2743
        %v2753 = vsel %vm1024, %v2741, %v2742
        %v2754 = vsel %vm1024, %v2740, %v2741
        %v2755 = vsel %vm1024, %v2739, %v2740
        %v2756 = vsel %vm1024, %v2738, %v2739
        %v2757 = vsel %vm1024, %v2737, %v2738
        %v2758 = vsel %vm1024, %v2736, %v2737
        %v2759 = vsel %vm1024, %v2747, %v2736
        %v2760 = vadd.f32 %v2595, %v2758
        %v2761 = vadd.f32 %v2596, %v2757
        %v2762 = vadd.f32 %v2597, %v2756
        %v2763 = vadd.f32 %v2598, %v2755
        %v2764 = vadd.f32 %v2599, %v2754
        %v2765 = vadd.f32 %v2600, %v2753
        %v2766 = vadd.f32 %v2601, %v2752
        %v2767 = vadd.f32 %v2602, %v2751
        %v2768 = vadd.f32 %v2603, %v2750
        %v2769 = vadd.f32 %v2604, %v2749
        %v2770 = vadd.f32 %v2605, %v2748
        %v2771 = vadd.f32 %v2606, %v2759
        %s2772 = scalar_lea.vmem %s4, 3
        %v2773 = vld [vmem:[%s2772] sm:$0x1]
        %v2775 = vlaneseq
        %v2776 = vshrl.u32 %v2775, 7
        %v2777 = vsub.s32 0, %v2776
        %v2778 = vrot.slane %v2773, %v2777
        %v2780 = vadd.f32 %v2760, %v2778
        %v2781 = vadd.f32 %v2761, %v2778
        %v2782 = vadd.f32 %v2762, %v2778
        %v2783 = vadd.f32 %v2763, %v2778
        %v2784 = vadd.f32 %v2764, %v2778
        %v2785 = vadd.f32 %v2765, %v2778
        %v2786 = vadd.f32 %v2766, %v2778
        %v2787 = vadd.f32 %v2767, %v2778
        %v2788 = vadd.f32 %v2768, %v2778
        %v2789 = vadd.f32 %v2769, %v2778
        %v2790 = vadd.f32 %v2770, %v2778
        %v2791 = vadd.f32 %v2771, %v2778
        %v2792 = vsel %vm486, %v2780, 0.0
        %v2793 = vsel %vm487, %v2781, 0.0
        %v2794 = vsel %vm488, %v2782, 0.0
        %v2795 = vsel %vm489, %v2783, 0.0
        %v2796 = vsel %vm490, %v2784, 0.0
        %v2797 = vsel %vm491, %v2785, 0.0
        %v2798 = vsel %vm492, %v2786, 0.0
        %v2799 = vsel %vm493, %v2787, 0.0
        %v2800 = vsel %vm494, %v2788, 0.0
        %v2801 = vsel %vm495, %v2789, 0.0
        %v2802 = vsel %vm496, %v2790, 0.0
        %v2803 = vsel %vm497, %v2791, 0.0
        %v2804 = vadd.f32 %v1650, %v2792
        %v2805 = vadd.f32 %v1651, %v2793
        %v2806 = vadd.f32 %v1652, %v2794
        %v2807 = vadd.f32 %v1653, %v2795
        %v2808 = vadd.f32 %v1654, %v2796
        %v2809 = vadd.f32 %v1655, %v2797
        %v2810 = vadd.f32 %v1656, %v2798
        %v2811 = vadd.f32 %v1657, %v2799
        %v2812 = vadd.f32 %v1658, %v2800
        %v2813 = vadd.f32 %v1659, %v2801
        %v2814 = vadd.f32 %v1660, %v2802
        %v2815 = vadd.f32 %v1661, %v2803
        %v2816 = vmul.f32 %v2804, 0.01
        %v2817 = vmul.f32 %v2805, 0.01
        %v2818 = vmul.f32 %v2806, 0.01
        %v2819 = vmul.f32 %v2807, 0.01
        %v2820 = vmul.f32 %v2808, 0.01
        %v2821 = vmul.f32 %v2809, 0.01
        %v2822 = vmul.f32 %v2810, 0.01
        %v2823 = vmul.f32 %v2811, 0.01
        %v2824 = vmul.f32 %v2812, 0.01
        %v2825 = vmul.f32 %v2813, 0.01
        %v2826 = vmul.f32 %v2814, 0.01
        %v2827 = vmul.f32 %v2815, 0.01
        %v2828 = vmax.f32 %v2804, %v2816
        %v2829 = vmax.f32 %v2805, %v2817
        %v2830 = vmax.f32 %v2806, %v2818
        %v2831 = vmax.f32 %v2807, %v2819
        %v2832 = vmax.f32 %v2808, %v2820
        %v2833 = vmax.f32 %v2809, %v2821
        %v2834 = vmax.f32 %v2810, %v2822
        %v2835 = vmax.f32 %v2811, %v2823
        %v2836 = vmax.f32 %v2812, %v2824
        %v2837 = vmax.f32 %v2813, %v2825
        %v2838 = vmax.f32 %v2814, %v2826
        %v2839 = vmax.f32 %v2815, %v2827
        %v2840 = vpack.c.bf16 %v2829, %v2828
        %v2841 = vpack.c.bf16 %v2831, %v2830
        %v2842 = vpack.c.bf16 %v2833, %v2832
        %v2843 = vpack.c.bf16 %v2835, %v2834
        %v2844 = vpack.c.bf16 %v2837, %v2836
        %v2845 = vpack.c.bf16 %v2839, %v2838
        %s2846 = scalar_lea.vmem [#allocation8], 768
        %v2847 = vld [vmem:[%s2846] sm:$0xf]
        %v2848 = vld [vmem:[%s2846 + $0x4] sm:$0xf]
        %v2849 = vld [vmem:[%s2846 + $0x8] sm:$0xf]
        %v2850 = vld [vmem:[%s2846 + $0xc] sm:$0xf]
        %v2851 = vld [vmem:[%s2846 + $0x10] sm:$0xf]
        %v2852 = vld [vmem:[%s2846 + $0x14] sm:$0xf]
        %v2853 = vld [vmem:[%s2846 + $0x18] sm:$0xf]
        %v2854 = vld [vmem:[%s2846 + $0x1c] sm:$0xf]
        %v2855 = vld [vmem:[%s2846 + $0x20] sm:$0xf]
        %v2856 = vld [vmem:[%s2846 + $0x24] sm:$0xf]
        %v2857 = vld [vmem:[%s2846 + $0x28] sm:$0xf]
        %v2858 = vld [vmem:[%s2846 + $0x2c] sm:$0xf]
        %v2859 = vld [vmem:[%s2846 + $0x30] sm:$0xf]
        %v2860 = vld [vmem:[%s2846 + $0x34] sm:$0xf]
        %v2861 = vld [vmem:[%s2846 + $0x38] sm:$0xf]
        %v2862 = vld [vmem:[%s2846 + $0x3c] sm:$0xf]
        %v2863 = vld [vmem:[%s2846 + $0x40] sm:$0xf]
        %v2864 = vld [vmem:[%s2846 + $0x44] sm:$0xf]
        %v2865 = vld [vmem:[%s2846 + $0x48] sm:$0xf]
        %v2866 = vld [vmem:[%s2846 + $0x4c] sm:$0xf]
        %v2867 = vld [vmem:[%s2846 + $0x50] sm:$0xf]
        %v2868 = vld [vmem:[%s2846 + $0x54] sm:$0xf]
        %v2869 = vld [vmem:[%s2846 + $0x58] sm:$0xf]
        %v2870 = vld [vmem:[%s2846 + $0x5c] sm:$0xf]
        %v2871 = vld [vmem:[%s2846 + $0x60] sm:$0xf]
        %v2872 = vld [vmem:[%s2846 + $0x64] sm:$0xf]
        %v2873 = vld [vmem:[%s2846 + $0x68] sm:$0xf]
        %v2874 = vld [vmem:[%s2846 + $0x6c] sm:$0xf]
        %v2875 = vld [vmem:[%s2846 + $0x70] sm:$0xf]
        %v2876 = vld [vmem:[%s2846 + $0x74] sm:$0xf]
        %v2877 = vld [vmem:[%s2846 + $0x78] sm:$0xf]
        %v2878 = vld [vmem:[%s2846 + $0x7c] sm:$0xf]
        %v2879 = vld [vmem:[%s2846 + $0x80] sm:$0xf]
        %v2880 = vld [vmem:[%s2846 + $0x84] sm:$0xf]
        %v2881 = vld [vmem:[%s2846 + $0x88] sm:$0xf]
        %v2882 = vld [vmem:[%s2846 + $0x8c] sm:$0xf]
        %v2883 = vld [vmem:[%s2846 + $0x90] sm:$0xf]
        %v2884 = vld [vmem:[%s2846 + $0x94] sm:$0xf]
        %v2885 = vld [vmem:[%s2846 + $0x98] sm:$0xf]
        %v2886 = vld [vmem:[%s2846 + $0x9c] sm:$0xf]
        %v2887 = vld [vmem:[%s2846 + $0xa0] sm:$0xf]
        %v2888 = vld [vmem:[%s2846 + $0xa4] sm:$0xf]
        %v2889 = vld [vmem:[%s2846 + $0xa8] sm:$0xf]
        %v2890 = vld [vmem:[%s2846 + $0xac] sm:$0xf]
        %v2891 = vld [vmem:[%s2846 + $0xb0] sm:$0xf]
        %v2892 = vld [vmem:[%s2846 + $0xb4] sm:$0xf]
        %v2893 = vld [vmem:[%s2846 + $0xb8] sm:$0xf]
        %v2894 = vld [vmem:[%s2846 + $0xbc] sm:$0xf]
        %v2911 = vunpack.c.l.b16 %v2847
        %v2912 = vunpack.c.l.b16 %v2848
        %v2913 = vunpack.c.l.b16 %v2849
        %v2914 = vunpack.c.l.b16 %v2850
        %v2915 = vunpack.c.l.b16 %v2851
        %v2916 = vunpack.c.l.b16 %v2852
        %v2917 = vunpack.c.l.b16 %v2853
        %v2918 = vunpack.c.l.b16 %v2854
        %v2919 = vunpack.c.l.b16 %v2855
        %v2920 = vunpack.c.l.b16 %v2856
        %v2921 = vunpack.c.l.b16 %v2857
        %v2922 = vunpack.c.l.b16 %v2858
        %v2923 = vunpack.c.l.b16 %v2859
        %v2924 = vunpack.c.l.b16 %v2860
        %v2925 = vunpack.c.l.b16 %v2861
        %v2926 = vunpack.c.l.b16 %v2862
        %v2927 = vpack.c.b16 %v2912, %v2911
        %v2928 = vpack.c.b16 %v2914, %v2913
        %v2929 = vpack.c.b16 %v2916, %v2915
        %v2930 = vpack.c.b16 %v2918, %v2917
        %v2931 = vpack.c.b16 %v2920, %v2919
        %v2932 = vpack.c.b16 %v2922, %v2921
        %v2933 = vpack.c.b16 %v2924, %v2923
        %v2934 = vpack.c.b16 %v2926, %v2925
        %2943 = vmatprep.subr.bf16.mxu0 0
        %2944 = vmatpush1.bf16.msra.mxu0 %v2927
        %2945 = vmatprep.subr.bf16.mxu0 0
        %2946 = vmatpush1.bf16.msra.mxu0 %v2928
        %2947 = vmatprep.subr.bf16.mxu0 0
        %2948 = vmatpush1.bf16.msra.mxu0 %v2929
        %2949 = vmatprep.subr.bf16.mxu0 0
        %2950 = vmatpush1.bf16.msra.mxu0 %v2930
        %2951 = vmatprep.subr.bf16.mxu0 0
        %2952 = vmatpush1.bf16.msra.mxu0 %v2931
        %2953 = vmatprep.subr.bf16.mxu0 0
        %2954 = vmatpush1.bf16.msra.mxu0 %v2932
        %2955 = vmatprep.subr.bf16.mxu0 0
        %2956 = vmatpush1.bf16.msra.mxu0 %v2933
        %2957 = vmatprep.subr.bf16.mxu0 0
        %2958 = vmatpush1.bf16.msra.mxu0 %v2934
        %2959 = vmatprep.subr.bf16.mxu0 0
        %2960 = vmatpush1.bf16.msra.mxu0 0
        %2961 = vmatprep.subr.bf16.mxu0 0
        %2962 = vmatpush1.bf16.msra.mxu0 0
        %2963 = vmatprep.subr.bf16.mxu0 0
        %2964 = vmatpush1.bf16.msra.mxu0 0
        %2965 = vmatprep.subr.bf16.mxu0 0
        %2966 = vmatpush1.bf16.msra.mxu0 0
        %2967 = vmatprep.subr.bf16.mxu0 0
        %2968 = vmatpush1.bf16.msra.mxu0 0
        %2969 = vmatprep.subr.bf16.mxu0 0
        %2970 = vmatpush1.bf16.msra.mxu0 0
        %2971 = vmatprep.subr.bf16.mxu0 0
        %2972 = vmatpush1.bf16.msra.mxu0 0
        %2973 = vmatprep.subr.bf16.mxu0 0
        %2974 = vmatpush1.bf16.msra.mxu0 0
        %2975 = vmatprep.mubr.bf16.mxu0 0
        %2976 = vmatmul.mubr.bf16.gmra.mrb[0].mxu0 %v2840
        %v2977 = vpop.f32.mrb[0].mxu0
        %v2978 = vadd.f32 0.0, %v2977
        %v2979 = vpop.f32.mrb[0].mxu0
        %v2980 = vpop.f32.mrb[0].mxu0
        %v2981 = vadd.f32 0.0, %v2980
        %v2982 = vpop.f32.mrb[0].mxu0
        %2983 = vmatprep.mubr.bf16.mxu0 0
        %2984 = vmatmul.mubr.bf16.gmra.mrb[0].mxu0 %v2841
        %v2985 = vpop.f32.mrb[0].mxu0
        %v2986 = vadd.f32 0.0, %v2985
        %v2987 = vpop.f32.mrb[0].mxu0
        %v2988 = vpop.f32.mrb[0].mxu0
        %v2989 = vadd.f32 0.0, %v2988
        %v2990 = vpop.f32.mrb[0].mxu0
        %2991 = vmatprep.mubr.bf16.mxu0 0
        %2992 = vmatmul.mubr.bf16.gmra.mrb[0].mxu0 %v2842
        %v2993 = vpop.f32.mrb[0].mxu0
        %v2994 = vadd.f32 0.0, %v2993
        %v2995 = vpop.f32.mrb[0].mxu0
        %v2996 = vpop.f32.mrb[0].mxu0
        %v2997 = vadd.f32 0.0, %v2996
        %v2998 = vpop.f32.mrb[0].mxu0
        %2999 = vmatprep.mubr.bf16.mxu0 0
        %3000 = vmatmul.mubr.bf16.gmra.mrb[0].mxu0 %v2843
        %v3001 = vpop.f32.mrb[0].mxu0
        %v3002 = vadd.f32 0.0, %v3001
        %v3003 = vpop.f32.mrb[0].mxu0
        %v3004 = vpop.f32.mrb[0].mxu0
        %v3005 = vadd.f32 0.0, %v3004
        %v3006 = vpop.f32.mrb[0].mxu0
        %3007 = vmatprep.mubr.bf16.mxu0 0
        %3008 = vmatmul.mubr.bf16.gmra.mrb[0].mxu0 %v2844
        %v3009 = vpop.f32.mrb[0].mxu0
        %v3010 = vadd.f32 0.0, %v3009
        %v3011 = vpop.f32.mrb[0].mxu0
        %v3012 = vpop.f32.mrb[0].mxu0
        %v3013 = vadd.f32 0.0, %v3012
        %v3014 = vpop.f32.mrb[0].mxu0
        %3015 = vmatprep.mubr.bf16.mxu0 0
        %3016 = vmatmul.mubr.bf16.gmra.mrb[0].mxu0 %v2845
        %v3017 = vpop.f32.mrb[0].mxu0
        %v3018 = vadd.f32 0.0, %v3017
        %v3019 = vpop.f32.mrb[0].mxu0
        %v3020 = vpop.f32.mrb[0].mxu0
        %v3021 = vadd.f32 0.0, %v3020
        %v3022 = vpop.f32.mrb[0].mxu0
        %3023 = vdwg.mxu0
        %v3024 = vrot.slane %v2978, 3
        %v3025 = vrot.slane %v2981, 3
        %v3026 = vrot.slane %v2986, 3
        %v3027 = vrot.slane %v2989, 3
        %v3028 = vrot.slane %v2994, 3
        %v3029 = vrot.slane %v2997, 3
        %v3030 = vrot.slane %v3002, 3
        %v3031 = vrot.slane %v3005, 3
        %v3032 = vrot.slane %v3010, 3
        %v3033 = vrot.slane %v3013, 3
        %v3034 = vrot.slane %v3018, 3
        %v3035 = vrot.slane %v3021, 3
        %v3036 = vsel %vm2177, %v3034, %v3035
        %v3037 = vsel %vm2177, %v3033, %v3034
        %v3038 = vsel %vm2177, %v3032, %v3033
        %v3039 = vsel %vm2177, %v3031, %v3032
        %v3040 = vsel %vm2177, %v3030, %v3031
        %v3041 = vsel %vm2177, %v3029, %v3030
        %v3042 = vsel %vm2177, %v3028, %v3029
        %v3043 = vsel %vm2177, %v3027, %v3028
        %v3044 = vsel %vm2177, %v3026, %v3027
        %v3045 = vsel %vm2177, %v3025, %v3026
        %v3046 = vsel %vm2177, %v3024, %v3025
        %v3047 = vsel %vm2177, %v3035, %v3024
        %v3064 = vunpack.c.l.b16 %v2863
        %v3065 = vunpack.c.l.b16 %v2864
        %v3066 = vunpack.c.l.b16 %v2865
        %v3067 = vunpack.c.l.b16 %v2866
        %v3068 = vunpack.c.l.b16 %v2867
        %v3069 = vunpack.c.l.b16 %v2868
        %v3070 = vunpack.c.l.b16 %v2869
        %v3071 = vunpack.c.l.b16 %v2870
        %v3072 = vunpack.c.l.b16 %v2871
        %v3073 = vunpack.c.l.b16 %v2872
        %v3074 = vunpack.c.l.b16 %v2873
        %v3075 = vunpack.c.l.b16 %v2874
        %v3076 = vunpack.c.l.b16 %v2875
        %v3077 = vunpack.c.l.b16 %v2876
        %v3078 = vunpack.c.l.b16 %v2877
        %v3079 = vunpack.c.l.b16 %v2878
        %v3080 = vpack.c.b16 %v3065, %v3064
        %v3081 = vpack.c.b16 %v3067, %v3066
        %v3082 = vpack.c.b16 %v3069, %v3068
        %v3083 = vpack.c.b16 %v3071, %v3070
        %v3084 = vpack.c.b16 %v3073, %v3072
        %v3085 = vpack.c.b16 %v3075, %v3074
        %v3086 = vpack.c.b16 %v3077, %v3076
        %v3087 = vpack.c.b16 %v3079, %v3078
        %3096 = vmatprep.subr.bf16.mxu0 0
        %3097 = vmatpush1.bf16.msra.mxu0 %v3080
        %3098 = vmatprep.subr.bf16.mxu0 0
        %3099 = vmatpush1.bf16.msra.mxu0 %v3081
        %3100 = vmatprep.subr.bf16.mxu0 0
        %3101 = vmatpush1.bf16.msra.mxu0 %v3082
        %3102 = vmatprep.subr.bf16.mxu0 0
        %3103 = vmatpush1.bf16.msra.mxu0 %v3083
        %3104 = vmatprep.subr.bf16.mxu0 0
        %3105 = vmatpush1.bf16.msra.mxu0 %v3084
        %3106 = vmatprep.subr.bf16.mxu0 0
        %3107 = vmatpush1.bf16.msra.mxu0 %v3085
        %3108 = vmatprep.subr.bf16.mxu0 0
        %3109 = vmatpush1.bf16.msra.mxu0 %v3086
        %3110 = vmatprep.subr.bf16.mxu0 0
        %3111 = vmatpush1.bf16.msra.mxu0 %v3087
        %3112 = vmatprep.subr.bf16.mxu0 0
        %3113 = vmatpush1.bf16.msra.mxu0 0
        %3114 = vmatprep.subr.bf16.mxu0 0
        %3115 = vmatpush1.bf16.msra.mxu0 0
        %3116 = vmatprep.subr.bf16.mxu0 0
        %3117 = vmatpush1.bf16.msra.mxu0 0
        %3118 = vmatprep.subr.bf16.mxu0 0
        %3119 = vmatpush1.bf16.msra.mxu0 0
        %3120 = vmatprep.subr.bf16.mxu0 0
        %3121 = vmatpush1.bf16.msra.mxu0 0
        %3122 = vmatprep.subr.bf16.mxu0 0
        %3123 = vmatpush1.bf16.msra.mxu0 0
        %3124 = vmatprep.subr.bf16.mxu0 0
        %3125 = vmatpush1.bf16.msra.mxu0 0
        %3126 = vmatprep.subr.bf16.mxu0 0
        %3127 = vmatpush1.bf16.msra.mxu0 0
        %3128 = vmatprep.mubr.bf16.mxu0 0
        %3129 = vmatmul.mubr.bf16.gmra.mrb[0].mxu0 %v2840
        %v3130 = vpop.f32.mrb[0].mxu0
        %v3131 = vadd.f32 0.0, %v3130
        %v3132 = vpop.f32.mrb[0].mxu0
        %v3133 = vpop.f32.mrb[0].mxu0
        %v3134 = vadd.f32 0.0, %v3133
        %v3135 = vpop.f32.mrb[0].mxu0
        %3136 = vmatprep.mubr.bf16.mxu0 0
        %3137 = vmatmul.mubr.bf16.gmra.mrb[0].mxu0 %v2841
        %v3138 = vpop.f32.mrb[0].mxu0
        %v3139 = vadd.f32 0.0, %v3138
        %v3140 = vpop.f32.mrb[0].mxu0
        %v3141 = vpop.f32.mrb[0].mxu0
        %v3142 = vadd.f32 0.0, %v3141
        %v3143 = vpop.f32.mrb[0].mxu0
        %3144 = vmatprep.mubr.bf16.mxu0 0
        %3145 = vmatmul.mubr.bf16.gmra.mrb[0].mxu0 %v2842
        %v3146 = vpop.f32.mrb[0].mxu0
        %v3147 = vadd.f32 0.0, %v3146
        %v3148 = vpop.f32.mrb[0].mxu0
        %v3149 = vpop.f32.mrb[0].mxu0
        %v3150 = vadd.f32 0.0, %v3149
        %v3151 = vpop.f32.mrb[0].mxu0
        %3152 = vmatprep.mubr.bf16.mxu0 0
        %3153 = vmatmul.mubr.bf16.gmra.mrb[0].mxu0 %v2843
        %v3154 = vpop.f32.mrb[0].mxu0
        %v3155 = vadd.f32 0.0, %v3154
        %v3156 = vpop.f32.mrb[0].mxu0
        %v3157 = vpop.f32.mrb[0].mxu0
        %v3158 = vadd.f32 0.0, %v3157
        %v3159 = vpop.f32.mrb[0].mxu0
        %3160 = vmatprep.mubr.bf16.mxu0 0
        %3161 = vmatmul.mubr.bf16.gmra.mrb[0].mxu0 %v2844
        %v3162 = vpop.f32.mrb[0].mxu0
        %v3163 = vadd.f32 0.0, %v3162
        %v3164 = vpop.f32.mrb[0].mxu0
        %v3165 = vpop.f32.mrb[0].mxu0
        %v3166 = vadd.f32 0.0, %v3165
        %v3167 = vpop.f32.mrb[0].mxu0
        %3168 = vmatprep.mubr.bf16.mxu0 0
        %3169 = vmatmul.mubr.bf16.gmra.mrb[0].mxu0 %v2845
        %v3170 = vpop.f32.mrb[0].mxu0
        %v3171 = vadd.f32 0.0, %v3170
        %v3172 = vpop.f32.mrb[0].mxu0
        %v3173 = vpop.f32.mrb[0].mxu0
        %v3174 = vadd.f32 0.0, %v3173
        %v3175 = vpop.f32.mrb[0].mxu0
        %3176 = vdwg.mxu0
        %v3177 = vadd.f32 %v3047, %v3131
        %v3178 = vadd.f32 %v3046, %v3134
        %v3179 = vadd.f32 %v3045, %v3139
        %v3180 = vadd.f32 %v3044, %v3142
        %v3181 = vadd.f32 %v3043, %v3147
        %v3182 = vadd.f32 %v3042, %v3150
        %v3183 = vadd.f32 %v3041, %v3155
        %v3184 = vadd.f32 %v3040, %v3158
        %v3185 = vadd.f32 %v3039, %v3163
        %v3186 = vadd.f32 %v3038, %v3166
        %v3187 = vadd.f32 %v3037, %v3171
        %v3188 = vadd.f32 %v3036, %v3174
        %v3205 = vunpack.c.l.b16 %v2879
        %v3206 = vunpack.c.l.b16 %v2880
        %v3207 = vunpack.c.l.b16 %v2881
        %v3208 = vunpack.c.l.b16 %v2882
        %v3209 = vunpack.c.l.b16 %v2883
        %v3210 = vunpack.c.l.b16 %v2884
        %v3211 = vunpack.c.l.b16 %v2885
        %v3212 = vunpack.c.l.b16 %v2886
        %v3213 = vunpack.c.l.b16 %v2887
        %v3214 = vunpack.c.l.b16 %v2888
        %v3215 = vunpack.c.l.b16 %v2889
        %v3216 = vunpack.c.l.b16 %v2890
        %v3217 = vunpack.c.l.b16 %v2891
        %v3218 = vunpack.c.l.b16 %v2892
        %v3219 = vunpack.c.l.b16 %v2893
        %v3220 = vunpack.c.l.b16 %v2894
        %v3221 = vpack.c.b16 %v3206, %v3205
        %v3222 = vpack.c.b16 %v3208, %v3207
        %v3223 = vpack.c.b16 %v3210, %v3209
        %v3224 = vpack.c.b16 %v3212, %v3211
        %v3225 = vpack.c.b16 %v3214, %v3213
        %v3226 = vpack.c.b16 %v3216, %v3215
        %v3227 = vpack.c.b16 %v3218, %v3217
        %v3228 = vpack.c.b16 %v3220, %v3219
        %3237 = vmatprep.subr.bf16.mxu0 0
        %3238 = vmatpush1.bf16.msra.mxu0 %v3221
        %3239 = vmatprep.subr.bf16.mxu0 0
        %3240 = vmatpush1.bf16.msra.mxu0 %v3222
        %3241 = vmatprep.subr.bf16.mxu0 0
        %3242 = vmatpush1.bf16.msra.mxu0 %v3223
        %3243 = vmatprep.subr.bf16.mxu0 0
        %3244 = vmatpush1.bf16.msra.mxu0 %v3224
        %3245 = vmatprep.subr.bf16.mxu0 0
        %3246 = vmatpush1.bf16.msra.mxu0 %v3225
        %3247 = vmatprep.subr.bf16.mxu0 0
        %3248 = vmatpush1.bf16.msra.mxu0 %v3226
        %3249 = vmatprep.subr.bf16.mxu0 0
        %3250 = vmatpush1.bf16.msra.mxu0 %v3227
        %3251 = vmatprep.subr.bf16.mxu0 0
        %3252 = vmatpush1.bf16.msra.mxu0 %v3228
        %3253 = vmatprep.subr.bf16.mxu0 0
        %3254 = vmatpush1.bf16.msra.mxu0 0
        %3255 = vmatprep.subr.bf16.mxu0 0
        %3256 = vmatpush1.bf16.msra.mxu0 0
        %3257 = vmatprep.subr.bf16.mxu0 0
        %3258 = vmatpush1.bf16.msra.mxu0 0
        %3259 = vmatprep.subr.bf16.mxu0 0
        %3260 = vmatpush1.bf16.msra.mxu0 0
        %3261 = vmatprep.subr.bf16.mxu0 0
        %3262 = vmatpush1.bf16.msra.mxu0 0
        %3263 = vmatprep.subr.bf16.mxu0 0
        %3264 = vmatpush1.bf16.msra.mxu0 0
        %3265 = vmatprep.subr.bf16.mxu0 0
        %3266 = vmatpush1.bf16.msra.mxu0 0
        %3267 = vmatprep.subr.bf16.mxu0 0
        %3268 = vmatpush1.bf16.msra.mxu0 0
        %3269 = vmatprep.mubr.bf16.mxu0 0
        %3270 = vmatmul.mubr.bf16.gmra.mrb[0].mxu0 %v2840
        %v3271 = vpop.f32.mrb[0].mxu0
        %v3272 = vadd.f32 0.0, %v3271
        %v3273 = vpop.f32.mrb[0].mxu0
        %v3274 = vpop.f32.mrb[0].mxu0
        %v3275 = vadd.f32 0.0, %v3274
        %v3276 = vpop.f32.mrb[0].mxu0
        %3277 = vmatprep.mubr.bf16.mxu0 0
        %3278 = vmatmul.mubr.bf16.gmra.mrb[0].mxu0 %v2841
        %v3279 = vpop.f32.mrb[0].mxu0
        %v3280 = vadd.f32 0.0, %v3279
        %v3281 = vpop.f32.mrb[0].mxu0
        %v3282 = vpop.f32.mrb[0].mxu0
        %v3283 = vadd.f32 0.0, %v3282
        %v3284 = vpop.f32.mrb[0].mxu0
        %3285 = vmatprep.mubr.bf16.mxu0 0
        %3286 = vmatmul.mubr.bf16.gmra.mrb[0].mxu0 %v2842
        %v3287 = vpop.f32.mrb[0].mxu0
        %v3288 = vadd.f32 0.0, %v3287
        %v3289 = vpop.f32.mrb[0].mxu0
        %v3290 = vpop.f32.mrb[0].mxu0
        %v3291 = vadd.f32 0.0, %v3290
        %v3292 = vpop.f32.mrb[0].mxu0
        %3293 = vmatprep.mubr.bf16.mxu0 0
        %3294 = vmatmul.mubr.bf16.gmra.mrb[0].mxu0 %v2843
        %v3295 = vpop.f32.mrb[0].mxu0
        %v3296 = vadd.f32 0.0, %v3295
        %v3297 = vpop.f32.mrb[0].mxu0
        %v3298 = vpop.f32.mrb[0].mxu0
        %v3299 = vadd.f32 0.0, %v3298
        %v3300 = vpop.f32.mrb[0].mxu0
        %3301 = vmatprep.mubr.bf16.mxu0 0
        %3302 = vmatmul.mubr.bf16.gmra.mrb[0].mxu0 %v2844
        %v3303 = vpop.f32.mrb[0].mxu0
        %v3304 = vadd.f32 0.0, %v3303
        %v3305 = vpop.f32.mrb[0].mxu0
        %v3306 = vpop.f32.mrb[0].mxu0
        %v3307 = vadd.f32 0.0, %v3306
        %v3308 = vpop.f32.mrb[0].mxu0
        %3309 = vmatprep.mubr.bf16.mxu0 0
        %3310 = vmatmul.mubr.bf16.gmra.mrb[0].mxu0 %v2845
        %v3311 = vpop.f32.mrb[0].mxu0
        %v3312 = vadd.f32 0.0, %v3311
        %v3313 = vpop.f32.mrb[0].mxu0
        %v3314 = vpop.f32.mrb[0].mxu0
        %v3315 = vadd.f32 0.0, %v3314
        %v3316 = vpop.f32.mrb[0].mxu0
        %3317 = vdwg.mxu0
        %v3318 = vrot.slane %v3272, 5
        %v3319 = vrot.slane %v3275, 5
        %v3320 = vrot.slane %v3280, 5
        %v3321 = vrot.slane %v3283, 5
        %v3322 = vrot.slane %v3288, 5
        %v3323 = vrot.slane %v3291, 5
        %v3324 = vrot.slane %v3296, 5
        %v3325 = vrot.slane %v3299, 5
        %v3326 = vrot.slane %v3304, 5
        %v3327 = vrot.slane %v3307, 5
        %v3328 = vrot.slane %v3312, 5
        %v3329 = vrot.slane %v3315, 5
        %v3330 = vsel %vm1882, %v3328, %v3329
        %v3331 = vsel %vm1882, %v3327, %v3328
        %v3332 = vsel %vm1882, %v3326, %v3327
        %v3333 = vsel %vm1882, %v3325, %v3326
        %v3334 = vsel %vm1882, %v3324, %v3325
        %v3335 = vsel %vm1882, %v3323, %v3324
        %v3336 = vsel %vm1882, %v3322, %v3323
        %v3337 = vsel %vm1882, %v3321, %v3322
        %v3338 = vsel %vm1882, %v3320, %v3321
        %v3339 = vsel %vm1882, %v3319, %v3320
        %v3340 = vsel %vm1882, %v3318, %v3319
        %v3341 = vsel %vm1882, %v3329, %v3318
        %v3342 = vadd.f32 %v3177, %v3340
        %v3343 = vadd.f32 %v3178, %v3339
        %v3344 = vadd.f32 %v3179, %v3338
        %v3345 = vadd.f32 %v3180, %v3337
        %v3346 = vadd.f32 %v3181, %v3336
        %v3347 = vadd.f32 %v3182, %v3335
        %v3348 = vadd.f32 %v3183, %v3334
        %v3349 = vadd.f32 %v3184, %v3333
        %v3350 = vadd.f32 %v3185, %v3332
        %v3351 = vadd.f32 %v3186, %v3331
        %v3352 = vadd.f32 %v3187, %v3330
        %v3353 = vadd.f32 %v3188, %v3341
        %s3354 = scalar_lea.vmem %s4, 4
        %v3355 = vld [vmem:[%s3354] sm:$0x1]
        %v3357 = vlaneseq
        %v3358 = vshrl.u32 %v3357, 7
        %v3359 = vsub.s32 0, %v3358
        %v3360 = vrot.slane %v3355, %v3359
        %v3362 = vadd.f32 %v3342, %v3360
        %v3363 = vadd.f32 %v3343, %v3360
        %v3364 = vadd.f32 %v3344, %v3360
        %v3365 = vadd.f32 %v3345, %v3360
        %v3366 = vadd.f32 %v3346, %v3360
        %v3367 = vadd.f32 %v3347, %v3360
        %v3368 = vadd.f32 %v3348, %v3360
        %v3369 = vadd.f32 %v3349, %v3360
        %v3370 = vadd.f32 %v3350, %v3360
        %v3371 = vadd.f32 %v3351, %v3360
        %v3372 = vadd.f32 %v3352, %v3360
        %v3373 = vadd.f32 %v3353, %v3360
        %v3374 = vsel %vm486, %v3362, 0.0
        %v3375 = vsel %vm487, %v3363, 0.0
        %v3376 = vsel %vm488, %v3364, 0.0
        %v3377 = vsel %vm489, %v3365, 0.0
        %v3378 = vsel %vm490, %v3366, 0.0
        %v3379 = vsel %vm491, %v3367, 0.0
        %v3380 = vsel %vm492, %v3368, 0.0
        %v3381 = vsel %vm493, %v3369, 0.0
        %v3382 = vsel %vm494, %v3370, 0.0
        %v3383 = vsel %vm495, %v3371, 0.0
        %v3384 = vsel %vm496, %v3372, 0.0
        %v3385 = vsel %vm497, %v3373, 0.0
        %v3386 = vmul.f32 %v3374, 0.01
        %v3387 = vmul.f32 %v3375, 0.01
        %v3388 = vmul.f32 %v3376, 0.01
        %v3389 = vmul.f32 %v3377, 0.01
        %v3390 = vmul.f32 %v3378, 0.01
        %v3391 = vmul.f32 %v3379, 0.01
        %v3392 = vmul.f32 %v3380, 0.01
        %v3393 = vmul.f32 %v3381, 0.01
        %v3394 = vmul.f32 %v3382, 0.01
        %v3395 = vmul.f32 %v3383, 0.01
        %v3396 = vmul.f32 %v3384, 0.01
        %v3397 = vmul.f32 %v3385, 0.01
        %v3398 = vmax.f32 %v3374, %v3386
        %v3399 = vmax.f32 %v3375, %v3387
        %v3400 = vmax.f32 %v3376, %v3388
        %v3401 = vmax.f32 %v3377, %v3389
        %v3402 = vmax.f32 %v3378, %v3390
        %v3403 = vmax.f32 %v3379, %v3391
        %v3404 = vmax.f32 %v3380, %v3392
        %v3405 = vmax.f32 %v3381, %v3393
        %v3406 = vmax.f32 %v3382, %v3394
        %v3407 = vmax.f32 %v3383, %v3395
        %v3408 = vmax.f32 %v3384, %v3396
        %v3409 = vmax.f32 %v3385, %v3397
        %v3410 = vpack.c.bf16 %v3399, %v3398
        %v3411 = vpack.c.bf16 %v3401, %v3400
        %v3412 = vpack.c.bf16 %v3403, %v3402
        %v3413 = vpack.c.bf16 %v3405, %v3404
        %v3414 = vpack.c.bf16 %v3407, %v3406
        %v3415 = vpack.c.bf16 %v3409, %v3408
        %s3416 = scalar_lea.vmem [#allocation8], 960
        %v3417 = vld [vmem:[%s3416] sm:$0xf]
        %v3418 = vld [vmem:[%s3416 + $0x4] sm:$0xf]
        %v3419 = vld [vmem:[%s3416 + $0x8] sm:$0xf]
        %v3420 = vld [vmem:[%s3416 + $0xc] sm:$0xf]
        %v3421 = vld [vmem:[%s3416 + $0x10] sm:$0xf]
        %v3422 = vld [vmem:[%s3416 + $0x14] sm:$0xf]
        %v3423 = vld [vmem:[%s3416 + $0x18] sm:$0xf]
        %v3424 = vld [vmem:[%s3416 + $0x1c] sm:$0xf]
        %v3425 = vld [vmem:[%s3416 + $0x20] sm:$0xf]
        %v3426 = vld [vmem:[%s3416 + $0x24] sm:$0xf]
        %v3427 = vld [vmem:[%s3416 + $0x28] sm:$0xf]
        %v3428 = vld [vmem:[%s3416 + $0x2c] sm:$0xf]
        %v3429 = vld [vmem:[%s3416 + $0x30] sm:$0xf]
        %v3430 = vld [vmem:[%s3416 + $0x34] sm:$0xf]
        %v3431 = vld [vmem:[%s3416 + $0x38] sm:$0xf]
        %v3432 = vld [vmem:[%s3416 + $0x3c] sm:$0xf]
        %v3433 = vld [vmem:[%s3416 + $0x40] sm:$0xf]
        %v3434 = vld [vmem:[%s3416 + $0x44] sm:$0xf]
        %v3435 = vld [vmem:[%s3416 + $0x48] sm:$0xf]
        %v3436 = vld [vmem:[%s3416 + $0x4c] sm:$0xf]
        %v3437 = vld [vmem:[%s3416 + $0x50] sm:$0xf]
        %v3438 = vld [vmem:[%s3416 + $0x54] sm:$0xf]
        %v3439 = vld [vmem:[%s3416 + $0x58] sm:$0xf]
        %v3440 = vld [vmem:[%s3416 + $0x5c] sm:$0xf]
        %v3441 = vld [vmem:[%s3416 + $0x60] sm:$0xf]
        %v3442 = vld [vmem:[%s3416 + $0x64] sm:$0xf]
        %v3443 = vld [vmem:[%s3416 + $0x68] sm:$0xf]
        %v3444 = vld [vmem:[%s3416 + $0x6c] sm:$0xf]
        %v3445 = vld [vmem:[%s3416 + $0x70] sm:$0xf]
        %v3446 = vld [vmem:[%s3416 + $0x74] sm:$0xf]
        %v3447 = vld [vmem:[%s3416 + $0x78] sm:$0xf]
        %v3448 = vld [vmem:[%s3416 + $0x7c] sm:$0xf]
        %v3449 = vld [vmem:[%s3416 + $0x80] sm:$0xf]
        %v3450 = vld [vmem:[%s3416 + $0x84] sm:$0xf]
        %v3451 = vld [vmem:[%s3416 + $0x88] sm:$0xf]
        %v3452 = vld [vmem:[%s3416 + $0x8c] sm:$0xf]
        %v3453 = vld [vmem:[%s3416 + $0x90] sm:$0xf]
        %v3454 = vld [vmem:[%s3416 + $0x94] sm:$0xf]
        %v3455 = vld [vmem:[%s3416 + $0x98] sm:$0xf]
        %v3456 = vld [vmem:[%s3416 + $0x9c] sm:$0xf]
        %v3457 = vld [vmem:[%s3416 + $0xa0] sm:$0xf]
        %v3458 = vld [vmem:[%s3416 + $0xa4] sm:$0xf]
        %v3459 = vld [vmem:[%s3416 + $0xa8] sm:$0xf]
        %v3460 = vld [vmem:[%s3416 + $0xac] sm:$0xf]
        %v3461 = vld [vmem:[%s3416 + $0xb0] sm:$0xf]
        %v3462 = vld [vmem:[%s3416 + $0xb4] sm:$0xf]
        %v3463 = vld [vmem:[%s3416 + $0xb8] sm:$0xf]
        %v3464 = vld [vmem:[%s3416 + $0xbc] sm:$0xf]
        %v3481 = vunpack.c.l.b16 %v3417
        %v3482 = vunpack.c.l.b16 %v3418
        %v3483 = vunpack.c.l.b16 %v3419
        %v3484 = vunpack.c.l.b16 %v3420
        %v3485 = vunpack.c.l.b16 %v3421
        %v3486 = vunpack.c.l.b16 %v3422
        %v3487 = vunpack.c.l.b16 %v3423
        %v3488 = vunpack.c.l.b16 %v3424
        %v3489 = vunpack.c.l.b16 %v3425
        %v3490 = vunpack.c.l.b16 %v3426
        %v3491 = vunpack.c.l.b16 %v3427
        %v3492 = vunpack.c.l.b16 %v3428
        %v3493 = vunpack.c.l.b16 %v3429
        %v3494 = vunpack.c.l.b16 %v3430
        %v3495 = vunpack.c.l.b16 %v3431
        %v3496 = vunpack.c.l.b16 %v3432
        %v3497 = vpack.c.b16 %v3482, %v3481
        %v3498 = vpack.c.b16 %v3484, %v3483
        %v3499 = vpack.c.b16 %v3486, %v3485
        %v3500 = vpack.c.b16 %v3488, %v3487
        %v3501 = vpack.c.b16 %v3490, %v3489
        %v3502 = vpack.c.b16 %v3492, %v3491
        %v3503 = vpack.c.b16 %v3494, %v3493
        %v3504 = vpack.c.b16 %v3496, %v3495
        %3513 = vmatprep.subr.bf16.mxu0 0
        %3514 = vmatpush1.bf16.msra.mxu0 %v3497
        %3515 = vmatprep.subr.bf16.mxu0 0
        %3516 = vmatpush1.bf16.msra.mxu0 %v3498
        %3517 = vmatprep.subr.bf16.mxu0 0
        %3518 = vmatpush1.bf16.msra.mxu0 %v3499
        %3519 = vmatprep.subr.bf16.mxu0 0
        %3520 = vmatpush1.bf16.msra.mxu0 %v3500
        %3521 = vmatprep.subr.bf16.mxu0 0
        %3522 = vmatpush1.bf16.msra.mxu0 %v3501
        %3523 = vmatprep.subr.bf16.mxu0 0
        %3524 = vmatpush1.bf16.msra.mxu0 %v3502
        %3525 = vmatprep.subr.bf16.mxu0 0
        %3526 = vmatpush1.bf16.msra.mxu0 %v3503
        %3527 = vmatprep.subr.bf16.mxu0 0
        %3528 = vmatpush1.bf16.msra.mxu0 %v3504
        %3529 = vmatprep.subr.bf16.mxu0 0
        %3530 = vmatpush1.bf16.msra.mxu0 0
        %3531 = vmatprep.subr.bf16.mxu0 0
        %3532 = vmatpush1.bf16.msra.mxu0 0
        %3533 = vmatprep.subr.bf16.mxu0 0
        %3534 = vmatpush1.bf16.msra.mxu0 0
        %3535 = vmatprep.subr.bf16.mxu0 0
        %3536 = vmatpush1.bf16.msra.mxu0 0
        %3537 = vmatprep.subr.bf16.mxu0 0
        %3538 = vmatpush1.bf16.msra.mxu0 0
        %3539 = vmatprep.subr.bf16.mxu0 0
        %3540 = vmatpush1.bf16.msra.mxu0 0
        %3541 = vmatprep.subr.bf16.mxu0 0
        %3542 = vmatpush1.bf16.msra.mxu0 0
        %3543 = vmatprep.subr.bf16.mxu0 0
        %3544 = vmatpush1.bf16.msra.mxu0 0
        %3545 = vmatprep.mubr.bf16.mxu0 0
        %3546 = vmatmul.mubr.bf16.gmra.mrb[0].mxu0 %v3410
        %v3547 = vpop.f32.mrb[0].mxu0
        %v3548 = vpop.f32.mrb[0].mxu0
        %v3549 = vpop.f32.mrb[0].mxu0
        %v3550 = vadd.f32 0.0, %v3549
        %v3551 = vpop.f32.mrb[0].mxu0
        %3552 = vmatprep.mubr.bf16.mxu0 0
        %3553 = vmatmul.mubr.bf16.gmra.mrb[0].mxu0 %v3411
        %v3554 = vpop.f32.mrb[0].mxu0
        %v3555 = vadd.f32 0.0, %v3554
        %v3556 = vpop.f32.mrb[0].mxu0
        %v3557 = vpop.f32.mrb[0].mxu0
        %v3558 = vadd.f32 0.0, %v3557
        %v3559 = vpop.f32.mrb[0].mxu0
        %3560 = vmatprep.mubr.bf16.mxu0 0
        %3561 = vmatmul.mubr.bf16.gmra.mrb[0].mxu0 %v3412
        %v3562 = vpop.f32.mrb[0].mxu0
        %v3563 = vadd.f32 0.0, %v3562
        %v3564 = vpop.f32.mrb[0].mxu0
        %v3565 = vpop.f32.mrb[0].mxu0
        %v3566 = vadd.f32 0.0, %v3565
        %v3567 = vpop.f32.mrb[0].mxu0
        %3568 = vmatprep.mubr.bf16.mxu0 0
        %3569 = vmatmul.mubr.bf16.gmra.mrb[0].mxu0 %v3413
        %v3570 = vpop.f32.mrb[0].mxu0
        %v3571 = vadd.f32 0.0, %v3570
        %v3572 = vpop.f32.mrb[0].mxu0
        %v3573 = vpop.f32.mrb[0].mxu0
        %v3574 = vadd.f32 0.0, %v3573
        %v3575 = vpop.f32.mrb[0].mxu0
        %3576 = vmatprep.mubr.bf16.mxu0 0
        %3577 = vmatmul.mubr.bf16.gmra.mrb[0].mxu0 %v3414
        %v3578 = vpop.f32.mrb[0].mxu0
        %v3579 = vadd.f32 0.0, %v3578
        %v3580 = vpop.f32.mrb[0].mxu0
        %v3581 = vpop.f32.mrb[0].mxu0
        %v3582 = vadd.f32 0.0, %v3581
        %v3583 = vpop.f32.mrb[0].mxu0
        %3584 = vmatprep.mubr.bf16.mxu0 0
        %3585 = vmatmul.mubr.bf16.gmra.mrb[0].mxu0 %v3415
        %v3586 = vpop.f32.mrb[0].mxu0
        %v3587 = vpop.f32.mrb[0].mxu0
        %v3588 = vpop.f32.mrb[0].mxu0
        %v3589 = vpop.f32.mrb[0].mxu0
        %3590 = vdwg.mxu0
        %v3591 = vrot.slane %v3550, 7
        %v3592 = vrot.slane %v3555, 7
        %v3593 = vrot.slane %v3558, 7
        %v3594 = vrot.slane %v3563, 7
        %v3595 = vrot.slane %v3566, 7
        %v3596 = vrot.slane %v3571, 7
        %v3597 = vrot.slane %v3574, 7
        %v3598 = vrot.slane %v3579, 7
        %v3599 = vrot.slane %v3582, 7
        %v3600 = vsel %vm729, %v3598, %v3599
        %v3601 = vsel %vm729, %v3597, %v3598
        %v3602 = vsel %vm729, %v3596, %v3597
        %v3603 = vsel %vm729, %v3595, %v3596
        %v3604 = vsel %vm729, %v3594, %v3595
        %v3605 = vsel %vm729, %v3593, %v3594
        %v3606 = vsel %vm729, %v3592, %v3593
        %v3607 = vsel %vm729, %v3591, %v3592
        %v3624 = vunpack.c.l.b16 %v3433
        %v3625 = vunpack.c.l.b16 %v3434
        %v3626 = vunpack.c.l.b16 %v3435
        %v3627 = vunpack.c.l.b16 %v3436
        %v3628 = vunpack.c.l.b16 %v3437
        %v3629 = vunpack.c.l.b16 %v3438
        %v3630 = vunpack.c.l.b16 %v3439
        %v3631 = vunpack.c.l.b16 %v3440
        %v3632 = vunpack.c.l.b16 %v3441
        %v3633 = vunpack.c.l.b16 %v3442
        %v3634 = vunpack.c.l.b16 %v3443
        %v3635 = vunpack.c.l.b16 %v3444
        %v3636 = vunpack.c.l.b16 %v3445
        %v3637 = vunpack.c.l.b16 %v3446
        %v3638 = vunpack.c.l.b16 %v3447
        %v3639 = vunpack.c.l.b16 %v3448
        %v3640 = vpack.c.b16 %v3625, %v3624
        %v3641 = vpack.c.b16 %v3627, %v3626
        %v3642 = vpack.c.b16 %v3629, %v3628
        %v3643 = vpack.c.b16 %v3631, %v3630
        %v3644 = vpack.c.b16 %v3633, %v3632
        %v3645 = vpack.c.b16 %v3635, %v3634
        %v3646 = vpack.c.b16 %v3637, %v3636
        %v3647 = vpack.c.b16 %v3639, %v3638
        %3656 = vmatprep.subr.bf16.mxu0 0
        %3657 = vmatpush1.bf16.msra.mxu0 %v3640
        %3658 = vmatprep.subr.bf16.mxu0 0
        %3659 = vmatpush1.bf16.msra.mxu0 %v3641
        %3660 = vmatprep.subr.bf16.mxu0 0
        %3661 = vmatpush1.bf16.msra.mxu0 %v3642
        %3662 = vmatprep.subr.bf16.mxu0 0
        %3663 = vmatpush1.bf16.msra.mxu0 %v3643
        %3664 = vmatprep.subr.bf16.mxu0 0
        %3665 = vmatpush1.bf16.msra.mxu0 %v3644
        %3666 = vmatprep.subr.bf16.mxu0 0
        %3667 = vmatpush1.bf16.msra.mxu0 %v3645
        %3668 = vmatprep.subr.bf16.mxu0 0
        %3669 = vmatpush1.bf16.msra.mxu0 %v3646
        %3670 = vmatprep.subr.bf16.mxu0 0
        %3671 = vmatpush1.bf16.msra.mxu0 %v3647
        %3672 = vmatprep.subr.bf16.mxu0 0
        %3673 = vmatpush1.bf16.msra.mxu0 0
        %3674 = vmatprep.subr.bf16.mxu0 0
        %3675 = vmatpush1.bf16.msra.mxu0 0
        %3676 = vmatprep.subr.bf16.mxu0 0
        %3677 = vmatpush1.bf16.msra.mxu0 0
        %3678 = vmatprep.subr.bf16.mxu0 0
        %3679 = vmatpush1.bf16.msra.mxu0 0
        %3680 = vmatprep.subr.bf16.mxu0 0
        %3681 = vmatpush1.bf16.msra.mxu0 0
        %3682 = vmatprep.subr.bf16.mxu0 0
        %3683 = vmatpush1.bf16.msra.mxu0 0
        %3684 = vmatprep.subr.bf16.mxu0 0
        %3685 = vmatpush1.bf16.msra.mxu0 0
        %3686 = vmatprep.subr.bf16.mxu0 0
        %3687 = vmatpush1.bf16.msra.mxu0 0
        %3688 = vmatprep.mubr.bf16.mxu0 0
        %3689 = vmatmul.mubr.bf16.gmra.mrb[0].mxu0 %v3410
        %v3690 = vpop.f32.mrb[0].mxu0
        %v3691 = vpop.f32.mrb[0].mxu0
        %v3692 = vpop.f32.mrb[0].mxu0
        %v3693 = vpop.f32.mrb[0].mxu0
        %3694 = vmatprep.mubr.bf16.mxu0 0
        %3695 = vmatmul.mubr.bf16.gmra.mrb[0].mxu0 %v3411
        %v3696 = vpop.f32.mrb[0].mxu0
        %v3697 = vadd.f32 0.0, %v3696
        %v3698 = vpop.f32.mrb[0].mxu0
        %v3699 = vpop.f32.mrb[0].mxu0
        %v3700 = vadd.f32 0.0, %v3699
        %v3701 = vpop.f32.mrb[0].mxu0
        %3702 = vmatprep.mubr.bf16.mxu0 0
        %3703 = vmatmul.mubr.bf16.gmra.mrb[0].mxu0 %v3412
        %v3704 = vpop.f32.mrb[0].mxu0
        %v3705 = vadd.f32 0.0, %v3704
        %v3706 = vpop.f32.mrb[0].mxu0
        %v3707 = vpop.f32.mrb[0].mxu0
        %v3708 = vadd.f32 0.0, %v3707
        %v3709 = vpop.f32.mrb[0].mxu0
        %3710 = vmatprep.mubr.bf16.mxu0 0
        %3711 = vmatmul.mubr.bf16.gmra.mrb[0].mxu0 %v3413
        %v3712 = vpop.f32.mrb[0].mxu0
        %v3713 = vadd.f32 0.0, %v3712
        %v3714 = vpop.f32.mrb[0].mxu0
        %v3715 = vpop.f32.mrb[0].mxu0
        %v3716 = vadd.f32 0.0, %v3715
        %v3717 = vpop.f32.mrb[0].mxu0
        %3718 = vmatprep.mubr.bf16.mxu0 0
        %3719 = vmatmul.mubr.bf16.gmra.mrb[0].mxu0 %v3414
        %v3720 = vpop.f32.mrb[0].mxu0
        %v3721 = vadd.f32 0.0, %v3720
        %v3722 = vpop.f32.mrb[0].mxu0
        %v3723 = vpop.f32.mrb[0].mxu0
        %v3724 = vadd.f32 0.0, %v3723
        %v3725 = vpop.f32.mrb[0].mxu0
        %3726 = vmatprep.mubr.bf16.mxu0 0
        %3727 = vmatmul.mubr.bf16.gmra.mrb[0].mxu0 %v3415
        %v3728 = vpop.f32.mrb[0].mxu0
        %v3729 = vpop.f32.mrb[0].mxu0
        %v3730 = vpop.f32.mrb[0].mxu0
        %v3731 = vpop.f32.mrb[0].mxu0
        %3732 = vdwg.mxu0
        %v3733 = vadd.f32 %v3607, %v3697
        %v3734 = vadd.f32 %v3606, %v3700
        %v3735 = vadd.f32 %v3605, %v3705
        %v3736 = vadd.f32 %v3604, %v3708
        %v3737 = vadd.f32 %v3603, %v3713
        %v3738 = vadd.f32 %v3602, %v3716
        %v3739 = vadd.f32 %v3601, %v3721
        %v3740 = vadd.f32 %v3600, %v3724
        %v3757 = vunpack.c.l.b16 %v3449
        %v3758 = vunpack.c.l.b16 %v3450
        %v3759 = vunpack.c.l.b16 %v3451
        %v3760 = vunpack.c.l.b16 %v3452
        %v3761 = vunpack.c.l.b16 %v3453
        %v3762 = vunpack.c.l.b16 %v3454
        %v3763 = vunpack.c.l.b16 %v3455
        %v3764 = vunpack.c.l.b16 %v3456
        %v3765 = vunpack.c.l.b16 %v3457
        %v3766 = vunpack.c.l.b16 %v3458
        %v3767 = vunpack.c.l.b16 %v3459
        %v3768 = vunpack.c.l.b16 %v3460
        %v3769 = vunpack.c.l.b16 %v3461
        %v3770 = vunpack.c.l.b16 %v3462
        %v3771 = vunpack.c.l.b16 %v3463
        %v3772 = vunpack.c.l.b16 %v3464
        %v3773 = vpack.c.b16 %v3758, %v3757
        %v3774 = vpack.c.b16 %v3760, %v3759
        %v3775 = vpack.c.b16 %v3762, %v3761
        %v3776 = vpack.c.b16 %v3764, %v3763
        %v3777 = vpack.c.b16 %v3766, %v3765
        %v3778 = vpack.c.b16 %v3768, %v3767
        %v3779 = vpack.c.b16 %v3770, %v3769
        %v3780 = vpack.c.b16 %v3772, %v3771
        %3789 = vmatprep.subr.bf16.mxu0 0
        %3790 = vmatpush1.bf16.msra.mxu0 %v3773
        %3791 = vmatprep.subr.bf16.mxu0 0
        %3792 = vmatpush1.bf16.msra.mxu0 %v3774
        %3793 = vmatprep.subr.bf16.mxu0 0
        %3794 = vmatpush1.bf16.msra.mxu0 %v3775
        %3795 = vmatprep.subr.bf16.mxu0 0
        %3796 = vmatpush1.bf16.msra.mxu0 %v3776
        %3797 = vmatprep.subr.bf16.mxu0 0
        %3798 = vmatpush1.bf16.msra.mxu0 %v3777
        %3799 = vmatprep.subr.bf16.mxu0 0
        %3800 = vmatpush1.bf16.msra.mxu0 %v3778
        %3801 = vmatprep.subr.bf16.mxu0 0
        %3802 = vmatpush1.bf16.msra.mxu0 %v3779
        %3803 = vmatprep.subr.bf16.mxu0 0
        %3804 = vmatpush1.bf16.msra.mxu0 %v3780
        %3805 = vmatprep.subr.bf16.mxu0 0
        %3806 = vmatpush1.bf16.msra.mxu0 0
        %3807 = vmatprep.subr.bf16.mxu0 0
        %3808 = vmatpush1.bf16.msra.mxu0 0
        %3809 = vmatprep.subr.bf16.mxu0 0
        %3810 = vmatpush1.bf16.msra.mxu0 0
        %3811 = vmatprep.subr.bf16.mxu0 0
        %3812 = vmatpush1.bf16.msra.mxu0 0
        %3813 = vmatprep.subr.bf16.mxu0 0
        %3814 = vmatpush1.bf16.msra.mxu0 0
        %3815 = vmatprep.subr.bf16.mxu0 0
        %3816 = vmatpush1.bf16.msra.mxu0 0
        %3817 = vmatprep.subr.bf16.mxu0 0
        %3818 = vmatpush1.bf16.msra.mxu0 0
        %3819 = vmatprep.subr.bf16.mxu0 0
        %3820 = vmatpush1.bf16.msra.mxu0 0
        %3821 = vmatprep.mubr.bf16.mxu0 0
        %3822 = vmatmul.mubr.bf16.gmra.mrb[0].mxu0 %v3410
        %v3823 = vpop.f32.mrb[0].mxu0
        %v3824 = vpop.f32.mrb[0].mxu0
        %v3825 = vpop.f32.mrb[0].mxu0
        %v3826 = vpop.f32.mrb[0].mxu0
        %3827 = vmatprep.mubr.bf16.mxu0 0
        %3828 = vmatmul.mubr.bf16.gmra.mrb[0].mxu0 %v3411
        %v3829 = vpop.f32.mrb[0].mxu0
        %v3830 = vadd.f32 0.0, %v3829
        %v3831 = vpop.f32.mrb[0].mxu0
        %v3832 = vpop.f32.mrb[0].mxu0
        %v3833 = vadd.f32 0.0, %v3832
        %v3834 = vpop.f32.mrb[0].mxu0
        %3835 = vmatprep.mubr.bf16.mxu0 0
        %3836 = vmatmul.mubr.bf16.gmra.mrb[0].mxu0 %v3412
        %v3837 = vpop.f32.mrb[0].mxu0
        %v3838 = vadd.f32 0.0, %v3837
        %v3839 = vpop.f32.mrb[0].mxu0
        %v3840 = vpop.f32.mrb[0].mxu0
        %v3841 = vadd.f32 0.0, %v3840
        %v3842 = vpop.f32.mrb[0].mxu0
        %3843 = vmatprep.mubr.bf16.mxu0 0
        %3844 = vmatmul.mubr.bf16.gmra.mrb[0].mxu0 %v3413
        %v3845 = vpop.f32.mrb[0].mxu0
        %v3846 = vadd.f32 0.0, %v3845
        %v3847 = vpop.f32.mrb[0].mxu0
        %v3848 = vpop.f32.mrb[0].mxu0
        %v3849 = vadd.f32 0.0, %v3848
        %v3850 = vpop.f32.mrb[0].mxu0
        %3851 = vmatprep.mubr.bf16.mxu0 0
        %3852 = vmatmul.mubr.bf16.gmra.mrb[0].mxu0 %v3414
        %v3853 = vpop.f32.mrb[0].mxu0
        %v3854 = vadd.f32 0.0, %v3853
        %v3855 = vpop.f32.mrb[0].mxu0
        %v3856 = vpop.f32.mrb[0].mxu0
        %v3857 = vadd.f32 0.0, %v3856
        %v3858 = vpop.f32.mrb[0].mxu0
        %3859 = vmatprep.mubr.bf16.mxu0 0
        %3860 = vmatmul.mubr.bf16.gmra.mrb[0].mxu0 %v3415
        %v3861 = vpop.f32.mrb[0].mxu0
        %v3862 = vadd.f32 0.0, %v3861
        %v3863 = vpop.f32.mrb[0].mxu0
        %v3864 = vpop.f32.mrb[0].mxu0
        %v3865 = vpop.f32.mrb[0].mxu0
        %3866 = vdwg.mxu0
        %v3867 = vrot.slane %v3830, 1
        %v3868 = vrot.slane %v3833, 1
        %v3869 = vrot.slane %v3838, 1
        %v3870 = vrot.slane %v3841, 1
        %v3871 = vrot.slane %v3846, 1
        %v3872 = vrot.slane %v3849, 1
        %v3873 = vrot.slane %v3854, 1
        %v3874 = vrot.slane %v3857, 1
        %v3875 = vrot.slane %v3862, 1
        %v3876 = vsel %vm1024, %v3874, %v3875
        %v3877 = vsel %vm1024, %v3873, %v3874
        %v3878 = vsel %vm1024, %v3872, %v3873
        %v3879 = vsel %vm1024, %v3871, %v3872
        %v3880 = vsel %vm1024, %v3870, %v3871
        %v3881 = vsel %vm1024, %v3869, %v3870
        %v3882 = vsel %vm1024, %v3868, %v3869
        %v3883 = vsel %vm1024, %v3867, %v3868
        %v3884 = vadd.f32 %v3733, %v3883
        %v3885 = vadd.f32 %v3734, %v3882
        %v3886 = vadd.f32 %v3735, %v3881
        %v3887 = vadd.f32 %v3736, %v3880
        %v3888 = vadd.f32 %v3737, %v3879
        %v3889 = vadd.f32 %v3738, %v3878
        %v3890 = vadd.f32 %v3739, %v3877
        %v3891 = vadd.f32 %v3740, %v3876
        %s3892 = scalar_lea.vmem %s4, 5
        %v3893 = vld [vmem:[%s3892] sm:$0x1]
        %v3895 = vlaneseq
        %v3896 = vshrl.u32 %v3895, 7
        %v3897 = vsub.s32 0, %v3896
        %v3898 = vrot.slane %v3893, %v3897
        %v3900 = vadd.f32 %v3884, %v3898
        %v3901 = vadd.f32 %v3885, %v3898
        %v3902 = vadd.f32 %v3886, %v3898
        %v3903 = vadd.f32 %v3887, %v3898
        %v3904 = vadd.f32 %v3888, %v3898
        %v3905 = vadd.f32 %v3889, %v3898
        %v3906 = vadd.f32 %v3890, %v3898
        %v3907 = vadd.f32 %v3891, %v3898
        %v3908 = vsel %vm488, %v3900, 0.0
        %v3909 = vsel %vm489, %v3901, 0.0
        %v3910 = vsel %vm490, %v3902, 0.0
        %v3911 = vsel %vm491, %v3903, 0.0
        %v3912 = vsel %vm492, %v3904, 0.0
        %v3913 = vsel %vm493, %v3905, 0.0
        %v3914 = vsel %vm494, %v3906, 0.0
        %v3915 = vsel %vm495, %v3907, 0.0
        %v3916 = vadd.f32 %v2806, %v3908
        %v3917 = vadd.f32 %v2807, %v3909
        %v3918 = vadd.f32 %v2808, %v3910
        %v3919 = vadd.f32 %v2809, %v3911
        %v3920 = vadd.f32 %v2810, %v3912
        %v3921 = vadd.f32 %v2811, %v3913
        %v3922 = vadd.f32 %v2812, %v3914
        %v3923 = vadd.f32 %v2813, %v3915
        %3924 = vst [vmem:[%s384] sm:$0xff] %v3916
        %3925 = vst [vmem:[%s384 + $0x8] sm:$0xff] %v3917
        %3926 = vst [vmem:[%s384 + $0x10] sm:$0xff] %v3918
        %3927 = vst [vmem:[%s384 + $0x18] sm:$0xff] %v3919
        %3928 = vst [vmem:[%s384 + $0x20] sm:$0xff] %v3920
        %3929 = vst [vmem:[%s384 + $0x28] sm:$0xff] %v3921
        %3930 = vst [vmem:[%s384 + $0x30] sm:$0xff] %v3922
        %3931 = vst [vmem:[%s384 + $0x38] sm:$0xff] %v3923
        %s3932 = sand.u32 %s190, 1
        %s3933 = scalar_lea.sflag [#allocation4], %s3932
        %s3934 = sand.u32 %s190, 1
        %s3935 = smul.addr %s3934, 64
        %s3936 = scalar_lea.vmem [#allocation10], %s3935
        // Predicated region
        $region57: #{tpu_custom_call.1} parent=39 // pred_check
          %p3937 = pneg %p200
        $region58: #{tpu_custom_call.1} parent=39 // pred_check_branch
          %3939 = sbr.rel (%p3937) target = $region60
        $region59: #{tpu_custom_call.1} parent=39 // pred_region
          %s3940 = smul.u32 8, %s31
          %s3942 = ssub.s32 1024, 1024
          %3943 = vsyncadd %s3933, %s3942
          %s3944 = smul.addr %s30, 8
          %s3945 = sadd.s32 %s3940, %s3944
          %s3946 = smul.addr %s3945, 128
          %s3947 = scalar_lea.hbm %s5, %s3946
          %s3948 = sshll.u32 %s3936, 4
          %s3949 = int_to_ptr.vmem [resolvable:$true] %s3948
          %3954 = dma.vmem_to_hbm [thread:$0]  %s3949, 1024, %s3947, %s3933, 128, 128, 8
        $region60: #{tpu_custom_call.1} parent=39 // pred_fallthru
          _
      $region40: #{tpu_custom_call.1} parent=5 // pred_fallthru
        _
      %p3955 = scmp.le.s32.totalorder 2, %s21
      // Predicated region
      $region61: #{tpu_custom_call.1} parent=5 // pred_check
        %p3956 = pneg %p3955
      $region62: #{tpu_custom_call.1} parent=5 // pred_check_branch
        %3958 = sbr.rel (%p3956) target = $region64
      $region63: #{tpu_custom_call.1} parent=5 // pred_region
        %s3959 = ssub.s32 %s21, 2
        // Predicated region
        $region65: #{tpu_custom_call.1} parent=63 // pred_check
          %p3960 = pneg %p206
        $region66: #{tpu_custom_call.1} parent=63 // pred_check_branch
          %3962 = sbr.rel (%p3960) target = $region68
        $region67: #{tpu_custom_call.1} parent=63 // pred_region
          %s3963 = sand.u32 %s191, 1
          %s3964 = scalar_lea.sflag [#allocation4], %s3963
          %s3965 = sand.u32 %s191, 1
          %s3966 = smul.addr %s3965, 64
          %s3967 = scalar_lea.vmem [#allocation10], %s3966
          %3968 = dma.done %s3964, 1024
        $region68: #{tpu_custom_call.1} parent=63 // pred_fallthru
          _
      $region64: #{tpu_custom_call.1} parent=5 // pred_fallthru
        _
    $region6: #{tpu_custom_call.1} parent=1 // loop_footer
      %s25 = sadd.s32 1, %s21
    $region7: #{tpu_custom_call.1} parent=1 // loop_footer_branch
      %20 = sbr.rel target = $region3
    $region8: #{tpu_custom_call.1} parent=1 // loop_exit
      _
    %3969 = vsyncpa [#allocation3], 1
    %s3970 = scalar_lea.sflag [#allocation3], 1
    %3971 = vsyncpa %s3970, 1
    %3972 = vsyncpa [#allocation6], 1
    %s3973 = scalar_lea.sflag [#allocation6], 1
    %3974 = vsyncpa %s3973, 1
    %3975 = vsyncpa [#allocation9], 1
    %3976 = vsyncpa [#allocation4], 1
    %s3977 = scalar_lea.sflag [#allocation4], 1
    %3978 = vsyncpa %s3977, 1

</llo_original>
